<compile_context>
chip_gen: v7x
topology: tpu7x:2x2x1
jax: 0.10.0
libtpu: 0.0.40
codegen_flags: <defaults>
</compile_context>

<pallas_src>
import functools

import jax
import jax.numpy as jnp
from jax.experimental import pallas as pl
from jax.experimental.pallas import tpu as pltpu

LANE = 128


def _round_up(n, m):
    return ((n + m - 1) // m) * m


# ---------------------------------------------------------------------------
# Pallas kernel: fused VAE forward for one batch tile
# ---------------------------------------------------------------------------
def vae_forward_kernel(
    x_ref, eps_ref,
    w1_ref, b1_ref,
    w2_ref, b2_ref,
    w3_ref, b3_ref,     # fused [mu | pad | log_var | pad] projection, width 2*zp
    w4_ref, b4_ref,
    w5_ref, b5_ref,
    w6_ref, b6_ref,
    recon_ref, latent_ref,
    *, zp,
):
    f32 = jnp.float32
    bf16 = jnp.bfloat16

    x = x_ref[...]  # (TB, XP) bf16

    # ---- encoder ----
    h = jnp.dot(x, w1_ref[...], preferred_element_type=f32) + b1_ref[...]
    h = jnp.maximum(h, 0.0)                                            # relu(fc1)
    h = jnp.dot(h.astype(bf16), w2_ref[...], preferred_element_type=f32) + b2_ref[...]
    h = jnp.maximum(h, 0.0)                                            # relu(fc2)

    # fused mu / log_var projection -> single lane-dense (TB, 2*zp) slab
    latent = jnp.dot(h.astype(bf16), w3_ref[...], preferred_element_type=f32) + b3_ref[...]
    mu_pad = latent[:, :zp]        # lane-tile-aligned split (zp is a multiple of 128)
    logvar_pad = latent[:, zp:]

    # ---- reparameterize (faithful to module: sample = mu + eps * log_var) ----
    z = mu_pad + eps_ref[...] * logvar_pad      # padded cols are exactly 0

    # ---- decoder ----
    h = jnp.dot(z.astype(bf16), w4_ref[...], preferred_element_type=f32) + b4_ref[...]
    h = jnp.maximum(h, 0.0)                                            # relu(fc4)
    h = jnp.dot(h.astype(bf16), w5_ref[...], preferred_element_type=f32) + b5_ref[...]
    h = jnp.maximum(h, 0.0)                                            # relu(fc5)
    logits = jnp.dot(h.astype(bf16), w6_ref[...], preferred_element_type=f32) + b6_ref[...]

    recon_ref[...] = 1.0 / (1.0 + jnp.exp(-logits))                    # sigmoid(fc6)
    latent_ref[...] = latent


# ---------------------------------------------------------------------------
# Parameter construction (mimics torch.nn.Linear default init, W stored (in, out))
# ---------------------------------------------------------------------------
def init_linear(key, fan_in, fan_out):
    kw, kb = jax.random.split(key)
    bound = 1.0 / jnp.sqrt(jnp.float32(fan_in))
    w = jax.random.uniform(kw, (fan_in, fan_out), jnp.float32, -bound, bound)
    b = jax.random.uniform(kb, (1, fan_out), jnp.float32, -bound, bound)
    return w, b


def make_vae_params(key, x_dim, h_dim1, h_dim2, z_dim):
    keys = jax.random.split(key, 7)
    return {
        "fc1": init_linear(keys[0], x_dim, h_dim1),
        "fc2": init_linear(keys[1], h_dim1, h_dim2),
        "fc3_mu": init_linear(keys[2], h_dim2, z_dim),
        "fc3_log_var": init_linear(keys[3], h_dim2, z_dim),
        "fc4": init_linear(keys[4], z_dim, h_dim2),
        "fc5": init_linear(keys[5], h_dim2, h_dim1),
        "fc6": init_linear(keys[6], h_dim1, x_dim),
    }


def _pad_wb(w, b, rows, cols):
    """Zero-pad a (in,out) weight / (1,out) bias pair; weights go to bf16."""
    wp = jnp.zeros((rows, cols), jnp.float32).at[: w.shape[0], : w.shape[1]].set(w)
    bp = jnp.zeros((1, cols), jnp.float32).at[:, : b.shape[1]].set(b)
    return wp.astype(jnp.bfloat16), bp


# ---------------------------------------------------------------------------
# Wrapper: padding, BlockSpecs, pallas_call
# ---------------------------------------------------------------------------
@functools.partial(jax.jit, static_argnames=("x_dim", "z_dim", "block_b"))
def vae_forward(x_nchw, eps, params, x_dim, z_dim, block_b=128):
    """Fused VAE forward.

    x_nchw: (B, 1, 28, 28) float32 ; eps: (B, z_dim) float32.
    Returns (reconstruction (B, x_dim), mu (B, z_dim), log_var (B, z_dim)).
    """
    b = x_nchw.shape[0]
    h1 = params["fc1"][0].shape[1]
    h2 = params["fc2"][0].shape[1]

    xp = _round_up(x_dim, LANE)        # 784 -> 896 (7*128)
    zp = _round_up(z_dim, LANE)        # 16  -> 128
    h1p = _round_up(h1, LANE)
    h2p = _round_up(h2, LANE)
    bp = _round_up(b, block_b)
    n_blocks = bp // block_b

    # ---- pad inputs (zero padding is semantics-preserving) ----
    x = x_nchw.reshape(b, x_dim).astype(jnp.float32)
    x_pad = jnp.zeros((bp, xp), jnp.float32).at[:b, :x_dim].set(x).astype(jnp.bfloat16)
    eps_pad = jnp.zeros((bp, zp), jnp.float32).at[:b, :z_dim].set(eps)

    # ---- pad / pack parameters ----
    w1, b1 = _pad_wb(*params["fc1"], xp, h1p)
    w2, b2 = _pad_wb(*params["fc2"], h1p, h2p)

    w3m, b3m = params["fc3_mu"]
    w3v, b3v = params["fc3_log_var"]
    w3 = jnp.zeros((h2p, 2 * zp), jnp.float32)
    w3 = w3.at[:h2, :z_dim].set(w3m).at[:h2, zp:zp + z_dim].set(w3v)
    b3 = jnp.zeros((1, 2 * zp), jnp.float32)
    b3 = b3.at[:, :z_dim].set(b3m).at[:, zp:zp + z_dim].set(b3v)
    w3 = w3.astype(jnp.bfloat16)

    w4, b4 = _pad_wb(*params["fc4"], zp, h2p)
    w5, b5 = _pad_wb(*params["fc5"], h2p, h1p)
    w6, b6 = _pad_wb(*params["fc6"], h1p, xp)

    weights = [w1, b1, w2, b2, w3, b3, w4, b4, w5, b5, w6, b6]

    # ---- BlockSpecs ----
    batch_spec = lambda cols: pl.BlockSpec((block_b, cols), lambda i: (i, 0))
    resident_spec = lambda arr: pl.BlockSpec(arr.shape, lambda i: (0, 0))

    in_specs = [batch_spec(xp), batch_spec(zp)] + [resident_spec(a) for a in weights]
    out_specs = [batch_spec(xp), batch_spec(2 * zp)]
    out_shapes = (
        jax.ShapeDtypeStruct((bp, xp), jnp.float32),        # recon (padded)
        jax.ShapeDtypeStruct((bp, 2 * zp), jnp.float32),    # [mu|pad|logvar|pad]
    )

    recon_pad, latent = pl.pallas_call(
        functools.partial(vae_forward_kernel, zp=zp),
        out_shape=out_shapes,
        grid=(n_blocks,),
        in_specs=in_specs,
        out_specs=out_specs,
        compiler_params=pltpu.CompilerParams(
            dimension_semantics=("parallel",),
        ),
    )(x_pad, eps_pad, *weights)

    recon = recon_pad[:b, :x_dim]
    mu = latent[:b, :z_dim]
    log_var = latent[:b, zp:zp + z_dim]
    return recon, mu, log_var


# ---------------------------------------------------------------------------
# Pure-JAX reference (same bf16-operand / f32-accumulate numerics as the kernel)
# ---------------------------------------------------------------------------
def vae_forward_ref(x_nchw, eps, params, x_dim):
    bf16 = jnp.bfloat16

    def dot(a, w):
        return jnp.dot(a.astype(bf16), w.astype(bf16), preferred_element_type=jnp.float32)

    b = x_nchw.shape[0]
    x = x_nchw.reshape(b, x_dim)
    h = jax.nn.relu(dot(x, params["fc1"][0]) + params["fc1"][1])
    h = jax.nn.relu(dot(h, params["fc2"][0]) + params["fc2"][1])
    mu = dot(h, params["fc3_mu"][0]) + params["fc3_mu"][1]
    log_var = dot(h, params["fc3_log_var"][0]) + params["fc3_log_var"][1]
    z = mu + eps * log_var                      # matches the quirky torch reparameterize
    h = jax.nn.relu(dot(z, params["fc4"][0]) + params["fc4"][1])
    h = jax.nn.relu(dot(h, params["fc5"][0]) + params["fc5"][1])
    logits = dot(h, params["fc6"][0]) + params["fc6"][1]
    recon = 1.0 / (1.0 + jnp.exp(-logits))
    return recon, mu, log_var


if __name__ == "__main__":
    # forward() hard-codes view(-1, 784) so x_dim must be 784 (1x28x28).
    # Hidden dims are lane-aligned; batch 256 gives two 128-row grid steps.
    X_DIM, H1, H2, Z = 784, 256, 128, 16
    BATCH = 256

    key = jax.random.PRNGKey(0)
    k_params, k_x, k_eps = jax.random.split(key, 3)

    params = make_vae_params(k_params, X_DIM, H1, H2, Z)
    x = jax.random.uniform(k_x, (BATCH, 1, 28, 28), jnp.float32)   # NCHW input
    eps = jax.random.normal(k_eps, (BATCH, Z), jnp.float32)        # randn_like noise

    recon, mu, log_var = vae_forward(x, eps, params, X_DIM, Z)
    jax.block_until_ready((recon, mu, log_var))

    recon_r, mu_r, log_var_r = vae_forward_ref(x, eps, params, X_DIM)
    assert recon.shape == (BATCH, X_DIM)
    assert mu.shape == (BATCH, Z) and log_var.shape == (BATCH, Z)
    assert jnp.allclose(mu, mu_r, atol=2e-3, rtol=2e-3)
    assert jnp.allclose(log_var, log_var_r, atol=2e-3, rtol=2e-3)
    assert jnp.allclose(recon, recon_r, atol=2e-3, rtol=2e-3)

    print("KERNEL_OK")
</pallas_src>

<mosaic_0001>
module attributes {stable_mosaic.version = 11 : i64} {
  func.func @vae_forward_kernel(%arg0: i32, %arg1: memref<128x896xbf16, #tpu.memory_space<vmem>>, %arg2: memref<128x128xf32, #tpu.memory_space<vmem>>, %arg3: memref<896x256xbf16, #tpu.memory_space<vmem>>, %arg4: memref<1x256xf32, #tpu.memory_space<vmem>>, %arg5: memref<256x128xbf16, #tpu.memory_space<vmem>>, %arg6: memref<1x128xf32, #tpu.memory_space<vmem>>, %arg7: memref<128x256xbf16, #tpu.memory_space<vmem>>, %arg8: memref<1x256xf32, #tpu.memory_space<vmem>>, %arg9: memref<128x128xbf16, #tpu.memory_space<vmem>>, %arg10: memref<1x128xf32, #tpu.memory_space<vmem>>, %arg11: memref<128x256xbf16, #tpu.memory_space<vmem>>, %arg12: memref<1x256xf32, #tpu.memory_space<vmem>>, %arg13: memref<256x896xbf16, #tpu.memory_space<vmem>>, %arg14: memref<1x896xf32, #tpu.memory_space<vmem>>, %arg15: memref<128x896xf32, #tpu.memory_space<vmem>>, %arg16: memref<128x256xf32, #tpu.memory_space<vmem>>) attributes {dimension_semantics = [#tpu.dimension_semantics<parallel>], iteration_bounds = array<i64: 2>, scalar_prefetch = 0 : i64, scratch_operands = 0 : i64, tpu.core_type = #tpu.core_type<tc>, window_params = [{transform_indices = @transform_0, window_bounds = array<i64: 128, 896>}, {transform_indices = @transform_1, window_bounds = array<i64: 128, 128>}, {pipeline_mode = #tpu.pipeline_mode<synchronous>, transform_indices = @transform_2, window_bounds = array<i64: 896, 256>}, {pipeline_mode = #tpu.pipeline_mode<synchronous>, transform_indices = @transform_3, window_bounds = array<i64: 1, 256>}, {pipeline_mode = #tpu.pipeline_mode<synchronous>, transform_indices = @transform_4, window_bounds = array<i64: 256, 128>}, {pipeline_mode = #tpu.pipeline_mode<synchronous>, transform_indices = @transform_5, window_bounds = array<i64: 1, 128>}, {pipeline_mode = #tpu.pipeline_mode<synchronous>, transform_indices = @transform_6, window_bounds = array<i64: 128, 256>}, {pipeline_mode = #tpu.pipeline_mode<synchronous>, transform_indices = @transform_7, window_bounds = array<i64: 1, 256>}, {pipeline_mode = #tpu.pipeline_mode<synchronous>, transform_indices = @transform_8, window_bounds = array<i64: 128, 128>}, {pipeline_mode = #tpu.pipeline_mode<synchronous>, transform_indices = @transform_9, window_bounds = array<i64: 1, 128>}, {pipeline_mode = #tpu.pipeline_mode<synchronous>, transform_indices = @transform_10, window_bounds = array<i64: 128, 256>}, {pipeline_mode = #tpu.pipeline_mode<synchronous>, transform_indices = @transform_11, window_bounds = array<i64: 1, 256>}, {pipeline_mode = #tpu.pipeline_mode<synchronous>, transform_indices = @transform_12, window_bounds = array<i64: 256, 896>}, {pipeline_mode = #tpu.pipeline_mode<synchronous>, transform_indices = @transform_13, window_bounds = array<i64: 1, 896>}, {transform_indices = @transform_14, window_bounds = array<i64: 128, 896>}, {transform_indices = @transform_15, window_bounds = array<i64: 128, 256>}]} {
    %c0 = arith.constant 0 : index
    %c0_0 = arith.constant 0 : index
    %0 = vector.load %arg1[%c0, %c0_0] : memref<128x896xbf16, #tpu.memory_space<vmem>>, vector<128x896xbf16>
    %c0_1 = arith.constant 0 : index
    %c0_2 = arith.constant 0 : index
    %1 = vector.load %arg3[%c0_1, %c0_2] : memref<896x256xbf16, #tpu.memory_space<vmem>>, vector<896x256xbf16>
    %cst = arith.constant dense<0.000000e+00> : vector<128x256xf32>
    %2 = tpu.matmul %0, %1, %cst {dimension_numbers = #tpu.dot_dimension_numbers<[1], [0], [0], [1], [0, 0, 1, 1], [], []>} : vector<128x896xbf16>, vector<896x256xbf16>, vector<128x256xf32> -> vector<128x256xf32>
    %c0_3 = arith.constant 0 : index
    %c0_4 = arith.constant 0 : index
    %3 = vector.load %arg4[%c0_3, %c0_4] : memref<1x256xf32, #tpu.memory_space<vmem>>, vector<1x256xf32>
    %4 = vector.broadcast %3 : vector<1x256xf32> to vector<128x256xf32>
    %5 = arith.addf %2, %4 : vector<128x256xf32>
    %cst_5 = arith.constant 0.000000e+00 : f32
    %6 = vector.broadcast %cst_5 : f32 to vector<128x256xf32>
    %7 = arith.maximumf %5, %6 : vector<128x256xf32>
    %8 = arith.truncf %7 : vector<128x256xf32> to vector<128x256xbf16>
    %c0_6 = arith.constant 0 : index
    %c0_7 = arith.constant 0 : index
    %9 = vector.load %arg5[%c0_6, %c0_7] : memref<256x128xbf16, #tpu.memory_space<vmem>>, vector<256x128xbf16>
    %cst_8 = arith.constant dense<0.000000e+00> : vector<128x128xf32>
    %10 = tpu.matmul %8, %9, %cst_8 {dimension_numbers = #tpu.dot_dimension_numbers<[1], [0], [0], [1], [0, 0, 1, 1], [], []>} : vector<128x256xbf16>, vector<256x128xbf16>, vector<128x128xf32> -> vector<128x128xf32>
    %c0_9 = arith.constant 0 : index
    %c0_10 = arith.constant 0 : index
    %11 = vector.load %arg6[%c0_9, %c0_10] : memref<1x128xf32, #tpu.memory_space<vmem>>, vector<1x128xf32>
    %12 = vector.broadcast %11 : vector<1x128xf32> to vector<128x128xf32>
    %13 = arith.addf %10, %12 : vector<128x128xf32>
    %cst_11 = arith.constant 0.000000e+00 : f32
    %14 = vector.broadcast %cst_11 : f32 to vector<128x128xf32>
    %15 = arith.maximumf %13, %14 : vector<128x128xf32>
    %16 = arith.truncf %15 : vector<128x128xf32> to vector<128x128xbf16>
    %c0_12 = arith.constant 0 : index
    %c0_13 = arith.constant 0 : index
    %17 = vector.load %arg7[%c0_12, %c0_13] : memref<128x256xbf16, #tpu.memory_space<vmem>>, vector<128x256xbf16>
    %cst_14 = arith.constant dense<0.000000e+00> : vector<128x256xf32>
    %18 = tpu.matmul %16, %17, %cst_14 {dimension_numbers = #tpu.dot_dimension_numbers<[1], [0], [0], [1], [0, 0, 1, 1], [], []>} : vector<128x128xbf16>, vector<128x256xbf16>, vector<128x256xf32> -> vector<128x256xf32>
    %c0_15 = arith.constant 0 : index
    %c0_16 = arith.constant 0 : index
    %19 = vector.load %arg8[%c0_15, %c0_16] : memref<1x256xf32, #tpu.memory_space<vmem>>, vector<1x256xf32>
    %20 = vector.broadcast %19 : vector<1x256xf32> to vector<128x256xf32>
    %21 = arith.addf %18, %20 : vector<128x256xf32>
    %22 = vector.extract_strided_slice %21 {offsets = [0, 0], sizes = [128, 128], strides = [1, 1]} : vector<128x256xf32> to vector<128x128xf32>
    %23 = vector.extract_strided_slice %21 {offsets = [0, 128], sizes = [128, 128], strides = [1, 1]} : vector<128x256xf32> to vector<128x128xf32>
    %c0_17 = arith.constant 0 : index
    %c0_18 = arith.constant 0 : index
    %24 = vector.load %arg2[%c0_17, %c0_18] : memref<128x128xf32, #tpu.memory_space<vmem>>, vector<128x128xf32>
    %25 = arith.mulf %24, %23 : vector<128x128xf32>
    %26 = arith.addf %22, %25 : vector<128x128xf32>
    %27 = arith.truncf %26 : vector<128x128xf32> to vector<128x128xbf16>
    %c0_19 = arith.constant 0 : index
    %c0_20 = arith.constant 0 : index
    %28 = vector.load %arg9[%c0_19, %c0_20] : memref<128x128xbf16, #tpu.memory_space<vmem>>, vector<128x128xbf16>
    %cst_21 = arith.constant dense<0.000000e+00> : vector<128x128xf32>
    %29 = tpu.matmul %27, %28, %cst_21 {dimension_numbers = #tpu.dot_dimension_numbers<[1], [0], [0], [1], [0, 0, 1, 1], [], []>} : vector<128x128xbf16>, vector<128x128xbf16>, vector<128x128xf32> -> vector<128x128xf32>
    %c0_22 = arith.constant 0 : index
    %c0_23 = arith.constant 0 : index
    %30 = vector.load %arg10[%c0_22, %c0_23] : memref<1x128xf32, #tpu.memory_space<vmem>>, vector<1x128xf32>
    %31 = vector.broadcast %30 : vector<1x128xf32> to vector<128x128xf32>
    %32 = arith.addf %29, %31 : vector<128x128xf32>
    %cst_24 = arith.constant 0.000000e+00 : f32
    %33 = vector.broadcast %cst_24 : f32 to vector<128x128xf32>
    %34 = arith.maximumf %32, %33 : vector<128x128xf32>
    %35 = arith.truncf %34 : vector<128x128xf32> to vector<128x128xbf16>
    %c0_25 = arith.constant 0 : index
    %c0_26 = arith.constant 0 : index
    %36 = vector.load %arg11[%c0_25, %c0_26] : memref<128x256xbf16, #tpu.memory_space<vmem>>, vector<128x256xbf16>
    %cst_27 = arith.constant dense<0.000000e+00> : vector<128x256xf32>
    %37 = tpu.matmul %35, %36, %cst_27 {dimension_numbers = #tpu.dot_dimension_numbers<[1], [0], [0], [1], [0, 0, 1, 1], [], []>} : vector<128x128xbf16>, vector<128x256xbf16>, vector<128x256xf32> -> vector<128x256xf32>
    %c0_28 = arith.constant 0 : index
    %c0_29 = arith.constant 0 : index
    %38 = vector.load %arg12[%c0_28, %c0_29] : memref<1x256xf32, #tpu.memory_space<vmem>>, vector<1x256xf32>
    %39 = vector.broadcast %38 : vector<1x256xf32> to vector<128x256xf32>
    %40 = arith.addf %37, %39 : vector<128x256xf32>
    %cst_30 = arith.constant 0.000000e+00 : f32
    %41 = vector.broadcast %cst_30 : f32 to vector<128x256xf32>
    %42 = arith.maximumf %40, %41 : vector<128x256xf32>
    %43 = arith.truncf %42 : vector<128x256xf32> to vector<128x256xbf16>
    %c0_31 = arith.constant 0 : index
    %c0_32 = arith.constant 0 : index
    %44 = vector.load %arg13[%c0_31, %c0_32] : memref<256x896xbf16, #tpu.memory_space<vmem>>, vector<256x896xbf16>
    %cst_33 = arith.constant dense<0.000000e+00> : vector<128x896xf32>
    %45 = tpu.matmul %43, %44, %cst_33 {dimension_numbers = #tpu.dot_dimension_numbers<[1], [0], [0], [1], [0, 0, 1, 1], [], []>} : vector<128x256xbf16>, vector<256x896xbf16>, vector<128x896xf32> -> vector<128x896xf32>
    %c0_34 = arith.constant 0 : index
    %c0_35 = arith.constant 0 : index
    %46 = vector.load %arg14[%c0_34, %c0_35] : memref<1x896xf32, #tpu.memory_space<vmem>>, vector<1x896xf32>
    %47 = vector.broadcast %46 : vector<1x896xf32> to vector<128x896xf32>
    %48 = arith.addf %45, %47 : vector<128x896xf32>
    %cst_36 = arith.constant 0.000000e+00 : f32
    %49 = vector.broadcast %cst_36 : f32 to vector<128x896xf32>
    %50 = arith.subf %49, %48 : vector<128x896xf32>
    %51 = math.exp %50 : vector<128x896xf32>
    %cst_37 = arith.constant 1.000000e+00 : f32
    %52 = vector.broadcast %cst_37 : f32 to vector<128x896xf32>
    %53 = arith.addf %52, %51 : vector<128x896xf32>
    %cst_38 = arith.constant 1.000000e+00 : f32
    %54 = vector.broadcast %cst_38 : f32 to vector<128x896xf32>
    %55 = arith.divf %54, %53 : vector<128x896xf32>
    %c0_39 = arith.constant 0 : index
    %c0_40 = arith.constant 0 : index
    %56 = vector.load %arg15[%c0_39, %c0_40] : memref<128x896xf32, #tpu.memory_space<vmem>>, vector<128x896xf32>
    tpu.vector_store %arg15[%c0_39, %c0_40], %55 {strides = array<i32>} : memref<128x896xf32, #tpu.memory_space<vmem>>, vector<128x896xf32>,
    %c0_41 = arith.constant 0 : index
    %c0_42 = arith.constant 0 : index
    %57 = vector.load %arg16[%c0_41, %c0_42] : memref<128x256xf32, #tpu.memory_space<vmem>>, vector<128x256xf32>
    tpu.vector_store %arg16[%c0_41, %c0_42], %21 {strides = array<i32>} : memref<128x256xf32, #tpu.memory_space<vmem>>, vector<128x256xf32>,
    return
  }
  func.func @transform_0(%arg0: i32) -> (i32, i32) {
    %c0_i32 = arith.constant 0 : i32
    %c0_i32_0 = arith.constant 0 : i32
    return %arg0, %c0_i32 : i32, i32
  }
  func.func @transform_1(%arg0: i32) -> (i32, i32) {
    %c0_i32 = arith.constant 0 : i32
    %c0_i32_0 = arith.constant 0 : i32
    return %arg0, %c0_i32 : i32, i32
  }
  func.func @transform_2(%arg0: i32) -> (i32, i32) {
    %c0_i32 = arith.constant 0 : i32
    %c0_i32_0 = arith.constant 0 : i32
    %c0_i32_1 = arith.constant 0 : i32
    return %c0_i32, %c0_i32_0 : i32, i32
  }
  func.func @transform_3(%arg0: i32) -> (i32, i32) {
    %c0_i32 = arith.constant 0 : i32
    %c0_i32_0 = arith.constant 0 : i32
    %c0_i32_1 = arith.constant 0 : i32
    return %c0_i32, %c0_i32_0 : i32, i32
  }
  func.func @transform_4(%arg0: i32) -> (i32, i32) {
    %c0_i32 = arith.constant 0 : i32
    %c0_i32_0 = arith.constant 0 : i32
    %c0_i32_1 = arith.constant 0 : i32
    return %c0_i32, %c0_i32_0 : i32, i32
  }
  func.func @transform_5(%arg0: i32) -> (i32, i32) {
    %c0_i32 = arith.constant 0 : i32
    %c0_i32_0 = arith.constant 0 : i32
    %c0_i32_1 = arith.constant 0 : i32
    return %c0_i32, %c0_i32_0 : i32, i32
  }
  func.func @transform_6(%arg0: i32) -> (i32, i32) {
    %c0_i32 = arith.constant 0 : i32
    %c0_i32_0 = arith.constant 0 : i32
    %c0_i32_1 = arith.constant 0 : i32
    return %c0_i32, %c0_i32_0 : i32, i32
  }
  func.func @transform_7(%arg0: i32) -> (i32, i32) {
    %c0_i32 = arith.constant 0 : i32
    %c0_i32_0 = arith.constant 0 : i32
    %c0_i32_1 = arith.constant 0 : i32
    return %c0_i32, %c0_i32_0 : i32, i32
  }
  func.func @transform_8(%arg0: i32) -> (i32, i32) {
    %c0_i32 = arith.constant 0 : i32
    %c0_i32_0 = arith.constant 0 : i32
    %c0_i32_1 = arith.constant 0 : i32
    return %c0_i32, %c0_i32_0 : i32, i32
  }
  func.func @transform_9(%arg0: i32) -> (i32, i32) {
    %c0_i32 = arith.constant 0 : i32
    %c0_i32_0 = arith.constant 0 : i32
    %c0_i32_1 = arith.constant 0 : i32
    return %c0_i32, %c0_i32_0 : i32, i32
  }
  func.func @transform_10(%arg0: i32) -> (i32, i32) {
    %c0_i32 = arith.constant 0 : i32
    %c0_i32_0 = arith.constant 0 : i32
    %c0_i32_1 = arith.constant 0 : i32
    return %c0_i32, %c0_i32_0 : i32, i32
  }
  func.func @transform_11(%arg0: i32) -> (i32, i32) {
    %c0_i32 = arith.constant 0 : i32
    %c0_i32_0 = arith.constant 0 : i32
    %c0_i32_1 = arith.constant 0 : i32
    return %c0_i32, %c0_i32_0 : i32, i32
  }
  func.func @transform_12(%arg0: i32) -> (i32, i32) {
    %c0_i32 = arith.constant 0 : i32
    %c0_i32_0 = arith.constant 0 : i32
    %c0_i32_1 = arith.constant 0 : i32
    return %c0_i32, %c0_i32_0 : i32, i32
  }
  func.func @transform_13(%arg0: i32) -> (i32, i32) {
    %c0_i32 = arith.constant 0 : i32
    %c0_i32_0 = arith.constant 0 : i32
    %c0_i32_1 = arith.constant 0 : i32
    return %c0_i32, %c0_i32_0 : i32, i32
  }
  func.func @transform_14(%arg0: i32) -> (i32, i32) {
    %c0_i32 = arith.constant 0 : i32
    %c0_i32_0 = arith.constant 0 : i32
    return %arg0, %c0_i32 : i32, i32
  }
  func.func @transform_15(%arg0: i32) -> (i32, i32) {
    %c0_i32 = arith.constant 0 : i32
    %c0_i32_0 = arith.constant 0 : i32
    return %arg0, %c0_i32 : i32, i32
  }
}

</mosaic_0001>

<llo_original>
// kernel: vae_forward.1
$region0: #{vae_forward.1}
  #allocation0 [shape = 'u32[]', space=smem, size = 0x4, offset = 0x4, fixed_abs, tag = 'smem constant byte address 0x4 - core index']
  #allocation1 [shape = 'u32[144,128]{1,0:T(1,128)}', space=vmem, size = 0x12000, scoped, tag = 'internal scratch']
  %s0 = inlined_call_operand.vmem [shape: bf16[256,896], index: 0, kind: input, shape index: {}]
  %s1 = inlined_call_operand.vmem [shape: f32[256,128], index: 1, kind: input, shape index: {}]
  %s2 = inlined_call_operand.vmem [shape: bf16[896,256], index: 2, kind: input, shape index: {}]
  %s3 = inlined_call_operand.vmem [shape: f32[1,256], index: 3, kind: input, shape index: {}]
  %s4 = inlined_call_operand.vmem [shape: bf16[256,128], index: 4, kind: input, shape index: {}]
  %s5 = inlined_call_operand.vmem [shape: f32[1,128], index: 5, kind: input, shape index: {}]
  %s6 = inlined_call_operand.vmem [shape: bf16[128,256], index: 6, kind: input, shape index: {}]
  %s7 = inlined_call_operand.vmem [shape: f32[1,256], index: 7, kind: input, shape index: {}]
  %s8 = inlined_call_operand.vmem [shape: bf16[128,128], index: 8, kind: input, shape index: {}]
  %s9 = inlined_call_operand.vmem [shape: f32[1,128], index: 9, kind: input, shape index: {}]
  %s10 = inlined_call_operand.vmem [shape: bf16[128,256], index: 10, kind: input, shape index: {}]
  %s11 = inlined_call_operand.vmem [shape: f32[1,256], index: 11, kind: input, shape index: {}]
  %s12 = inlined_call_operand.vmem [shape: bf16[256,896], index: 12, kind: input, shape index: {}]
  %s13 = inlined_call_operand.vmem [shape: f32[1,896], index: 13, kind: input, shape index: {}]
  %s14 = inlined_call_operand.vmem [shape: f32[256,896], index: 14, kind: output, shape index: {0}]
  %s15 = inlined_call_operand.vmem [shape: f32[256,256], index: 15, kind: output, shape index: {1}]
  %16 = xla_tuple %s14, %s15
  %s17 = sld [smem:[#allocation0]]
  $region97: #{vae_forward.1} parent=0
    _
  %s19 = ssub.s32 1, %s17
  %s20 = scalar_select 0, %s19, %s17
  loop: start=0, step=1, limit=4
  $region2: #{vae_forward.1} parent=0 // loop_pre_header
    _
  $region3: #{vae_forward.1} parent=0 // loop_header
    %s22 = sphi 0, %s26
    %p23 = scmp.ge.s32.totalorder %s22, 4
    %s32 = sphi 0, %s34
    %s35 = sphi 0, %s32
    %s36 = sphi 0, %s35
    %s52 = sphi 0, %s36
    %s58 = sphi 0, %s60
    %s61 = sphi 0, %s58
    %s62 = sphi 0, %s61
    %s78 = sphi 0, %s62
    %s82 = sphi 0, %s82
    %s84 = sphi 0, %s82
    %s85 = sphi 0, %s84
    %s99 = sphi 0, %s85
    %s103 = sphi 0, %s103
    %s105 = sphi 0, %s103
    %s106 = sphi 0, %s105
    %s120 = sphi 0, %s106
    %s124 = sphi 0, %s124
    %s126 = sphi 0, %s124
    %s127 = sphi 0, %s126
    %s141 = sphi 0, %s127
    %s145 = sphi 0, %s145
    %s147 = sphi 0, %s145
    %s148 = sphi 0, %s147
    %s162 = sphi 0, %s148
    %s166 = sphi 0, %s166
    %s168 = sphi 0, %s166
    %s169 = sphi 0, %s168
    %s183 = sphi 0, %s169
    %s187 = sphi 0, %s187
    %s189 = sphi 0, %s187
    %s190 = sphi 0, %s189
    %s204 = sphi 0, %s190
    %s208 = sphi 0, %s208
    %s210 = sphi 0, %s208
    %s211 = sphi 0, %s210
    %s225 = sphi 0, %s211
    %s229 = sphi 0, %s229
    %s231 = sphi 0, %s229
    %s232 = sphi 0, %s231
    %s246 = sphi 0, %s232
    %s250 = sphi 0, %s250
    %s252 = sphi 0, %s250
    %s253 = sphi 0, %s252
    %s267 = sphi 0, %s253
    %s271 = sphi 0, %s271
    %s273 = sphi 0, %s271
    %s274 = sphi 0, %s273
    %s288 = sphi 0, %s274
    %s292 = sphi 0, %s292
    %s294 = sphi 0, %s292
    %s295 = sphi 0, %s294
    %s309 = sphi 0, %s295
    %s313 = sphi 0, %s313
    %s315 = sphi 0, %s313
    %s316 = sphi 0, %s315
    %s330 = sphi 0, %s316
    %s336 = sphi 0, %s338
    %s339 = sphi 0, %s336
    %s340 = sphi 0, %s339
    %s356 = sphi 0, %s340
    %s362 = sphi 0, %s364
    %s365 = sphi 0, %s362
    %s366 = sphi 0, %s365
    %s382 = sphi 0, %s366
  $region4: #{vae_forward.1} parent=0 // loop_header_branch
    %25 = sbr.rel (%p23) target = $region8
  $region5: #{vae_forward.1} parent=0 // loop_body
    %s27 = ssub.s32 %s22, 1
    %s28 = ssub.s32 %s22, 2
    %s29 = sadd.s32 %s22, 1
    %s30 = ssub.s32 %s22, %s29
    %p31 = scmp.eq.s32.totalorder %s30, 0
    %s33 = sadd.s32 %s32, 1
    %s34 = scalar_select %p31, %s32, %s33
    %p37 = pneg %p31
    %p38 = scmp.eq.s32.totalorder %s22, 1
    %p39 = por %p37, %p38
    %p40 = scmp.ne.s32.totalorder %s32, %s35
    %p41 = scmp.eq.s32.totalorder %s22, 0
    %p42 = por %p40, %p41
    %p43 = scmp.ne.s32.totalorder %s32, %s35
    %p44 = scmp.eq.s32.totalorder %s27, 1
    %p45 = por %p43, %p44
    %p46 = scmp.ne.s32.totalorder %s35, %s36
    %p47 = scmp.eq.s32.totalorder %s27, 0
    %p48 = por %p46, %p47
    %p49 = scmp.ne.s32.totalorder %s35, %s36
    %p50 = scmp.eq.s32.totalorder %s28, 1
    %p51 = por %p49, %p50
    %p53 = scmp.ne.s32.totalorder %s36, %s52
    %p54 = scmp.eq.s32.totalorder %s28, 0
    %p55 = por %p53, %p54
    %s56 = ssub.s32 %s22, %s29
    %p57 = scmp.eq.s32.totalorder %s56, 0
    %s59 = sadd.s32 %s58, 1
    %s60 = scalar_select %p57, %s58, %s59
    %p63 = pneg %p57
    %p64 = scmp.eq.s32.totalorder %s22, 1
    %p65 = por %p63, %p64
    %p66 = scmp.ne.s32.totalorder %s58, %s61
    %p67 = scmp.eq.s32.totalorder %s22, 0
    %p68 = por %p66, %p67
    %p69 = scmp.ne.s32.totalorder %s58, %s61
    %p70 = scmp.eq.s32.totalorder %s27, 1
    %p71 = por %p69, %p70
    %p72 = scmp.ne.s32.totalorder %s61, %s62
    %p73 = scmp.eq.s32.totalorder %s27, 0
    %p74 = por %p72, %p73
    %p75 = scmp.ne.s32.totalorder %s61, %s62
    %p76 = scmp.eq.s32.totalorder %s28, 1
    %p77 = por %p75, %p76
    %p79 = scmp.ne.s32.totalorder %s62, %s78
    %p80 = scmp.eq.s32.totalorder %s28, 0
    %p81 = por %p79, %p80
    %s83 = sadd.s32 %s82, 1
    %p86 = scmp.eq.s32.totalorder %s22, 1
    %p87 = scmp.ne.s32.totalorder %s82, %s84
    %p88 = scmp.eq.s32.totalorder %s22, 0
    %p89 = por %p87, %p88
    %p90 = scmp.ne.s32.totalorder %s82, %s84
    %p91 = scmp.eq.s32.totalorder %s27, 1
    %p92 = por %p90, %p91
    %p93 = scmp.ne.s32.totalorder %s84, %s85
    %p94 = scmp.eq.s32.totalorder %s27, 0
    %p95 = por %p93, %p94
    %p96 = scmp.ne.s32.totalorder %s84, %s85
    %p97 = scmp.eq.s32.totalorder %s28, 1
    %p98 = por %p96, %p97
    %p100 = scmp.ne.s32.totalorder %s85, %s99
    %p101 = scmp.eq.s32.totalorder %s28, 0
    %p102 = por %p100, %p101
    %s104 = sadd.s32 %s103, 1
    %p107 = scmp.eq.s32.totalorder %s22, 1
    %p108 = scmp.ne.s32.totalorder %s103, %s105
    %p109 = scmp.eq.s32.totalorder %s22, 0
    %p110 = por %p108, %p109
    %p111 = scmp.ne.s32.totalorder %s103, %s105
    %p112 = scmp.eq.s32.totalorder %s27, 1
    %p113 = por %p111, %p112
    %p114 = scmp.ne.s32.totalorder %s105, %s106
    %p115 = scmp.eq.s32.totalorder %s27, 0
    %p116 = por %p114, %p115
    %p117 = scmp.ne.s32.totalorder %s105, %s106
    %p118 = scmp.eq.s32.totalorder %s28, 1
    %p119 = por %p117, %p118
    %p121 = scmp.ne.s32.totalorder %s106, %s120
    %p122 = scmp.eq.s32.totalorder %s28, 0
    %p123 = por %p121, %p122
    %s125 = sadd.s32 %s124, 1
    %p128 = scmp.eq.s32.totalorder %s22, 1
    %p129 = scmp.ne.s32.totalorder %s124, %s126
    %p130 = scmp.eq.s32.totalorder %s22, 0
    %p131 = por %p129, %p130
    %p132 = scmp.ne.s32.totalorder %s124, %s126
    %p133 = scmp.eq.s32.totalorder %s27, 1
    %p134 = por %p132, %p133
    %p135 = scmp.ne.s32.totalorder %s126, %s127
    %p136 = scmp.eq.s32.totalorder %s27, 0
    %p137 = por %p135, %p136
    %p138 = scmp.ne.s32.totalorder %s126, %s127
    %p139 = scmp.eq.s32.totalorder %s28, 1
    %p140 = por %p138, %p139
    %p142 = scmp.ne.s32.totalorder %s127, %s141
    %p143 = scmp.eq.s32.totalorder %s28, 0
    %p144 = por %p142, %p143
    %s146 = sadd.s32 %s145, 1
    %p149 = scmp.eq.s32.totalorder %s22, 1
    %p150 = scmp.ne.s32.totalorder %s145, %s147
    %p151 = scmp.eq.s32.totalorder %s22, 0
    %p152 = por %p150, %p151
    %p153 = scmp.ne.s32.totalorder %s145, %s147
    %p154 = scmp.eq.s32.totalorder %s27, 1
    %p155 = por %p153, %p154
    %p156 = scmp.ne.s32.totalorder %s147, %s148
    %p157 = scmp.eq.s32.totalorder %s27, 0
    %p158 = por %p156, %p157
    %p159 = scmp.ne.s32.totalorder %s147, %s148
    %p160 = scmp.eq.s32.totalorder %s28, 1
    %p161 = por %p159, %p160
    %p163 = scmp.ne.s32.totalorder %s148, %s162
    %p164 = scmp.eq.s32.totalorder %s28, 0
    %p165 = por %p163, %p164
    %s167 = sadd.s32 %s166, 1
    %p170 = scmp.eq.s32.totalorder %s22, 1
    %p171 = scmp.ne.s32.totalorder %s166, %s168
    %p172 = scmp.eq.s32.totalorder %s22, 0
    %p173 = por %p171, %p172
    %p174 = scmp.ne.s32.totalorder %s166, %s168
    %p175 = scmp.eq.s32.totalorder %s27, 1
    %p176 = por %p174, %p175
    %p177 = scmp.ne.s32.totalorder %s168, %s169
    %p178 = scmp.eq.s32.totalorder %s27, 0
    %p179 = por %p177, %p178
    %p180 = scmp.ne.s32.totalorder %s168, %s169
    %p181 = scmp.eq.s32.totalorder %s28, 1
    %p182 = por %p180, %p181
    %p184 = scmp.ne.s32.totalorder %s169, %s183
    %p185 = scmp.eq.s32.totalorder %s28, 0
    %p186 = por %p184, %p185
    %s188 = sadd.s32 %s187, 1
    %p191 = scmp.eq.s32.totalorder %s22, 1
    %p192 = scmp.ne.s32.totalorder %s187, %s189
    %p193 = scmp.eq.s32.totalorder %s22, 0
    %p194 = por %p192, %p193
    %p195 = scmp.ne.s32.totalorder %s187, %s189
    %p196 = scmp.eq.s32.totalorder %s27, 1
    %p197 = por %p195, %p196
    %p198 = scmp.ne.s32.totalorder %s189, %s190
    %p199 = scmp.eq.s32.totalorder %s27, 0
    %p200 = por %p198, %p199
    %p201 = scmp.ne.s32.totalorder %s189, %s190
    %p202 = scmp.eq.s32.totalorder %s28, 1
    %p203 = por %p201, %p202
    %p205 = scmp.ne.s32.totalorder %s190, %s204
    %p206 = scmp.eq.s32.totalorder %s28, 0
    %p207 = por %p205, %p206
    %s209 = sadd.s32 %s208, 1
    %p212 = scmp.eq.s32.totalorder %s22, 1
    %p213 = scmp.ne.s32.totalorder %s208, %s210
    %p214 = scmp.eq.s32.totalorder %s22, 0
    %p215 = por %p213, %p214
    %p216 = scmp.ne.s32.totalorder %s208, %s210
    %p217 = scmp.eq.s32.totalorder %s27, 1
    %p218 = por %p216, %p217
    %p219 = scmp.ne.s32.totalorder %s210, %s211
    %p220 = scmp.eq.s32.totalorder %s27, 0
    %p221 = por %p219, %p220
    %p222 = scmp.ne.s32.totalorder %s210, %s211
    %p223 = scmp.eq.s32.totalorder %s28, 1
    %p224 = por %p222, %p223
    %p226 = scmp.ne.s32.totalorder %s211, %s225
    %p227 = scmp.eq.s32.totalorder %s28, 0
    %p228 = por %p226, %p227
    %s230 = sadd.s32 %s229, 1
    %p233 = scmp.eq.s32.totalorder %s22, 1
    %p234 = scmp.ne.s32.totalorder %s229, %s231
    %p235 = scmp.eq.s32.totalorder %s22, 0
    %p236 = por %p234, %p235
    %p237 = scmp.ne.s32.totalorder %s229, %s231
    %p238 = scmp.eq.s32.totalorder %s27, 1
    %p239 = por %p237, %p238
    %p240 = scmp.ne.s32.totalorder %s231, %s232
    %p241 = scmp.eq.s32.totalorder %s27, 0
    %p242 = por %p240, %p241
    %p243 = scmp.ne.s32.totalorder %s231, %s232
    %p244 = scmp.eq.s32.totalorder %s28, 1
    %p245 = por %p243, %p244
    %p247 = scmp.ne.s32.totalorder %s232, %s246
    %p248 = scmp.eq.s32.totalorder %s28, 0
    %p249 = por %p247, %p248
    %s251 = sadd.s32 %s250, 1
    %p254 = scmp.eq.s32.totalorder %s22, 1
    %p255 = scmp.ne.s32.totalorder %s250, %s252
    %p256 = scmp.eq.s32.totalorder %s22, 0
    %p257 = por %p255, %p256
    %p258 = scmp.ne.s32.totalorder %s250, %s252
    %p259 = scmp.eq.s32.totalorder %s27, 1
    %p260 = por %p258, %p259
    %p261 = scmp.ne.s32.totalorder %s252, %s253
    %p262 = scmp.eq.s32.totalorder %s27, 0
    %p263 = por %p261, %p262
    %p264 = scmp.ne.s32.totalorder %s252, %s253
    %p265 = scmp.eq.s32.totalorder %s28, 1
    %p266 = por %p264, %p265
    %p268 = scmp.ne.s32.totalorder %s253, %s267
    %p269 = scmp.eq.s32.totalorder %s28, 0
    %p270 = por %p268, %p269
    %s272 = sadd.s32 %s271, 1
    %p275 = scmp.eq.s32.totalorder %s22, 1
    %p276 = scmp.ne.s32.totalorder %s271, %s273
    %p277 = scmp.eq.s32.totalorder %s22, 0
    %p278 = por %p276, %p277
    %p279 = scmp.ne.s32.totalorder %s271, %s273
    %p280 = scmp.eq.s32.totalorder %s27, 1
    %p281 = por %p279, %p280
    %p282 = scmp.ne.s32.totalorder %s273, %s274
    %p283 = scmp.eq.s32.totalorder %s27, 0
    %p284 = por %p282, %p283
    %p285 = scmp.ne.s32.totalorder %s273, %s274
    %p286 = scmp.eq.s32.totalorder %s28, 1
    %p287 = por %p285, %p286
    %p289 = scmp.ne.s32.totalorder %s274, %s288
    %p290 = scmp.eq.s32.totalorder %s28, 0
    %p291 = por %p289, %p290
    %s293 = sadd.s32 %s292, 1
    %p296 = scmp.eq.s32.totalorder %s22, 1
    %p297 = scmp.ne.s32.totalorder %s292, %s294
    %p298 = scmp.eq.s32.totalorder %s22, 0
    %p299 = por %p297, %p298
    %p300 = scmp.ne.s32.totalorder %s292, %s294
    %p301 = scmp.eq.s32.totalorder %s27, 1
    %p302 = por %p300, %p301
    %p303 = scmp.ne.s32.totalorder %s294, %s295
    %p304 = scmp.eq.s32.totalorder %s27, 0
    %p305 = por %p303, %p304
    %p306 = scmp.ne.s32.totalorder %s294, %s295
    %p307 = scmp.eq.s32.totalorder %s28, 1
    %p308 = por %p306, %p307
    %p310 = scmp.ne.s32.totalorder %s295, %s309
    %p311 = scmp.eq.s32.totalorder %s28, 0
    %p312 = por %p310, %p311
    %s314 = sadd.s32 %s313, 1
    %p317 = scmp.eq.s32.totalorder %s22, 1
    %p318 = scmp.ne.s32.totalorder %s313, %s315
    %p319 = scmp.eq.s32.totalorder %s22, 0
    %p320 = por %p318, %p319
    %p321 = scmp.ne.s32.totalorder %s313, %s315
    %p322 = scmp.eq.s32.totalorder %s27, 1
    %p323 = por %p321, %p322
    %p324 = scmp.ne.s32.totalorder %s315, %s316
    %p325 = scmp.eq.s32.totalorder %s27, 0
    %p326 = por %p324, %p325
    %p327 = scmp.ne.s32.totalorder %s315, %s316
    %p328 = scmp.eq.s32.totalorder %s28, 1
    %p329 = por %p327, %p328
    %p331 = scmp.ne.s32.totalorder %s316, %s330
    %p332 = scmp.eq.s32.totalorder %s28, 0
    %p333 = por %p331, %p332
    %s334 = ssub.s32 %s22, %s29
    %p335 = scmp.eq.s32.totalorder %s334, 0
    %s337 = sadd.s32 %s336, 1
    %s338 = scalar_select %p335, %s336, %s337
    %p341 = pneg %p335
    %p342 = scmp.eq.s32.totalorder %s22, 1
    %p343 = por %p341, %p342
    %p344 = scmp.ne.s32.totalorder %s336, %s339
    %p345 = scmp.eq.s32.totalorder %s22, 0
    %p346 = por %p344, %p345
    %p347 = scmp.ne.s32.totalorder %s336, %s339
    %p348 = scmp.eq.s32.totalorder %s27, 1
    %p349 = por %p347, %p348
    %p350 = scmp.ne.s32.totalorder %s339, %s340
    %p351 = scmp.eq.s32.totalorder %s27, 0
    %p352 = por %p350, %p351
    %p353 = scmp.ne.s32.totalorder %s339, %s340
    %p354 = scmp.eq.s32.totalorder %s28, 1
    %p355 = por %p353, %p354
    %p357 = scmp.ne.s32.totalorder %s340, %s356
    %p358 = scmp.eq.s32.totalorder %s28, 0
    %p359 = por %p357, %p358
    %s360 = ssub.s32 %s22, %s29
    %p361 = scmp.eq.s32.totalorder %s360, 0
    %s363 = sadd.s32 %s362, 1
    %s364 = scalar_select %p361, %s362, %s363
    %p367 = pneg %p361
    %p368 = scmp.eq.s32.totalorder %s22, 1
    %p369 = por %p367, %p368
    %p370 = scmp.ne.s32.totalorder %s362, %s365
    %p371 = scmp.eq.s32.totalorder %s22, 0
    %p372 = por %p370, %p371
    %p373 = scmp.ne.s32.totalorder %s362, %s365
    %p374 = scmp.eq.s32.totalorder %s27, 1
    %p375 = por %p373, %p374
    %p376 = scmp.ne.s32.totalorder %s365, %s366
    %p377 = scmp.eq.s32.totalorder %s27, 0
    %p378 = por %p376, %p377
    %p379 = scmp.ne.s32.totalorder %s365, %s366
    %p380 = scmp.eq.s32.totalorder %s28, 1
    %p381 = por %p379, %p380
    %p383 = scmp.ne.s32.totalorder %s366, %s382
    %p384 = scmp.eq.s32.totalorder %s28, 0
    %p385 = por %p383, %p384
    %p386 = scmp.le.s32.totalorder 1, %s22
    %p387 = scmp.lt.s32.totalorder %s22, 3
    %p388 = pnand %p386, %p387
    %p389 = pneg %p388
    // Predicated region
    $region9: #{vae_forward.1} parent=5 // pred_check
      _
    $region10: #{vae_forward.1} parent=5 // pred_check_branch
      %391 = sbr.rel (%p388) target = $region12
    $region11: #{vae_forward.1} parent=5 // pred_region
      %s392 = ssub.s32 %s22, 1
      // Predicated region
      $region13: #{vae_forward.1} parent=11 // pred_check
        %p393 = pneg %p95
      $region14: #{vae_forward.1} parent=11 // pred_check_branch
        %395 = sbr.rel (%p393) target = $region16
      $region15: #{vae_forward.1} parent=11 // pred_region
        _
      $region16: #{vae_forward.1} parent=11 // pred_fallthru
        _
      // Predicated region
      $region17: #{vae_forward.1} parent=11 // pred_check
        %p396 = pneg %p116
      $region18: #{vae_forward.1} parent=11 // pred_check_branch
        %398 = sbr.rel (%p396) target = $region20
      $region19: #{vae_forward.1} parent=11 // pred_region
        _
      $region20: #{vae_forward.1} parent=11 // pred_fallthru
        _
      // Predicated region
      $region21: #{vae_forward.1} parent=11 // pred_check
        %p399 = pneg %p137
      $region22: #{vae_forward.1} parent=11 // pred_check_branch
        %401 = sbr.rel (%p399) target = $region24
      $region23: #{vae_forward.1} parent=11 // pred_region
        _
      $region24: #{vae_forward.1} parent=11 // pred_fallthru
        _
      // Predicated region
      $region25: #{vae_forward.1} parent=11 // pred_check
        %p402 = pneg %p158
      $region26: #{vae_forward.1} parent=11 // pred_check_branch
        %404 = sbr.rel (%p402) target = $region28
      $region27: #{vae_forward.1} parent=11 // pred_region
        _
      $region28: #{vae_forward.1} parent=11 // pred_fallthru
        _
      // Predicated region
      $region29: #{vae_forward.1} parent=11 // pred_check
        %p405 = pneg %p179
      $region30: #{vae_forward.1} parent=11 // pred_check_branch
        %407 = sbr.rel (%p405) target = $region32
      $region31: #{vae_forward.1} parent=11 // pred_region
        _
      $region32: #{vae_forward.1} parent=11 // pred_fallthru
        _
      // Predicated region
      $region33: #{vae_forward.1} parent=11 // pred_check
        %p408 = pneg %p200
      $region34: #{vae_forward.1} parent=11 // pred_check_branch
        %410 = sbr.rel (%p408) target = $region36
      $region35: #{vae_forward.1} parent=11 // pred_region
        _
      $region36: #{vae_forward.1} parent=11 // pred_fallthru
        _
      // Predicated region
      $region37: #{vae_forward.1} parent=11 // pred_check
        %p411 = pneg %p221
      $region38: #{vae_forward.1} parent=11 // pred_check_branch
        %413 = sbr.rel (%p411) target = $region40
      $region39: #{vae_forward.1} parent=11 // pred_region
        _
      $region40: #{vae_forward.1} parent=11 // pred_fallthru
        _
      // Predicated region
      $region41: #{vae_forward.1} parent=11 // pred_check
        %p414 = pneg %p242
      $region42: #{vae_forward.1} parent=11 // pred_check_branch
        %416 = sbr.rel (%p414) target = $region44
      $region43: #{vae_forward.1} parent=11 // pred_region
        _
      $region44: #{vae_forward.1} parent=11 // pred_fallthru
        _
      // Predicated region
      $region45: #{vae_forward.1} parent=11 // pred_check
        %p417 = pneg %p263
      $region46: #{vae_forward.1} parent=11 // pred_check_branch
        %419 = sbr.rel (%p417) target = $region48
      $region47: #{vae_forward.1} parent=11 // pred_region
        _
      $region48: #{vae_forward.1} parent=11 // pred_fallthru
        _
      // Predicated region
      $region49: #{vae_forward.1} parent=11 // pred_check
        %p420 = pneg %p284
      $region50: #{vae_forward.1} parent=11 // pred_check_branch
        %422 = sbr.rel (%p420) target = $region52
      $region51: #{vae_forward.1} parent=11 // pred_region
        _
      $region52: #{vae_forward.1} parent=11 // pred_fallthru
        _
      // Predicated region
      $region53: #{vae_forward.1} parent=11 // pred_check
        %p423 = pneg %p305
      $region54: #{vae_forward.1} parent=11 // pred_check_branch
        %425 = sbr.rel (%p423) target = $region56
      $region55: #{vae_forward.1} parent=11 // pred_region
        _
      $region56: #{vae_forward.1} parent=11 // pred_fallthru
        _
      // Predicated region
      $region57: #{vae_forward.1} parent=11 // pred_check
        %p426 = pneg %p326
      $region58: #{vae_forward.1} parent=11 // pred_check_branch
        %428 = sbr.rel (%p426) target = $region60
      $region59: #{vae_forward.1} parent=11 // pred_region
        _
      $region60: #{vae_forward.1} parent=11 // pred_fallthru
        _
    $region12: #{vae_forward.1} parent=5 // pred_fallthru
      _
    %p429 = scmp.lt.s32.totalorder %s22, 2
    // Predicated region
    $region61: #{vae_forward.1} parent=5 // pred_check
      %p430 = pneg %p429
    $region62: #{vae_forward.1} parent=5 // pred_check_branch
      %432 = sbr.rel (%p430) target = $region64
    $region63: #{vae_forward.1} parent=5 // pred_region
      // Predicated region
      $region65: #{vae_forward.1} parent=63 // pred_check
        %p433 = pneg %p42
      $region66: #{vae_forward.1} parent=63 // pred_check_branch
        %435 = sbr.rel (%p433) target = $region68
      $region67: #{vae_forward.1} parent=63 // pred_region
        %s436 = smul.u32 16, %s22
        %p437 = scmp.lt.s32.totalorder %s436, 31
        %s438 = scalar_select %p437, %s436, 31
        %s439 = smul.addr %s438, 7
        %s440 = smul.addr %s439, 4
        %s441 = scalar_lea.vmem %s0, %s440
        %s442 = smul.u32 16, %s22
      $region68: #{vae_forward.1} parent=63 // pred_fallthru
        _
      // Predicated region
      $region69: #{vae_forward.1} parent=63 // pred_check
        %p443 = pneg %p68
      $region70: #{vae_forward.1} parent=63 // pred_check_branch
        %445 = sbr.rel (%p443) target = $region72
      $region71: #{vae_forward.1} parent=63 // pred_region
        %s446 = smul.u32 16, %s22
        %p447 = scmp.lt.s32.totalorder %s446, 31
        %s448 = scalar_select %p447, %s446, 31
        %s449 = smul.addr %s448, 8
        %s450 = scalar_lea.vmem %s1, %s449
        %s451 = smul.u32 16, %s22
      $region72: #{vae_forward.1} parent=63 // pred_fallthru
        _
    $region64: #{vae_forward.1} parent=5 // pred_fallthru
      _
    %p452 = scmp.le.s32.totalorder 1, %s22
    %p453 = scmp.lt.s32.totalorder %s22, 3
    %p454 = pnand %p452, %p453
    %p455 = pneg %p454
    // Predicated region
    $region73: #{vae_forward.1} parent=5 // pred_check
      _
    $region74: #{vae_forward.1} parent=5 // pred_check_branch
      %457 = sbr.rel (%p454) target = $region76
    $region75: #{vae_forward.1} parent=5 // pred_region
      %s458 = ssub.s32 %s22, 1
      %s459 = smul.u32 16, %s27
      %p460 = scmp.lt.s32.totalorder %s459, 31
      %s461 = scalar_select %p460, %s459, 31
      %s462 = smul.addr %s461, 7
      %s463 = smul.addr %s462, 4
      %s464 = scalar_lea.vmem %s0, %s463
      %p465 = pneg %p48
      %p466 = pneg %p45
      %s467 = smul.u32 16, %s27
      %p468 = scmp.lt.s32.totalorder %s467, 31
      %s469 = scalar_select %p468, %s467, 31
      %s470 = smul.addr %s469, 8
      %s471 = scalar_lea.vmem %s1, %s470
      %p472 = pneg %p74
      %p473 = pneg %p71
      %p474 = pneg %p95
      %p475 = pneg %p92
      %p476 = pneg %p116
      %p477 = pneg %p113
      %p478 = pneg %p137
      %p479 = pneg %p134
      %p480 = pneg %p158
      %p481 = pneg %p155
      %p482 = pneg %p179
      %p483 = pneg %p176
      %p484 = pneg %p200
      %p485 = pneg %p197
      %p486 = pneg %p221
      %p487 = pneg %p218
      %p488 = pneg %p242
      %p489 = pneg %p239
      %p490 = pneg %p263
      %p491 = pneg %p260
      %p492 = pneg %p284
      %p493 = pneg %p281
      %p494 = pneg %p305
      %p495 = pneg %p302
      %p496 = pneg %p326
      %p497 = pneg %p323
      %p498 = pneg %p352
      %p499 = pneg %p349
      %s500 = smul.u32 16, %s27
      %p501 = scmp.lt.s32.totalorder %s500, 31
      %s502 = scalar_select %p501, %s500, 31
      %s503 = smul.addr %s502, 7
      %s504 = smul.addr %s503, 8
      %s505 = scalar_lea.vmem %s14, %s504
      %p506 = pneg %p378
      %p507 = pneg %p375
      %s508 = smul.u32 16, %s27
      %p509 = scmp.lt.s32.totalorder %s508, 31
      %s510 = scalar_select %p509, %s508, 31
      %s511 = smul.addr %s510, 2
      %s512 = smul.addr %s511, 8
      %s513 = scalar_lea.vmem %s15, %s512
      %s514 = smul.u32 16, %s27
      %p515 = scmp.lt.s32.totalorder %s514, 31
      %s516 = scalar_select %p515, %s514, 31
      %s517 = smul.addr %s516, 7
      %s518 = smul.addr %s517, 4
      %s519 = scalar_lea.vmem %s0, %s518
      %s520 = smul.u32 16, %s27
      %s521 = smul.u32 16, %s27
      %p522 = scmp.lt.s32.totalorder %s521, 31
      %s523 = scalar_select %p522, %s521, 31
      %s524 = smul.addr %s523, 8
      %s525 = scalar_lea.vmem %s1, %s524
      %s526 = smul.u32 16, %s27
      %s527 = smul.u32 16, %s27
      %p528 = scmp.lt.s32.totalorder %s527, 31
      %s529 = scalar_select %p528, %s527, 31
      %s530 = smul.addr %s529, 7
      %s531 = smul.addr %s530, 8
      %s532 = scalar_lea.vmem %s14, %s531
      %s533 = smul.u32 16, %s27
      %s534 = smul.u32 16, %s27
      %p535 = scmp.lt.s32.totalorder %s534, 31
      %s536 = scalar_select %p535, %s534, 31
      %s537 = smul.addr %s536, 2
      %s538 = smul.addr %s537, 8
      %s539 = scalar_lea.vmem %s15, %s538
      %s540 = smul.u32 16, %s27
      %v542 = vld [vmem:[%s519] sm:$0xff]
      %v543 = vld [vmem:[%s519 + $0x8] sm:$0xff]
      %v544 = vld [vmem:[%s519 + $0x10] sm:$0xff]
      %v545 = vld [vmem:[%s519 + $0x18] sm:$0xf]
      %v546 = vld [vmem:[%s519 + $0x1c] sm:$0xff]
      %v547 = vld [vmem:[%s519 + $0x24] sm:$0xff]
      %v548 = vld [vmem:[%s519 + $0x2c] sm:$0xff]
      %v549 = vld [vmem:[%s519 + $0x34] sm:$0xf]
      %v550 = vld [vmem:[%s519 + $0x38] sm:$0xff]
      %v551 = vld [vmem:[%s519 + $0x40] sm:$0xff]
      %v552 = vld [vmem:[%s519 + $0x48] sm:$0xff]
      %v553 = vld [vmem:[%s519 + $0x50] sm:$0xf]
      %v554 = vld [vmem:[%s519 + $0x54] sm:$0xff]
      %v555 = vld [vmem:[%s519 + $0x5c] sm:$0xff]
      %v556 = vld [vmem:[%s519 + $0x64] sm:$0xff]
      %v557 = vld [vmem:[%s519 + $0x6c] sm:$0xf]
      %v558 = vld [vmem:[%s519 + $0x70] sm:$0xff]
      %v559 = vld [vmem:[%s519 + $0x78] sm:$0xff]
      %v560 = vld [vmem:[%s519 + $0x80] sm:$0xff]
      %v561 = vld [vmem:[%s519 + $0x88] sm:$0xf]
      %v562 = vld [vmem:[%s519 + $0x8c] sm:$0xff]
      %v563 = vld [vmem:[%s519 + $0x94] sm:$0xff]
      %v564 = vld [vmem:[%s519 + $0x9c] sm:$0xff]
      %v565 = vld [vmem:[%s519 + $0xa4] sm:$0xf]
      %v566 = vld [vmem:[%s519 + $0xa8] sm:$0xff]
      %v567 = vld [vmem:[%s519 + $0xb0] sm:$0xff]
      %v568 = vld [vmem:[%s519 + $0xb8] sm:$0xff]
      %v569 = vld [vmem:[%s519 + $0xc0] sm:$0xf]
      %v570 = vld [vmem:[%s519 + $0xc4] sm:$0xff]
      %v571 = vld [vmem:[%s519 + $0xcc] sm:$0xff]
      %v572 = vld [vmem:[%s519 + $0xd4] sm:$0xff]
      %v573 = vld [vmem:[%s519 + $0xdc] sm:$0xf]
      %v574 = vld [vmem:[%s519 + $0xe0] sm:$0xff]
      %v575 = vld [vmem:[%s519 + $0xe8] sm:$0xff]
      %v576 = vld [vmem:[%s519 + $0xf0] sm:$0xff]
      %v577 = vld [vmem:[%s519 + $0xf8] sm:$0xf]
      %v578 = vld [vmem:[%s519 + $0xfc] sm:$0xff]
      %v579 = vld [vmem:[%s519 + $0x104] sm:$0xff]
      %v580 = vld [vmem:[%s519 + $0x10c] sm:$0xff]
      %v581 = vld [vmem:[%s519 + $0x114] sm:$0xf]
      %v582 = vld [vmem:[%s519 + $0x118] sm:$0xff]
      %v583 = vld [vmem:[%s519 + $0x120] sm:$0xff]
      %v584 = vld [vmem:[%s519 + $0x128] sm:$0xff]
      %v585 = vld [vmem:[%s519 + $0x130] sm:$0xf]
      %v586 = vld [vmem:[%s519 + $0x134] sm:$0xff]
      %v587 = vld [vmem:[%s519 + $0x13c] sm:$0xff]
      %v588 = vld [vmem:[%s519 + $0x144] sm:$0xff]
      %v589 = vld [vmem:[%s519 + $0x14c] sm:$0xf]
      %v590 = vld [vmem:[%s519 + $0x150] sm:$0xff]
      %v591 = vld [vmem:[%s519 + $0x158] sm:$0xff]
      %v592 = vld [vmem:[%s519 + $0x160] sm:$0xff]
      %v593 = vld [vmem:[%s519 + $0x168] sm:$0xf]
      %v594 = vld [vmem:[%s519 + $0x16c] sm:$0xff]
      %v595 = vld [vmem:[%s519 + $0x174] sm:$0xff]
      %v596 = vld [vmem:[%s519 + $0x17c] sm:$0xff]
      %v597 = vld [vmem:[%s519 + $0x184] sm:$0xf]
      %v598 = vld [vmem:[%s519 + $0x188] sm:$0xff]
      %v599 = vld [vmem:[%s519 + $0x190] sm:$0xff]
      %v600 = vld [vmem:[%s519 + $0x198] sm:$0xff]
      %v601 = vld [vmem:[%s519 + $0x1a0] sm:$0xf]
      %v602 = vld [vmem:[%s519 + $0x1a4] sm:$0xff]
      %v603 = vld [vmem:[%s519 + $0x1ac] sm:$0xff]
      %v604 = vld [vmem:[%s519 + $0x1b4] sm:$0xff]
      %v605 = vld [vmem:[%s519 + $0x1bc] sm:$0xf]
      %v606 = vld [vmem:[%s2] sm:$0xff]
      %v607 = vld [vmem:[%s2 + $0x8] sm:$0xff]
      %v608 = vld [vmem:[%s2 + $0x10] sm:$0xff]
      %v609 = vld [vmem:[%s2 + $0x18] sm:$0xff]
      %v610 = vld [vmem:[%s2 + $0x20] sm:$0xff]
      %v611 = vld [vmem:[%s2 + $0x28] sm:$0xff]
      %v612 = vld [vmem:[%s2 + $0x30] sm:$0xff]
      %v613 = vld [vmem:[%s2 + $0x38] sm:$0xff]
      %v614 = vld [vmem:[%s2 + $0x40] sm:$0xff]
      %v615 = vld [vmem:[%s2 + $0x48] sm:$0xff]
      %v616 = vld [vmem:[%s2 + $0x50] sm:$0xff]
      %v617 = vld [vmem:[%s2 + $0x58] sm:$0xff]
      %v618 = vld [vmem:[%s2 + $0x60] sm:$0xff]
      %v619 = vld [vmem:[%s2 + $0x68] sm:$0xff]
      %v620 = vld [vmem:[%s2 + $0x70] sm:$0xff]
      %v621 = vld [vmem:[%s2 + $0x78] sm:$0xff]
      %v622 = vld [vmem:[%s2 + $0x80] sm:$0xff]
      %v623 = vld [vmem:[%s2 + $0x88] sm:$0xff]
      %v624 = vld [vmem:[%s2 + $0x90] sm:$0xff]
      %v625 = vld [vmem:[%s2 + $0x98] sm:$0xff]
      %v626 = vld [vmem:[%s2 + $0xa0] sm:$0xff]
      %v627 = vld [vmem:[%s2 + $0xa8] sm:$0xff]
      %v628 = vld [vmem:[%s2 + $0xb0] sm:$0xff]
      %v629 = vld [vmem:[%s2 + $0xb8] sm:$0xff]
      %v630 = vld [vmem:[%s2 + $0xc0] sm:$0xff]
      %v631 = vld [vmem:[%s2 + $0xc8] sm:$0xff]
      %v632 = vld [vmem:[%s2 + $0xd0] sm:$0xff]
      %v633 = vld [vmem:[%s2 + $0xd8] sm:$0xff]
      %v634 = vld [vmem:[%s2 + $0xe0] sm:$0xff]
      %v635 = vld [vmem:[%s2 + $0xe8] sm:$0xff]
      %v636 = vld [vmem:[%s2 + $0xf0] sm:$0xff]
      %v637 = vld [vmem:[%s2 + $0xf8] sm:$0xff]
      %v638 = vld [vmem:[%s2 + $0x100] sm:$0xff]
      %v639 = vld [vmem:[%s2 + $0x108] sm:$0xff]
      %v640 = vld [vmem:[%s2 + $0x110] sm:$0xff]
      %v641 = vld [vmem:[%s2 + $0x118] sm:$0xff]
      %v642 = vld [vmem:[%s2 + $0x120] sm:$0xff]
      %v643 = vld [vmem:[%s2 + $0x128] sm:$0xff]
      %v644 = vld [vmem:[%s2 + $0x130] sm:$0xff]
      %v645 = vld [vmem:[%s2 + $0x138] sm:$0xff]
      %v646 = vld [vmem:[%s2 + $0x140] sm:$0xff]
      %v647 = vld [vmem:[%s2 + $0x148] sm:$0xff]
      %v648 = vld [vmem:[%s2 + $0x150] sm:$0xff]
      %v649 = vld [vmem:[%s2 + $0x158] sm:$0xff]
      %v650 = vld [vmem:[%s2 + $0x160] sm:$0xff]
      %v651 = vld [vmem:[%s2 + $0x168] sm:$0xff]
      %v652 = vld [vmem:[%s2 + $0x170] sm:$0xff]
      %v653 = vld [vmem:[%s2 + $0x178] sm:$0xff]
      %v654 = vld [vmem:[%s2 + $0x180] sm:$0xff]
      %v655 = vld [vmem:[%s2 + $0x188] sm:$0xff]
      %v656 = vld [vmem:[%s2 + $0x190] sm:$0xff]
      %v657 = vld [vmem:[%s2 + $0x198] sm:$0xff]
      %v658 = vld [vmem:[%s2 + $0x1a0] sm:$0xff]
      %v659 = vld [vmem:[%s2 + $0x1a8] sm:$0xff]
      %v660 = vld [vmem:[%s2 + $0x1b0] sm:$0xff]
      %v661 = vld [vmem:[%s2 + $0x1b8] sm:$0xff]
      %v662 = vld [vmem:[%s2 + $0x1c0] sm:$0xff]
      %v663 = vld [vmem:[%s2 + $0x1c8] sm:$0xff]
      %v664 = vld [vmem:[%s2 + $0x1d0] sm:$0xff]
      %v665 = vld [vmem:[%s2 + $0x1d8] sm:$0xff]
      %v666 = vld [vmem:[%s2 + $0x1e0] sm:$0xff]
      %v667 = vld [vmem:[%s2 + $0x1e8] sm:$0xff]
      %v668 = vld [vmem:[%s2 + $0x1f0] sm:$0xff]
      %v669 = vld [vmem:[%s2 + $0x1f8] sm:$0xff]
      %v670 = vld [vmem:[%s2 + $0x200] sm:$0xff]
      %v671 = vld [vmem:[%s2 + $0x208] sm:$0xff]
      %v672 = vld [vmem:[%s2 + $0x210] sm:$0xff]
      %v673 = vld [vmem:[%s2 + $0x218] sm:$0xff]
      %v674 = vld [vmem:[%s2 + $0x220] sm:$0xff]
      %v675 = vld [vmem:[%s2 + $0x228] sm:$0xff]
      %v676 = vld [vmem:[%s2 + $0x230] sm:$0xff]
      %v677 = vld [vmem:[%s2 + $0x238] sm:$0xff]
      %v678 = vld [vmem:[%s2 + $0x240] sm:$0xff]
      %v679 = vld [vmem:[%s2 + $0x248] sm:$0xff]
      %v680 = vld [vmem:[%s2 + $0x250] sm:$0xff]
      %v681 = vld [vmem:[%s2 + $0x258] sm:$0xff]
      %v682 = vld [vmem:[%s2 + $0x260] sm:$0xff]
      %v683 = vld [vmem:[%s2 + $0x268] sm:$0xff]
      %v684 = vld [vmem:[%s2 + $0x270] sm:$0xff]
      %v685 = vld [vmem:[%s2 + $0x278] sm:$0xff]
      %v686 = vld [vmem:[%s2 + $0x280] sm:$0xff]
      %v687 = vld [vmem:[%s2 + $0x288] sm:$0xff]
      %v688 = vld [vmem:[%s2 + $0x290] sm:$0xff]
      %v689 = vld [vmem:[%s2 + $0x298] sm:$0xff]
      %v690 = vld [vmem:[%s2 + $0x2a0] sm:$0xff]
      %v691 = vld [vmem:[%s2 + $0x2a8] sm:$0xff]
      %v692 = vld [vmem:[%s2 + $0x2b0] sm:$0xff]
      %v693 = vld [vmem:[%s2 + $0x2b8] sm:$0xff]
      %v694 = vld [vmem:[%s2 + $0x2c0] sm:$0xff]
      %v695 = vld [vmem:[%s2 + $0x2c8] sm:$0xff]
      %v696 = vld [vmem:[%s2 + $0x2d0] sm:$0xff]
      %v697 = vld [vmem:[%s2 + $0x2d8] sm:$0xff]
      %v698 = vld [vmem:[%s2 + $0x2e0] sm:$0xff]
      %v699 = vld [vmem:[%s2 + $0x2e8] sm:$0xff]
      %v700 = vld [vmem:[%s2 + $0x2f0] sm:$0xff]
      %v701 = vld [vmem:[%s2 + $0x2f8] sm:$0xff]
      %v702 = vld [vmem:[%s2 + $0x300] sm:$0xff]
      %v703 = vld [vmem:[%s2 + $0x308] sm:$0xff]
      %v704 = vld [vmem:[%s2 + $0x310] sm:$0xff]
      %v705 = vld [vmem:[%s2 + $0x318] sm:$0xff]
      %v706 = vld [vmem:[%s2 + $0x320] sm:$0xff]
      %v707 = vld [vmem:[%s2 + $0x328] sm:$0xff]
      %v708 = vld [vmem:[%s2 + $0x330] sm:$0xff]
      %v709 = vld [vmem:[%s2 + $0x338] sm:$0xff]
      %v710 = vld [vmem:[%s2 + $0x340] sm:$0xff]
      %v711 = vld [vmem:[%s2 + $0x348] sm:$0xff]
      %v712 = vld [vmem:[%s2 + $0x350] sm:$0xff]
      %v713 = vld [vmem:[%s2 + $0x358] sm:$0xff]
      %v714 = vld [vmem:[%s2 + $0x360] sm:$0xff]
      %v715 = vld [vmem:[%s2 + $0x368] sm:$0xff]
      %v716 = vld [vmem:[%s2 + $0x370] sm:$0xff]
      %v717 = vld [vmem:[%s2 + $0x378] sm:$0xff]
      %v718 = vld [vmem:[%s3] sm:$0x3]
      %v720 = vlaneseq
      %v721 = vshrl.u32 %v720, 7
      %v722 = vsub.s32 0, %v721
      %v723 = vrot.slane %v718, %v722
      %v724 = vlaneseq
      %v725 = vshrl.u32 %v724, 7
      %v726 = vsub.s32 1, %v725
      %v727 = vrot.slane %v718, %v726
      %v794 = vunpack.c.l.b16 %v542
      %v795 = vunpack.c.h.b16 %v542
      %v796 = vunpack.c.l.b16 %v543
      %v797 = vunpack.c.h.b16 %v543
      %v798 = vunpack.c.l.b16 %v544
      %v799 = vunpack.c.h.b16 %v544
      %v800 = vunpack.c.l.b16 %v545
      %v801 = vunpack.c.l.b16 %v546
      %v802 = vunpack.c.h.b16 %v546
      %v803 = vunpack.c.l.b16 %v547
      %v804 = vunpack.c.h.b16 %v547
      %v805 = vunpack.c.l.b16 %v548
      %v806 = vunpack.c.h.b16 %v548
      %v807 = vunpack.c.l.b16 %v549
      %v808 = vunpack.c.l.b16 %v550
      %v809 = vunpack.c.h.b16 %v550
      %v810 = vunpack.c.l.b16 %v551
      %v811 = vunpack.c.h.b16 %v551
      %v812 = vunpack.c.l.b16 %v552
      %v813 = vunpack.c.h.b16 %v552
      %v814 = vunpack.c.l.b16 %v553
      %v815 = vunpack.c.l.b16 %v554
      %v816 = vunpack.c.h.b16 %v554
      %v817 = vunpack.c.l.b16 %v555
      %v818 = vunpack.c.h.b16 %v555
      %v819 = vunpack.c.l.b16 %v556
      %v820 = vunpack.c.h.b16 %v556
      %v821 = vunpack.c.l.b16 %v557
      %v822 = vunpack.c.l.b16 %v558
      %v823 = vunpack.c.h.b16 %v558
      %v824 = vunpack.c.l.b16 %v559
      %v825 = vunpack.c.h.b16 %v559
      %v826 = vunpack.c.l.b16 %v560
      %v827 = vunpack.c.h.b16 %v560
      %v828 = vunpack.c.l.b16 %v561
      %v829 = vunpack.c.l.b16 %v562
      %v830 = vunpack.c.h.b16 %v562
      %v831 = vunpack.c.l.b16 %v563
      %v832 = vunpack.c.h.b16 %v563
      %v833 = vunpack.c.l.b16 %v564
      %v834 = vunpack.c.h.b16 %v564
      %v835 = vunpack.c.l.b16 %v565
      %v836 = vunpack.c.l.b16 %v566
      %v837 = vunpack.c.h.b16 %v566
      %v838 = vunpack.c.l.b16 %v567
      %v839 = vunpack.c.h.b16 %v567
      %v840 = vunpack.c.l.b16 %v568
      %v841 = vunpack.c.h.b16 %v568
      %v842 = vunpack.c.l.b16 %v569
      %v843 = vunpack.c.l.b16 %v570
      %v844 = vunpack.c.h.b16 %v570
      %v845 = vunpack.c.l.b16 %v571
      %v846 = vunpack.c.h.b16 %v571
      %v847 = vunpack.c.l.b16 %v572
      %v848 = vunpack.c.h.b16 %v572
      %v849 = vunpack.c.l.b16 %v573
      %v850 = vunpack.c.l.b16 %v574
      %v851 = vunpack.c.h.b16 %v574
      %v852 = vunpack.c.l.b16 %v575
      %v853 = vunpack.c.h.b16 %v575
      %v854 = vunpack.c.l.b16 %v576
      %v855 = vunpack.c.h.b16 %v576
      %v856 = vunpack.c.l.b16 %v577
      %v857 = vunpack.c.l.b16 %v578
      %v858 = vunpack.c.h.b16 %v578
      %v859 = vunpack.c.l.b16 %v579
      %v860 = vunpack.c.h.b16 %v579
      %v861 = vunpack.c.l.b16 %v580
      %v862 = vunpack.c.h.b16 %v580
      %v863 = vunpack.c.l.b16 %v581
      %v864 = vunpack.c.l.b16 %v582
      %v865 = vunpack.c.h.b16 %v582
      %v866 = vunpack.c.l.b16 %v583
      %v867 = vunpack.c.h.b16 %v583
      %v868 = vunpack.c.l.b16 %v584
      %v869 = vunpack.c.h.b16 %v584
      %v870 = vunpack.c.l.b16 %v585
      %v871 = vunpack.c.l.b16 %v586
      %v872 = vunpack.c.h.b16 %v586
      %v873 = vunpack.c.l.b16 %v587
      %v874 = vunpack.c.h.b16 %v587
      %v875 = vunpack.c.l.b16 %v588
      %v876 = vunpack.c.h.b16 %v588
      %v877 = vunpack.c.l.b16 %v589
      %v878 = vunpack.c.l.b16 %v590
      %v879 = vunpack.c.h.b16 %v590
      %v880 = vunpack.c.l.b16 %v591
      %v881 = vunpack.c.h.b16 %v591
      %v882 = vunpack.c.l.b16 %v592
      %v883 = vunpack.c.h.b16 %v592
      %v884 = vunpack.c.l.b16 %v593
      %v885 = vunpack.c.l.b16 %v594
      %v886 = vunpack.c.h.b16 %v594
      %v887 = vunpack.c.l.b16 %v595
      %v888 = vunpack.c.h.b16 %v595
      %v889 = vunpack.c.l.b16 %v596
      %v890 = vunpack.c.h.b16 %v596
      %v891 = vunpack.c.l.b16 %v597
      %v892 = vunpack.c.l.b16 %v598
      %v893 = vunpack.c.h.b16 %v598
      %v894 = vunpack.c.l.b16 %v599
      %v895 = vunpack.c.h.b16 %v599
      %v896 = vunpack.c.l.b16 %v600
      %v897 = vunpack.c.h.b16 %v600
      %v898 = vunpack.c.l.b16 %v601
      %v899 = vunpack.c.l.b16 %v602
      %v900 = vunpack.c.h.b16 %v602
      %v901 = vunpack.c.l.b16 %v603
      %v902 = vunpack.c.h.b16 %v603
      %v903 = vunpack.c.l.b16 %v604
      %v904 = vunpack.c.h.b16 %v604
      %v905 = vunpack.c.l.b16 %v605
      %v906 = vpack.c.b16 %v801, %v794
      %v907 = vpack.c.b16 %v802, %v795
      %v908 = vpack.c.b16 %v803, %v796
      %v909 = vpack.c.b16 %v804, %v797
      %v910 = vpack.c.b16 %v805, %v798
      %v911 = vpack.c.b16 %v806, %v799
      %v912 = vpack.c.b16 %v807, %v800
      %v913 = vpack.c.b16 %v815, %v808
      %v914 = vpack.c.b16 %v816, %v809
      %v915 = vpack.c.b16 %v817, %v810
      %v916 = vpack.c.b16 %v818, %v811
      %v917 = vpack.c.b16 %v819, %v812
      %v918 = vpack.c.b16 %v820, %v813
      %v919 = vpack.c.b16 %v821, %v814
      %v920 = vpack.c.b16 %v829, %v822
      %v921 = vpack.c.b16 %v830, %v823
      %v922 = vpack.c.b16 %v831, %v824
      %v923 = vpack.c.b16 %v832, %v825
      %v924 = vpack.c.b16 %v833, %v826
      %v925 = vpack.c.b16 %v834, %v827
      %v926 = vpack.c.b16 %v835, %v828
      %v927 = vpack.c.b16 %v843, %v836
      %v928 = vpack.c.b16 %v844, %v837
      %v929 = vpack.c.b16 %v845, %v838
      %v930 = vpack.c.b16 %v846, %v839
      %v931 = vpack.c.b16 %v847, %v840
      %v932 = vpack.c.b16 %v848, %v841
      %v933 = vpack.c.b16 %v849, %v842
      %v934 = vpack.c.b16 %v857, %v850
      %v935 = vpack.c.b16 %v858, %v851
      %v936 = vpack.c.b16 %v859, %v852
      %v937 = vpack.c.b16 %v860, %v853
      %v938 = vpack.c.b16 %v861, %v854
      %v939 = vpack.c.b16 %v862, %v855
      %v940 = vpack.c.b16 %v863, %v856
      %v941 = vpack.c.b16 %v871, %v864
      %v942 = vpack.c.b16 %v872, %v865
      %v943 = vpack.c.b16 %v873, %v866
      %v944 = vpack.c.b16 %v874, %v867
      %v945 = vpack.c.b16 %v875, %v868
      %v946 = vpack.c.b16 %v876, %v869
      %v947 = vpack.c.b16 %v877, %v870
      %v948 = vpack.c.b16 %v885, %v878
      %v949 = vpack.c.b16 %v886, %v879
      %v950 = vpack.c.b16 %v887, %v880
      %v951 = vpack.c.b16 %v888, %v881
      %v952 = vpack.c.b16 %v889, %v882
      %v953 = vpack.c.b16 %v890, %v883
      %v954 = vpack.c.b16 %v891, %v884
      %v955 = vpack.c.b16 %v899, %v892
      %v956 = vpack.c.b16 %v900, %v893
      %v957 = vpack.c.b16 %v901, %v894
      %v958 = vpack.c.b16 %v902, %v895
      %v959 = vpack.c.b16 %v903, %v896
      %v960 = vpack.c.b16 %v904, %v897
      %v961 = vpack.c.b16 %v905, %v898
      %v1130 = vunpack.c.l.b16 %v606
      %v1131 = vunpack.c.h.b16 %v606
      %v1132 = vunpack.c.l.b16 %v607
      %v1133 = vunpack.c.h.b16 %v607
      %v1134 = vunpack.c.l.b16 %v608
      %v1135 = vunpack.c.h.b16 %v608
      %v1136 = vunpack.c.l.b16 %v609
      %v1137 = vunpack.c.h.b16 %v609
      %v1138 = vunpack.c.l.b16 %v610
      %v1139 = vunpack.c.h.b16 %v610
      %v1140 = vunpack.c.l.b16 %v611
      %v1141 = vunpack.c.h.b16 %v611
      %v1142 = vunpack.c.l.b16 %v612
      %v1143 = vunpack.c.h.b16 %v612
      %v1144 = vunpack.c.l.b16 %v613
      %v1145 = vunpack.c.h.b16 %v613
      %v1146 = vunpack.c.l.b16 %v614
      %v1147 = vunpack.c.h.b16 %v614
      %v1148 = vunpack.c.l.b16 %v615
      %v1149 = vunpack.c.h.b16 %v615
      %v1150 = vunpack.c.l.b16 %v616
      %v1151 = vunpack.c.h.b16 %v616
      %v1152 = vunpack.c.l.b16 %v617
      %v1153 = vunpack.c.h.b16 %v617
      %v1154 = vunpack.c.l.b16 %v618
      %v1155 = vunpack.c.h.b16 %v618
      %v1156 = vunpack.c.l.b16 %v619
      %v1157 = vunpack.c.h.b16 %v619
      %v1158 = vunpack.c.l.b16 %v620
      %v1159 = vunpack.c.h.b16 %v620
      %v1160 = vunpack.c.l.b16 %v621
      %v1161 = vunpack.c.h.b16 %v621
      %v1162 = vunpack.c.l.b16 %v622
      %v1163 = vunpack.c.h.b16 %v622
      %v1164 = vunpack.c.l.b16 %v623
      %v1165 = vunpack.c.h.b16 %v623
      %v1166 = vunpack.c.l.b16 %v624
      %v1167 = vunpack.c.h.b16 %v624
      %v1168 = vunpack.c.l.b16 %v625
      %v1169 = vunpack.c.h.b16 %v625
      %v1170 = vunpack.c.l.b16 %v626
      %v1171 = vunpack.c.h.b16 %v626
      %v1172 = vunpack.c.l.b16 %v627
      %v1173 = vunpack.c.h.b16 %v627
      %v1174 = vunpack.c.l.b16 %v628
      %v1175 = vunpack.c.h.b16 %v628
      %v1176 = vunpack.c.l.b16 %v629
      %v1177 = vunpack.c.h.b16 %v629
      %v1178 = vunpack.c.l.b16 %v630
      %v1179 = vunpack.c.h.b16 %v630
      %v1180 = vunpack.c.l.b16 %v631
      %v1181 = vunpack.c.h.b16 %v631
      %v1182 = vunpack.c.l.b16 %v632
      %v1183 = vunpack.c.h.b16 %v632
      %v1184 = vunpack.c.l.b16 %v633
      %v1185 = vunpack.c.h.b16 %v633
      %v1186 = vunpack.c.l.b16 %v634
      %v1187 = vunpack.c.h.b16 %v634
      %v1188 = vunpack.c.l.b16 %v635
      %v1189 = vunpack.c.h.b16 %v635
      %v1190 = vunpack.c.l.b16 %v636
      %v1191 = vunpack.c.h.b16 %v636
      %v1192 = vunpack.c.l.b16 %v637
      %v1193 = vunpack.c.h.b16 %v637
      %v1194 = vunpack.c.l.b16 %v638
      %v1195 = vunpack.c.h.b16 %v638
      %v1196 = vunpack.c.l.b16 %v639
      %v1197 = vunpack.c.h.b16 %v639
      %v1198 = vunpack.c.l.b16 %v640
      %v1199 = vunpack.c.h.b16 %v640
      %v1200 = vunpack.c.l.b16 %v641
      %v1201 = vunpack.c.h.b16 %v641
      %v1202 = vunpack.c.l.b16 %v642
      %v1203 = vunpack.c.h.b16 %v642
      %v1204 = vunpack.c.l.b16 %v643
      %v1205 = vunpack.c.h.b16 %v643
      %v1206 = vunpack.c.l.b16 %v644
      %v1207 = vunpack.c.h.b16 %v644
      %v1208 = vunpack.c.l.b16 %v645
      %v1209 = vunpack.c.h.b16 %v645
      %v1210 = vunpack.c.l.b16 %v646
      %v1211 = vunpack.c.h.b16 %v646
      %v1212 = vunpack.c.l.b16 %v647
      %v1213 = vunpack.c.h.b16 %v647
      %v1214 = vunpack.c.l.b16 %v648
      %v1215 = vunpack.c.h.b16 %v648
      %v1216 = vunpack.c.l.b16 %v649
      %v1217 = vunpack.c.h.b16 %v649
      %v1218 = vunpack.c.l.b16 %v650
      %v1219 = vunpack.c.h.b16 %v650
      %v1220 = vunpack.c.l.b16 %v651
      %v1221 = vunpack.c.h.b16 %v651
      %v1222 = vunpack.c.l.b16 %v652
      %v1223 = vunpack.c.h.b16 %v652
      %v1224 = vunpack.c.l.b16 %v653
      %v1225 = vunpack.c.h.b16 %v653
      %v1226 = vunpack.c.l.b16 %v654
      %v1227 = vunpack.c.h.b16 %v654
      %v1228 = vunpack.c.l.b16 %v655
      %v1229 = vunpack.c.h.b16 %v655
      %v1230 = vunpack.c.l.b16 %v656
      %v1231 = vunpack.c.h.b16 %v656
      %v1232 = vunpack.c.l.b16 %v657
      %v1233 = vunpack.c.h.b16 %v657
      %v1234 = vunpack.c.l.b16 %v658
      %v1235 = vunpack.c.h.b16 %v658
      %v1236 = vunpack.c.l.b16 %v659
      %v1237 = vunpack.c.h.b16 %v659
      %v1238 = vunpack.c.l.b16 %v660
      %v1239 = vunpack.c.h.b16 %v660
      %v1240 = vunpack.c.l.b16 %v661
      %v1241 = vunpack.c.h.b16 %v661
      %v1242 = vunpack.c.l.b16 %v662
      %v1243 = vunpack.c.h.b16 %v662
      %v1244 = vunpack.c.l.b16 %v663
      %v1245 = vunpack.c.h.b16 %v663
      %v1246 = vunpack.c.l.b16 %v664
      %v1247 = vunpack.c.h.b16 %v664
      %v1248 = vunpack.c.l.b16 %v665
      %v1249 = vunpack.c.h.b16 %v665
      %v1250 = vunpack.c.l.b16 %v666
      %v1251 = vunpack.c.h.b16 %v666
      %v1252 = vunpack.c.l.b16 %v667
      %v1253 = vunpack.c.h.b16 %v667
      %v1254 = vunpack.c.l.b16 %v668
      %v1255 = vunpack.c.h.b16 %v668
      %v1256 = vunpack.c.l.b16 %v669
      %v1257 = vunpack.c.h.b16 %v669
      %v1258 = vunpack.c.l.b16 %v670
      %v1259 = vunpack.c.h.b16 %v670
      %v1260 = vunpack.c.l.b16 %v671
      %v1261 = vunpack.c.h.b16 %v671
      %v1262 = vunpack.c.l.b16 %v672
      %v1263 = vunpack.c.h.b16 %v672
      %v1264 = vunpack.c.l.b16 %v673
      %v1265 = vunpack.c.h.b16 %v673
      %v1266 = vunpack.c.l.b16 %v674
      %v1267 = vunpack.c.h.b16 %v674
      %v1268 = vunpack.c.l.b16 %v675
      %v1269 = vunpack.c.h.b16 %v675
      %v1270 = vunpack.c.l.b16 %v676
      %v1271 = vunpack.c.h.b16 %v676
      %v1272 = vunpack.c.l.b16 %v677
      %v1273 = vunpack.c.h.b16 %v677
      %v1274 = vunpack.c.l.b16 %v678
      %v1275 = vunpack.c.h.b16 %v678
      %v1276 = vunpack.c.l.b16 %v679
      %v1277 = vunpack.c.h.b16 %v679
      %v1278 = vunpack.c.l.b16 %v680
      %v1279 = vunpack.c.h.b16 %v680
      %v1280 = vunpack.c.l.b16 %v681
      %v1281 = vunpack.c.h.b16 %v681
      %v1282 = vunpack.c.l.b16 %v682
      %v1283 = vunpack.c.h.b16 %v682
      %v1284 = vunpack.c.l.b16 %v683
      %v1285 = vunpack.c.h.b16 %v683
      %v1286 = vunpack.c.l.b16 %v684
      %v1287 = vunpack.c.h.b16 %v684
      %v1288 = vunpack.c.l.b16 %v685
      %v1289 = vunpack.c.h.b16 %v685
      %v1290 = vunpack.c.l.b16 %v686
      %v1291 = vunpack.c.h.b16 %v686
      %v1292 = vunpack.c.l.b16 %v687
      %v1293 = vunpack.c.h.b16 %v687
      %v1294 = vunpack.c.l.b16 %v688
      %v1295 = vunpack.c.h.b16 %v688
      %v1296 = vunpack.c.l.b16 %v689
      %v1297 = vunpack.c.h.b16 %v689
      %v1298 = vunpack.c.l.b16 %v690
      %v1299 = vunpack.c.h.b16 %v690
      %v1300 = vunpack.c.l.b16 %v691
      %v1301 = vunpack.c.h.b16 %v691
      %v1302 = vunpack.c.l.b16 %v692
      %v1303 = vunpack.c.h.b16 %v692
      %v1304 = vunpack.c.l.b16 %v693
      %v1305 = vunpack.c.h.b16 %v693
      %v1306 = vunpack.c.l.b16 %v694
      %v1307 = vunpack.c.h.b16 %v694
      %v1308 = vunpack.c.l.b16 %v695
      %v1309 = vunpack.c.h.b16 %v695
      %v1310 = vunpack.c.l.b16 %v696
      %v1311 = vunpack.c.h.b16 %v696
      %v1312 = vunpack.c.l.b16 %v697
      %v1313 = vunpack.c.h.b16 %v697
      %v1314 = vunpack.c.l.b16 %v698
      %v1315 = vunpack.c.h.b16 %v698
      %v1316 = vunpack.c.l.b16 %v699
      %v1317 = vunpack.c.h.b16 %v699
      %v1318 = vunpack.c.l.b16 %v700
      %v1319 = vunpack.c.h.b16 %v700
      %v1320 = vunpack.c.l.b16 %v701
      %v1321 = vunpack.c.h.b16 %v701
      %v1322 = vunpack.c.l.b16 %v702
      %v1323 = vunpack.c.h.b16 %v702
      %v1324 = vunpack.c.l.b16 %v703
      %v1325 = vunpack.c.h.b16 %v703
      %v1326 = vunpack.c.l.b16 %v704
      %v1327 = vunpack.c.h.b16 %v704
      %v1328 = vunpack.c.l.b16 %v705
      %v1329 = vunpack.c.h.b16 %v705
      %v1330 = vunpack.c.l.b16 %v706
      %v1331 = vunpack.c.h.b16 %v706
      %v1332 = vunpack.c.l.b16 %v707
      %v1333 = vunpack.c.h.b16 %v707
      %v1334 = vunpack.c.l.b16 %v708
      %v1335 = vunpack.c.h.b16 %v708
      %v1336 = vunpack.c.l.b16 %v709
      %v1337 = vunpack.c.h.b16 %v709
      %v1338 = vunpack.c.l.b16 %v710
      %v1339 = vunpack.c.h.b16 %v710
      %v1340 = vunpack.c.l.b16 %v711
      %v1341 = vunpack.c.h.b16 %v711
      %v1342 = vunpack.c.l.b16 %v712
      %v1343 = vunpack.c.h.b16 %v712
      %v1344 = vunpack.c.l.b16 %v713
      %v1345 = vunpack.c.h.b16 %v713
      %v1346 = vunpack.c.l.b16 %v714
      %v1347 = vunpack.c.h.b16 %v714
      %v1348 = vunpack.c.l.b16 %v715
      %v1349 = vunpack.c.h.b16 %v715
      %v1350 = vunpack.c.l.b16 %v716
      %v1351 = vunpack.c.h.b16 %v716
      %v1352 = vunpack.c.l.b16 %v717
      %v1353 = vunpack.c.h.b16 %v717
      %v1354 = vpack.c.b16 %v1132, %v1130
      %v1355 = vpack.c.b16 %v1133, %v1131
      %v1356 = vpack.c.b16 %v1136, %v1134
      %v1357 = vpack.c.b16 %v1137, %v1135
      %v1358 = vpack.c.b16 %v1140, %v1138
      %v1359 = vpack.c.b16 %v1141, %v1139
      %v1360 = vpack.c.b16 %v1144, %v1142
      %v1361 = vpack.c.b16 %v1145, %v1143
      %v1362 = vpack.c.b16 %v1148, %v1146
      %v1363 = vpack.c.b16 %v1149, %v1147
      %v1364 = vpack.c.b16 %v1152, %v1150
      %v1365 = vpack.c.b16 %v1153, %v1151
      %v1366 = vpack.c.b16 %v1156, %v1154
      %v1367 = vpack.c.b16 %v1157, %v1155
      %v1368 = vpack.c.b16 %v1160, %v1158
      %v1369 = vpack.c.b16 %v1161, %v1159
      %v1370 = vpack.c.b16 %v1164, %v1162
      %v1371 = vpack.c.b16 %v1165, %v1163
      %v1372 = vpack.c.b16 %v1168, %v1166
      %v1373 = vpack.c.b16 %v1169, %v1167
      %v1374 = vpack.c.b16 %v1172, %v1170
      %v1375 = vpack.c.b16 %v1173, %v1171
      %v1376 = vpack.c.b16 %v1176, %v1174
      %v1377 = vpack.c.b16 %v1177, %v1175
      %v1378 = vpack.c.b16 %v1180, %v1178
      %v1379 = vpack.c.b16 %v1181, %v1179
      %v1380 = vpack.c.b16 %v1184, %v1182
      %v1381 = vpack.c.b16 %v1185, %v1183
      %v1382 = vpack.c.b16 %v1188, %v1186
      %v1383 = vpack.c.b16 %v1189, %v1187
      %v1384 = vpack.c.b16 %v1192, %v1190
      %v1385 = vpack.c.b16 %v1193, %v1191
      %v1386 = vpack.c.b16 %v1196, %v1194
      %v1387 = vpack.c.b16 %v1197, %v1195
      %v1388 = vpack.c.b16 %v1200, %v1198
      %v1389 = vpack.c.b16 %v1201, %v1199
      %v1390 = vpack.c.b16 %v1204, %v1202
      %v1391 = vpack.c.b16 %v1205, %v1203
      %v1392 = vpack.c.b16 %v1208, %v1206
      %v1393 = vpack.c.b16 %v1209, %v1207
      %v1394 = vpack.c.b16 %v1212, %v1210
      %v1395 = vpack.c.b16 %v1213, %v1211
      %v1396 = vpack.c.b16 %v1216, %v1214
      %v1397 = vpack.c.b16 %v1217, %v1215
      %v1398 = vpack.c.b16 %v1220, %v1218
      %v1399 = vpack.c.b16 %v1221, %v1219
      %v1400 = vpack.c.b16 %v1224, %v1222
      %v1401 = vpack.c.b16 %v1225, %v1223
      %v1402 = vpack.c.b16 %v1228, %v1226
      %v1403 = vpack.c.b16 %v1229, %v1227
      %v1404 = vpack.c.b16 %v1232, %v1230
      %v1405 = vpack.c.b16 %v1233, %v1231
      %v1406 = vpack.c.b16 %v1236, %v1234
      %v1407 = vpack.c.b16 %v1237, %v1235
      %v1408 = vpack.c.b16 %v1240, %v1238
      %v1409 = vpack.c.b16 %v1241, %v1239
      %v1410 = vpack.c.b16 %v1244, %v1242
      %v1411 = vpack.c.b16 %v1245, %v1243
      %v1412 = vpack.c.b16 %v1248, %v1246
      %v1413 = vpack.c.b16 %v1249, %v1247
      %v1414 = vpack.c.b16 %v1252, %v1250
      %v1415 = vpack.c.b16 %v1253, %v1251
      %v1416 = vpack.c.b16 %v1256, %v1254
      %v1417 = vpack.c.b16 %v1257, %v1255
      %v1418 = vpack.c.b16 %v1260, %v1258
      %v1419 = vpack.c.b16 %v1261, %v1259
      %v1420 = vpack.c.b16 %v1264, %v1262
      %v1421 = vpack.c.b16 %v1265, %v1263
      %v1422 = vpack.c.b16 %v1268, %v1266
      %v1423 = vpack.c.b16 %v1269, %v1267
      %v1424 = vpack.c.b16 %v1272, %v1270
      %v1425 = vpack.c.b16 %v1273, %v1271
      %v1426 = vpack.c.b16 %v1276, %v1274
      %v1427 = vpack.c.b16 %v1277, %v1275
      %v1428 = vpack.c.b16 %v1280, %v1278
      %v1429 = vpack.c.b16 %v1281, %v1279
      %v1430 = vpack.c.b16 %v1284, %v1282
      %v1431 = vpack.c.b16 %v1285, %v1283
      %v1432 = vpack.c.b16 %v1288, %v1286
      %v1433 = vpack.c.b16 %v1289, %v1287
      %v1434 = vpack.c.b16 %v1292, %v1290
      %v1435 = vpack.c.b16 %v1293, %v1291
      %v1436 = vpack.c.b16 %v1296, %v1294
      %v1437 = vpack.c.b16 %v1297, %v1295
      %v1438 = vpack.c.b16 %v1300, %v1298
      %v1439 = vpack.c.b16 %v1301, %v1299
      %v1440 = vpack.c.b16 %v1304, %v1302
      %v1441 = vpack.c.b16 %v1305, %v1303
      %v1442 = vpack.c.b16 %v1308, %v1306
      %v1443 = vpack.c.b16 %v1309, %v1307
      %v1444 = vpack.c.b16 %v1312, %v1310
      %v1445 = vpack.c.b16 %v1313, %v1311
      %v1446 = vpack.c.b16 %v1316, %v1314
      %v1447 = vpack.c.b16 %v1317, %v1315
      %v1448 = vpack.c.b16 %v1320, %v1318
      %v1449 = vpack.c.b16 %v1321, %v1319
      %v1450 = vpack.c.b16 %v1324, %v1322
      %v1451 = vpack.c.b16 %v1325, %v1323
      %v1452 = vpack.c.b16 %v1328, %v1326
      %v1453 = vpack.c.b16 %v1329, %v1327
      %v1454 = vpack.c.b16 %v1332, %v1330
      %v1455 = vpack.c.b16 %v1333, %v1331
      %v1456 = vpack.c.b16 %v1336, %v1334
      %v1457 = vpack.c.b16 %v1337, %v1335
      %v1458 = vpack.c.b16 %v1340, %v1338
      %v1459 = vpack.c.b16 %v1341, %v1339
      %v1460 = vpack.c.b16 %v1344, %v1342
      %v1461 = vpack.c.b16 %v1345, %v1343
      %v1462 = vpack.c.b16 %v1348, %v1346
      %v1463 = vpack.c.b16 %v1349, %v1347
      %v1464 = vpack.c.b16 %v1352, %v1350
      %v1465 = vpack.c.b16 %v1353, %v1351
      %1578 = vmatprep.subr.bf16.mxu0 %v1355
      %1579 = vmatpush1.bf16.msra.mxu0 %v1354
      %1580 = vmatprep.subr.bf16.mxu0 %v1357
      %1581 = vmatpush1.bf16.msra.mxu0 %v1356
      %1582 = vmatprep.subr.bf16.mxu0 %v1359
      %1583 = vmatpush1.bf16.msra.mxu0 %v1358
      %1584 = vmatprep.subr.bf16.mxu0 %v1361
      %1585 = vmatpush1.bf16.msra.mxu0 %v1360
      %1586 = vmatprep.subr.bf16.mxu0 %v1363
      %1587 = vmatpush1.bf16.msra.mxu0 %v1362
      %1588 = vmatprep.subr.bf16.mxu0 %v1365
      %1589 = vmatpush1.bf16.msra.mxu0 %v1364
      %1590 = vmatprep.subr.bf16.mxu0 %v1367
      %1591 = vmatpush1.bf16.msra.mxu0 %v1366
      %1592 = vmatprep.subr.bf16.mxu0 %v1369
      %1593 = vmatpush1.bf16.msra.mxu0 %v1368
      %1594 = vmatprep.subr.bf16.mxu0 %v1371
      %1595 = vmatpush1.bf16.msra.mxu0 %v1370
      %1596 = vmatprep.subr.bf16.mxu0 %v1373
      %1597 = vmatpush1.bf16.msra.mxu0 %v1372
      %1598 = vmatprep.subr.bf16.mxu0 %v1375
      %1599 = vmatpush1.bf16.msra.mxu0 %v1374
      %1600 = vmatprep.subr.bf16.mxu0 %v1377
      %1601 = vmatpush1.bf16.msra.mxu0 %v1376
      %1602 = vmatprep.subr.bf16.mxu0 %v1379
      %1603 = vmatpush1.bf16.msra.mxu0 %v1378
      %1604 = vmatprep.subr.bf16.mxu0 %v1381
      %1605 = vmatpush1.bf16.msra.mxu0 %v1380
      %1606 = vmatprep.subr.bf16.mxu0 %v1383
      %1607 = vmatpush1.bf16.msra.mxu0 %v1382
      %1608 = vmatprep.subr.bf16.mxu0 %v1385
      %1609 = vmatpush1.bf16.msra.mxu0 %v1384
      %1610 = vmatprep.mubr.bf16.mxu0 %v907
      %1611 = vmatmul.mubr.bf16.gmra.mrb[0].mxu0 %v906
      %v1612 = vpop.f32.mrb[0].mxu0
      %v1613 = vadd.f32 %v723, %v1612
      %v1614 = vpop.f32.mrb[0].mxu0
      %v1615 = vadd.f32 %v727, %v1614
      %v1616 = vpop.f32.mrb[0].mxu0
      %v1617 = vadd.f32 %v723, %v1616
      %v1618 = vpop.f32.mrb[0].mxu0
      %v1619 = vadd.f32 %v727, %v1618
      %1620 = vmatprep.mubr.bf16.mxu0 %v914
      %1621 = vmatmul.mubr.bf16.gmra.mrb[0].mxu0 %v913
      %v1622 = vpop.f32.mrb[0].mxu0
      %v1623 = vadd.f32 %v723, %v1622
      %v1624 = vpop.f32.mrb[0].mxu0
      %v1625 = vadd.f32 %v727, %v1624
      %v1626 = vpop.f32.mrb[0].mxu0
      %v1627 = vadd.f32 %v723, %v1626
      %v1628 = vpop.f32.mrb[0].mxu0
      %v1629 = vadd.f32 %v727, %v1628
      %1630 = vmatprep.mubr.bf16.mxu0 %v921
      %1631 = vmatmul.mubr.bf16.gmra.mrb[0].mxu0 %v920
      %v1632 = vpop.f32.mrb[0].mxu0
      %v1633 = vadd.f32 %v723, %v1632
      %v1634 = vpop.f32.mrb[0].mxu0
      %v1635 = vadd.f32 %v727, %v1634
      %v1636 = vpop.f32.mrb[0].mxu0
      %v1637 = vadd.f32 %v723, %v1636
      %v1638 = vpop.f32.mrb[0].mxu0
      %v1639 = vadd.f32 %v727, %v1638
      %1640 = vmatprep.mubr.bf16.mxu0 %v928
      %1641 = vmatmul.mubr.bf16.gmra.mrb[0].mxu0 %v927
      %v1642 = vpop.f32.mrb[0].mxu0
      %v1643 = vadd.f32 %v723, %v1642
      %v1644 = vpop.f32.mrb[0].mxu0
      %v1645 = vadd.f32 %v727, %v1644
      %v1646 = vpop.f32.mrb[0].mxu0
      %v1647 = vadd.f32 %v723, %v1646
      %v1648 = vpop.f32.mrb[0].mxu0
      %v1649 = vadd.f32 %v727, %v1648
      %1650 = vmatprep.mubr.bf16.mxu0 %v935
      %1651 = vmatmul.mubr.bf16.gmra.mrb[0].mxu0 %v934
      %v1652 = vpop.f32.mrb[0].mxu0
      %v1653 = vadd.f32 %v723, %v1652
      %v1654 = vpop.f32.mrb[0].mxu0
      %v1655 = vadd.f32 %v727, %v1654
      %v1656 = vpop.f32.mrb[0].mxu0
      %v1657 = vadd.f32 %v723, %v1656
      %v1658 = vpop.f32.mrb[0].mxu0
      %v1659 = vadd.f32 %v727, %v1658
      %1660 = vmatprep.mubr.bf16.mxu0 %v942
      %1661 = vmatmul.mubr.bf16.gmra.mrb[0].mxu0 %v941
      %v1662 = vpop.f32.mrb[0].mxu0
      %v1663 = vadd.f32 %v723, %v1662
      %v1664 = vpop.f32.mrb[0].mxu0
      %v1665 = vadd.f32 %v727, %v1664
      %v1666 = vpop.f32.mrb[0].mxu0
      %v1667 = vadd.f32 %v723, %v1666
      %v1668 = vpop.f32.mrb[0].mxu0
      %v1669 = vadd.f32 %v727, %v1668
      %1670 = vmatprep.mubr.bf16.mxu0 %v949
      %1671 = vmatmul.mubr.bf16.gmra.mrb[0].mxu0 %v948
      %v1672 = vpop.f32.mrb[0].mxu0
      %v1673 = vadd.f32 %v723, %v1672
      %v1674 = vpop.f32.mrb[0].mxu0
      %v1675 = vadd.f32 %v727, %v1674
      %v1676 = vpop.f32.mrb[0].mxu0
      %v1677 = vadd.f32 %v723, %v1676
      %v1678 = vpop.f32.mrb[0].mxu0
      %v1679 = vadd.f32 %v727, %v1678
      %1680 = vmatprep.mubr.bf16.mxu0 %v956
      %1681 = vmatmul.mubr.bf16.gmra.mrb[0].mxu0 %v955
      %v1682 = vpop.f32.mrb[0].mxu0
      %v1683 = vadd.f32 %v723, %v1682
      %v1684 = vpop.f32.mrb[0].mxu0
      %v1685 = vadd.f32 %v727, %v1684
      %v1686 = vpop.f32.mrb[0].mxu0
      %v1687 = vadd.f32 %v723, %v1686
      %v1688 = vpop.f32.mrb[0].mxu0
      %v1689 = vadd.f32 %v727, %v1688
      %1690 = vdwg.mxu0
      %1691 = vmatprep.subr.bf16.mxu0 %v1387
      %1692 = vmatpush1.bf16.msra.mxu0 %v1386
      %1693 = vmatprep.subr.bf16.mxu0 %v1389
      %1694 = vmatpush1.bf16.msra.mxu0 %v1388
      %1695 = vmatprep.subr.bf16.mxu0 %v1391
      %1696 = vmatpush1.bf16.msra.mxu0 %v1390
      %1697 = vmatprep.subr.bf16.mxu0 %v1393
      %1698 = vmatpush1.bf16.msra.mxu0 %v1392
      %1699 = vmatprep.subr.bf16.mxu0 %v1395
      %1700 = vmatpush1.bf16.msra.mxu0 %v1394
      %1701 = vmatprep.subr.bf16.mxu0 %v1397
      %1702 = vmatpush1.bf16.msra.mxu0 %v1396
      %1703 = vmatprep.subr.bf16.mxu0 %v1399
      %1704 = vmatpush1.bf16.msra.mxu0 %v1398
      %1705 = vmatprep.subr.bf16.mxu0 %v1401
      %1706 = vmatpush1.bf16.msra.mxu0 %v1400
      %1707 = vmatprep.subr.bf16.mxu0 %v1403
      %1708 = vmatpush1.bf16.msra.mxu0 %v1402
      %1709 = vmatprep.subr.bf16.mxu0 %v1405
      %1710 = vmatpush1.bf16.msra.mxu0 %v1404
      %1711 = vmatprep.subr.bf16.mxu0 %v1407
      %1712 = vmatpush1.bf16.msra.mxu0 %v1406
      %1713 = vmatprep.subr.bf16.mxu0 %v1409
      %1714 = vmatpush1.bf16.msra.mxu0 %v1408
      %1715 = vmatprep.subr.bf16.mxu0 %v1411
      %1716 = vmatpush1.bf16.msra.mxu0 %v1410
      %1717 = vmatprep.subr.bf16.mxu0 %v1413
      %1718 = vmatpush1.bf16.msra.mxu0 %v1412
      %1719 = vmatprep.subr.bf16.mxu0 %v1415
      %1720 = vmatpush1.bf16.msra.mxu0 %v1414
      %1721 = vmatprep.subr.bf16.mxu0 %v1417
      %1722 = vmatpush1.bf16.msra.mxu0 %v1416
      %1723 = vmatprep.mubr.bf16.mxu0 %v909
      %1724 = vmatmul.mubr.bf16.gmra.mrb[0].mxu0 %v908
      %v1725 = vpop.f32.mrb[0].mxu0
      %v1726 = vadd.f32 %v1613, %v1725
      %v1727 = vpop.f32.mrb[0].mxu0
      %v1728 = vadd.f32 %v1615, %v1727
      %v1729 = vpop.f32.mrb[0].mxu0
      %v1730 = vadd.f32 %v1617, %v1729
      %v1731 = vpop.f32.mrb[0].mxu0
      %v1732 = vadd.f32 %v1619, %v1731
      %1733 = vmatprep.mubr.bf16.mxu0 %v916
      %1734 = vmatmul.mubr.bf16.gmra.mrb[0].mxu0 %v915
      %v1735 = vpop.f32.mrb[0].mxu0
      %v1736 = vadd.f32 %v1623, %v1735
      %v1737 = vpop.f32.mrb[0].mxu0
      %v1738 = vadd.f32 %v1625, %v1737
      %v1739 = vpop.f32.mrb[0].mxu0
      %v1740 = vadd.f32 %v1627, %v1739
      %v1741 = vpop.f32.mrb[0].mxu0
      %v1742 = vadd.f32 %v1629, %v1741
      %1743 = vmatprep.mubr.bf16.mxu0 %v923
      %1744 = vmatmul.mubr.bf16.gmra.mrb[0].mxu0 %v922
      %v1745 = vpop.f32.mrb[0].mxu0
      %v1746 = vadd.f32 %v1633, %v1745
      %v1747 = vpop.f32.mrb[0].mxu0
      %v1748 = vadd.f32 %v1635, %v1747
      %v1749 = vpop.f32.mrb[0].mxu0
      %v1750 = vadd.f32 %v1637, %v1749
      %v1751 = vpop.f32.mrb[0].mxu0
      %v1752 = vadd.f32 %v1639, %v1751
      %1753 = vmatprep.mubr.bf16.mxu0 %v930
      %1754 = vmatmul.mubr.bf16.gmra.mrb[0].mxu0 %v929
      %v1755 = vpop.f32.mrb[0].mxu0
      %v1756 = vadd.f32 %v1643, %v1755
      %v1757 = vpop.f32.mrb[0].mxu0
      %v1758 = vadd.f32 %v1645, %v1757
      %v1759 = vpop.f32.mrb[0].mxu0
      %v1760 = vadd.f32 %v1647, %v1759
      %v1761 = vpop.f32.mrb[0].mxu0
      %v1762 = vadd.f32 %v1649, %v1761
      %1763 = vmatprep.mubr.bf16.mxu0 %v937
      %1764 = vmatmul.mubr.bf16.gmra.mrb[0].mxu0 %v936
      %v1765 = vpop.f32.mrb[0].mxu0
      %v1766 = vadd.f32 %v1653, %v1765
      %v1767 = vpop.f32.mrb[0].mxu0
      %v1768 = vadd.f32 %v1655, %v1767
      %v1769 = vpop.f32.mrb[0].mxu0
      %v1770 = vadd.f32 %v1657, %v1769
      %v1771 = vpop.f32.mrb[0].mxu0
      %v1772 = vadd.f32 %v1659, %v1771
      %1773 = vmatprep.mubr.bf16.mxu0 %v944
      %1774 = vmatmul.mubr.bf16.gmra.mrb[0].mxu0 %v943
      %v1775 = vpop.f32.mrb[0].mxu0
      %v1776 = vadd.f32 %v1663, %v1775
      %v1777 = vpop.f32.mrb[0].mxu0
      %v1778 = vadd.f32 %v1665, %v1777
      %v1779 = vpop.f32.mrb[0].mxu0
      %v1780 = vadd.f32 %v1667, %v1779
      %v1781 = vpop.f32.mrb[0].mxu0
      %v1782 = vadd.f32 %v1669, %v1781
      %1783 = vmatprep.mubr.bf16.mxu0 %v951
      %1784 = vmatmul.mubr.bf16.gmra.mrb[0].mxu0 %v950
      %v1785 = vpop.f32.mrb[0].mxu0
      %v1786 = vadd.f32 %v1673, %v1785
      %v1787 = vpop.f32.mrb[0].mxu0
      %v1788 = vadd.f32 %v1675, %v1787
      %v1789 = vpop.f32.mrb[0].mxu0
      %v1790 = vadd.f32 %v1677, %v1789
      %v1791 = vpop.f32.mrb[0].mxu0
      %v1792 = vadd.f32 %v1679, %v1791
      %1793 = vmatprep.mubr.bf16.mxu0 %v958
      %1794 = vmatmul.mubr.bf16.gmra.mrb[0].mxu0 %v957
      %v1795 = vpop.f32.mrb[0].mxu0
      %v1796 = vadd.f32 %v1683, %v1795
      %v1797 = vpop.f32.mrb[0].mxu0
      %v1798 = vadd.f32 %v1685, %v1797
      %v1799 = vpop.f32.mrb[0].mxu0
      %v1800 = vadd.f32 %v1687, %v1799
      %v1801 = vpop.f32.mrb[0].mxu0
      %v1802 = vadd.f32 %v1689, %v1801
      %1803 = vdwg.mxu0
      %1804 = vmatprep.subr.bf16.mxu0 %v1419
      %1805 = vmatpush1.bf16.msra.mxu0 %v1418
      %1806 = vmatprep.subr.bf16.mxu0 %v1421
      %1807 = vmatpush1.bf16.msra.mxu0 %v1420
      %1808 = vmatprep.subr.bf16.mxu0 %v1423
      %1809 = vmatpush1.bf16.msra.mxu0 %v1422
      %1810 = vmatprep.subr.bf16.mxu0 %v1425
      %1811 = vmatpush1.bf16.msra.mxu0 %v1424
      %1812 = vmatprep.subr.bf16.mxu0 %v1427
      %1813 = vmatpush1.bf16.msra.mxu0 %v1426
      %1814 = vmatprep.subr.bf16.mxu0 %v1429
      %1815 = vmatpush1.bf16.msra.mxu0 %v1428
      %1816 = vmatprep.subr.bf16.mxu0 %v1431
      %1817 = vmatpush1.bf16.msra.mxu0 %v1430
      %1818 = vmatprep.subr.bf16.mxu0 %v1433
      %1819 = vmatpush1.bf16.msra.mxu0 %v1432
      %1820 = vmatprep.subr.bf16.mxu0 %v1435
      %1821 = vmatpush1.bf16.msra.mxu0 %v1434
      %1822 = vmatprep.subr.bf16.mxu0 %v1437
      %1823 = vmatpush1.bf16.msra.mxu0 %v1436
      %1824 = vmatprep.subr.bf16.mxu0 %v1439
      %1825 = vmatpush1.bf16.msra.mxu0 %v1438
      %1826 = vmatprep.subr.bf16.mxu0 %v1441
      %1827 = vmatpush1.bf16.msra.mxu0 %v1440
      %1828 = vmatprep.subr.bf16.mxu0 %v1443
      %1829 = vmatpush1.bf16.msra.mxu0 %v1442
      %1830 = vmatprep.subr.bf16.mxu0 %v1445
      %1831 = vmatpush1.bf16.msra.mxu0 %v1444
      %1832 = vmatprep.subr.bf16.mxu0 %v1447
      %1833 = vmatpush1.bf16.msra.mxu0 %v1446
      %1834 = vmatprep.subr.bf16.mxu0 %v1449
      %1835 = vmatpush1.bf16.msra.mxu0 %v1448
      %1836 = vmatprep.mubr.bf16.mxu0 %v911
      %1837 = vmatmul.mubr.bf16.gmra.mrb[0].mxu0 %v910
      %v1838 = vpop.f32.mrb[0].mxu0
      %v1839 = vadd.f32 %v1726, %v1838
      %v1840 = vpop.f32.mrb[0].mxu0
      %v1841 = vadd.f32 %v1728, %v1840
      %v1842 = vpop.f32.mrb[0].mxu0
      %v1843 = vadd.f32 %v1730, %v1842
      %v1844 = vpop.f32.mrb[0].mxu0
      %v1845 = vadd.f32 %v1732, %v1844
      %1846 = vmatprep.mubr.bf16.mxu0 %v918
      %1847 = vmatmul.mubr.bf16.gmra.mrb[0].mxu0 %v917
      %v1848 = vpop.f32.mrb[0].mxu0
      %v1849 = vadd.f32 %v1736, %v1848
      %v1850 = vpop.f32.mrb[0].mxu0
      %v1851 = vadd.f32 %v1738, %v1850
      %v1852 = vpop.f32.mrb[0].mxu0
      %v1853 = vadd.f32 %v1740, %v1852
      %v1854 = vpop.f32.mrb[0].mxu0
      %v1855 = vadd.f32 %v1742, %v1854
      %1856 = vmatprep.mubr.bf16.mxu0 %v925
      %1857 = vmatmul.mubr.bf16.gmra.mrb[0].mxu0 %v924
      %v1858 = vpop.f32.mrb[0].mxu0
      %v1859 = vadd.f32 %v1746, %v1858
      %v1860 = vpop.f32.mrb[0].mxu0
      %v1861 = vadd.f32 %v1748, %v1860
      %v1862 = vpop.f32.mrb[0].mxu0
      %v1863 = vadd.f32 %v1750, %v1862
      %v1864 = vpop.f32.mrb[0].mxu0
      %v1865 = vadd.f32 %v1752, %v1864
      %1866 = vmatprep.mubr.bf16.mxu0 %v932
      %1867 = vmatmul.mubr.bf16.gmra.mrb[0].mxu0 %v931
      %v1868 = vpop.f32.mrb[0].mxu0
      %v1869 = vadd.f32 %v1756, %v1868
      %v1870 = vpop.f32.mrb[0].mxu0
      %v1871 = vadd.f32 %v1758, %v1870
      %v1872 = vpop.f32.mrb[0].mxu0
      %v1873 = vadd.f32 %v1760, %v1872
      %v1874 = vpop.f32.mrb[0].mxu0
      %v1875 = vadd.f32 %v1762, %v1874
      %1876 = vmatprep.mubr.bf16.mxu0 %v939
      %1877 = vmatmul.mubr.bf16.gmra.mrb[0].mxu0 %v938
      %v1878 = vpop.f32.mrb[0].mxu0
      %v1879 = vadd.f32 %v1766, %v1878
      %v1880 = vpop.f32.mrb[0].mxu0
      %v1881 = vadd.f32 %v1768, %v1880
      %v1882 = vpop.f32.mrb[0].mxu0
      %v1883 = vadd.f32 %v1770, %v1882
      %v1884 = vpop.f32.mrb[0].mxu0
      %v1885 = vadd.f32 %v1772, %v1884
      %1886 = vmatprep.mubr.bf16.mxu0 %v946
      %1887 = vmatmul.mubr.bf16.gmra.mrb[0].mxu0 %v945
      %v1888 = vpop.f32.mrb[0].mxu0
      %v1889 = vadd.f32 %v1776, %v1888
      %v1890 = vpop.f32.mrb[0].mxu0
      %v1891 = vadd.f32 %v1778, %v1890
      %v1892 = vpop.f32.mrb[0].mxu0
      %v1893 = vadd.f32 %v1780, %v1892
      %v1894 = vpop.f32.mrb[0].mxu0
      %v1895 = vadd.f32 %v1782, %v1894
      %1896 = vmatprep.mubr.bf16.mxu0 %v953
      %1897 = vmatmul.mubr.bf16.gmra.mrb[0].mxu0 %v952
      %v1898 = vpop.f32.mrb[0].mxu0
      %v1899 = vadd.f32 %v1786, %v1898
      %v1900 = vpop.f32.mrb[0].mxu0
      %v1901 = vadd.f32 %v1788, %v1900
      %v1902 = vpop.f32.mrb[0].mxu0
      %v1903 = vadd.f32 %v1790, %v1902
      %v1904 = vpop.f32.mrb[0].mxu0
      %v1905 = vadd.f32 %v1792, %v1904
      %1906 = vmatprep.mubr.bf16.mxu0 %v960
      %1907 = vmatmul.mubr.bf16.gmra.mrb[0].mxu0 %v959
      %v1908 = vpop.f32.mrb[0].mxu0
      %v1909 = vadd.f32 %v1796, %v1908
      %v1910 = vpop.f32.mrb[0].mxu0
      %v1911 = vadd.f32 %v1798, %v1910
      %v1912 = vpop.f32.mrb[0].mxu0
      %v1913 = vadd.f32 %v1800, %v1912
      %v1914 = vpop.f32.mrb[0].mxu0
      %v1915 = vadd.f32 %v1802, %v1914
      %1916 = vdwg.mxu0
      %1917 = vmatprep.subr.bf16.mxu0 %v1451
      %1918 = vmatpush1.bf16.msra.mxu0 %v1450
      %1919 = vmatprep.subr.bf16.mxu0 %v1453
      %1920 = vmatpush1.bf16.msra.mxu0 %v1452
      %1921 = vmatprep.subr.bf16.mxu0 %v1455
      %1922 = vmatpush1.bf16.msra.mxu0 %v1454
      %1923 = vmatprep.subr.bf16.mxu0 %v1457
      %1924 = vmatpush1.bf16.msra.mxu0 %v1456
      %1925 = vmatprep.subr.bf16.mxu0 %v1459
      %1926 = vmatpush1.bf16.msra.mxu0 %v1458
      %1927 = vmatprep.subr.bf16.mxu0 %v1461
      %1928 = vmatpush1.bf16.msra.mxu0 %v1460
      %1929 = vmatprep.subr.bf16.mxu0 %v1463
      %1930 = vmatpush1.bf16.msra.mxu0 %v1462
      %1931 = vmatprep.subr.bf16.mxu0 %v1465
      %1932 = vmatpush1.bf16.msra.mxu0 %v1464
      %1933 = vmatprep.subr.bf16.mxu0 0
      %1934 = vmatpush1.bf16.msra.mxu0 0
      %1935 = vmatprep.subr.bf16.mxu0 0
      %1936 = vmatpush1.bf16.msra.mxu0 0
      %1937 = vmatprep.subr.bf16.mxu0 0
      %1938 = vmatpush1.bf16.msra.mxu0 0
      %1939 = vmatprep.subr.bf16.mxu0 0
      %1940 = vmatpush1.bf16.msra.mxu0 0
      %1941 = vmatprep.subr.bf16.mxu0 0
      %1942 = vmatpush1.bf16.msra.mxu0 0
      %1943 = vmatprep.subr.bf16.mxu0 0
      %1944 = vmatpush1.bf16.msra.mxu0 0
      %1945 = vmatprep.subr.bf16.mxu0 0
      %1946 = vmatpush1.bf16.msra.mxu0 0
      %1947 = vmatprep.subr.bf16.mxu0 0
      %1948 = vmatpush1.bf16.msra.mxu0 0
      %1949 = vmatprep.mubr.bf16.mxu0 0
      %1950 = vmatmul.mubr.bf16.gmra.mrb[0].mxu0 %v912
      %v1951 = vpop.f32.mrb[0].mxu0
      %v1952 = vadd.f32 %v1839, %v1951
      %v1953 = vpop.f32.mrb[0].mxu0
      %v1954 = vadd.f32 %v1841, %v1953
      %v1955 = vpop.f32.mrb[0].mxu0
      %v1956 = vadd.f32 %v1843, %v1955
      %v1957 = vpop.f32.mrb[0].mxu0
      %v1958 = vadd.f32 %v1845, %v1957
      %1959 = vmatprep.mubr.bf16.mxu0 0
      %1960 = vmatmul.mubr.bf16.gmra.mrb[0].mxu0 %v919
      %v1961 = vpop.f32.mrb[0].mxu0
      %v1962 = vadd.f32 %v1849, %v1961
      %v1963 = vpop.f32.mrb[0].mxu0
      %v1964 = vadd.f32 %v1851, %v1963
      %v1965 = vpop.f32.mrb[0].mxu0
      %v1966 = vadd.f32 %v1853, %v1965
      %v1967 = vpop.f32.mrb[0].mxu0
      %v1968 = vadd.f32 %v1855, %v1967
      %1969 = vmatprep.mubr.bf16.mxu0 0
      %1970 = vmatmul.mubr.bf16.gmra.mrb[0].mxu0 %v926
      %v1971 = vpop.f32.mrb[0].mxu0
      %v1972 = vadd.f32 %v1859, %v1971
      %v1973 = vpop.f32.mrb[0].mxu0
      %v1974 = vadd.f32 %v1861, %v1973
      %v1975 = vpop.f32.mrb[0].mxu0
      %v1976 = vadd.f32 %v1863, %v1975
      %v1977 = vpop.f32.mrb[0].mxu0
      %v1978 = vadd.f32 %v1865, %v1977
      %1979 = vmatprep.mubr.bf16.mxu0 0
      %1980 = vmatmul.mubr.bf16.gmra.mrb[0].mxu0 %v933
      %v1981 = vpop.f32.mrb[0].mxu0
      %v1982 = vadd.f32 %v1869, %v1981
      %v1983 = vpop.f32.mrb[0].mxu0
      %v1984 = vadd.f32 %v1871, %v1983
      %v1985 = vpop.f32.mrb[0].mxu0
      %v1986 = vadd.f32 %v1873, %v1985
      %v1987 = vpop.f32.mrb[0].mxu0
      %v1988 = vadd.f32 %v1875, %v1987
      %1989 = vmatprep.mubr.bf16.mxu0 0
      %1990 = vmatmul.mubr.bf16.gmra.mrb[0].mxu0 %v940
      %v1991 = vpop.f32.mrb[0].mxu0
      %v1992 = vadd.f32 %v1879, %v1991
      %v1993 = vpop.f32.mrb[0].mxu0
      %v1994 = vadd.f32 %v1881, %v1993
      %v1995 = vpop.f32.mrb[0].mxu0
      %v1996 = vadd.f32 %v1883, %v1995
      %v1997 = vpop.f32.mrb[0].mxu0
      %v1998 = vadd.f32 %v1885, %v1997
      %1999 = vmatprep.mubr.bf16.mxu0 0
      %2000 = vmatmul.mubr.bf16.gmra.mrb[0].mxu0 %v947
      %v2001 = vpop.f32.mrb[0].mxu0
      %v2002 = vadd.f32 %v1889, %v2001
      %v2003 = vpop.f32.mrb[0].mxu0
      %v2004 = vadd.f32 %v1891, %v2003
      %v2005 = vpop.f32.mrb[0].mxu0
      %v2006 = vadd.f32 %v1893, %v2005
      %v2007 = vpop.f32.mrb[0].mxu0
      %v2008 = vadd.f32 %v1895, %v2007
      %2009 = vmatprep.mubr.bf16.mxu0 0
      %2010 = vmatmul.mubr.bf16.gmra.mrb[0].mxu0 %v954
      %v2011 = vpop.f32.mrb[0].mxu0
      %v2012 = vadd.f32 %v1899, %v2011
      %v2013 = vpop.f32.mrb[0].mxu0
      %v2014 = vadd.f32 %v1901, %v2013
      %v2015 = vpop.f32.mrb[0].mxu0
      %v2016 = vadd.f32 %v1903, %v2015
      %v2017 = vpop.f32.mrb[0].mxu0
      %v2018 = vadd.f32 %v1905, %v2017
      %2019 = vmatprep.mubr.bf16.mxu0 0
      %2020 = vmatmul.mubr.bf16.gmra.mrb[0].mxu0 %v961
      %v2021 = vpop.f32.mrb[0].mxu0
      %v2022 = vadd.f32 %v1909, %v2021
      %v2023 = vpop.f32.mrb[0].mxu0
      %v2024 = vadd.f32 %v1911, %v2023
      %v2025 = vpop.f32.mrb[0].mxu0
      %v2026 = vadd.f32 %v1913, %v2025
      %v2027 = vpop.f32.mrb[0].mxu0
      %v2028 = vadd.f32 %v1915, %v2027
      %2029 = vdwg.mxu0
      %v2030 = vmax.f32 %v1952, 0.0
      %v2031 = vmax.f32 %v1954, 0.0
      %v2032 = vmax.f32 %v1956, 0.0
      %v2033 = vmax.f32 %v1958, 0.0
      %v2034 = vmax.f32 %v1962, 0.0
      %v2035 = vmax.f32 %v1964, 0.0
      %v2036 = vmax.f32 %v1966, 0.0
      %v2037 = vmax.f32 %v1968, 0.0
      %v2038 = vmax.f32 %v1972, 0.0
      %v2039 = vmax.f32 %v1974, 0.0
      %v2040 = vmax.f32 %v1976, 0.0
      %v2041 = vmax.f32 %v1978, 0.0
      %v2042 = vmax.f32 %v1982, 0.0
      %v2043 = vmax.f32 %v1984, 0.0
      %v2044 = vmax.f32 %v1986, 0.0
      %v2045 = vmax.f32 %v1988, 0.0
      %v2046 = vmax.f32 %v1992, 0.0
      %v2047 = vmax.f32 %v1994, 0.0
      %v2048 = vmax.f32 %v1996, 0.0
      %v2049 = vmax.f32 %v1998, 0.0
      %v2050 = vmax.f32 %v2002, 0.0
      %v2051 = vmax.f32 %v2004, 0.0
      %v2052 = vmax.f32 %v2006, 0.0
      %v2053 = vmax.f32 %v2008, 0.0
      %v2054 = vmax.f32 %v2012, 0.0
      %v2055 = vmax.f32 %v2014, 0.0
      %v2056 = vmax.f32 %v2016, 0.0
      %v2057 = vmax.f32 %v2018, 0.0
      %v2058 = vmax.f32 %v2022, 0.0
      %v2059 = vmax.f32 %v2024, 0.0
      %v2060 = vmax.f32 %v2026, 0.0
      %v2061 = vmax.f32 %v2028, 0.0
      %v2062 = vpack.c.bf16 %v2032, %v2030
      %v2063 = vpack.c.bf16 %v2033, %v2031
      %v2064 = vpack.c.bf16 %v2036, %v2034
      %v2065 = vpack.c.bf16 %v2037, %v2035
      %v2066 = vpack.c.bf16 %v2040, %v2038
      %v2067 = vpack.c.bf16 %v2041, %v2039
      %v2068 = vpack.c.bf16 %v2044, %v2042
      %v2069 = vpack.c.bf16 %v2045, %v2043
      %v2070 = vpack.c.bf16 %v2048, %v2046
      %v2071 = vpack.c.bf16 %v2049, %v2047
      %v2072 = vpack.c.bf16 %v2052, %v2050
      %v2073 = vpack.c.bf16 %v2053, %v2051
      %v2074 = vpack.c.bf16 %v2056, %v2054
      %v2075 = vpack.c.bf16 %v2057, %v2055
      %v2076 = vpack.c.bf16 %v2060, %v2058
      %v2077 = vpack.c.bf16 %v2061, %v2059
      %v2078 = vld [vmem:[%s4] sm:$0xf]
      %v2079 = vld [vmem:[%s4 + $0x4] sm:$0xf]
      %v2080 = vld [vmem:[%s4 + $0x8] sm:$0xf]
      %v2081 = vld [vmem:[%s4 + $0xc] sm:$0xf]
      %v2082 = vld [vmem:[%s4 + $0x10] sm:$0xf]
      %v2083 = vld [vmem:[%s4 + $0x14] sm:$0xf]
      %v2084 = vld [vmem:[%s4 + $0x18] sm:$0xf]
      %v2085 = vld [vmem:[%s4 + $0x1c] sm:$0xf]
      %v2086 = vld [vmem:[%s4 + $0x20] sm:$0xf]
      %v2087 = vld [vmem:[%s4 + $0x24] sm:$0xf]
      %v2088 = vld [vmem:[%s4 + $0x28] sm:$0xf]
      %v2089 = vld [vmem:[%s4 + $0x2c] sm:$0xf]
      %v2090 = vld [vmem:[%s4 + $0x30] sm:$0xf]
      %v2091 = vld [vmem:[%s4 + $0x34] sm:$0xf]
      %v2092 = vld [vmem:[%s4 + $0x38] sm:$0xf]
      %v2093 = vld [vmem:[%s4 + $0x3c] sm:$0xf]
      %v2094 = vld [vmem:[%s4 + $0x40] sm:$0xf]
      %v2095 = vld [vmem:[%s4 + $0x44] sm:$0xf]
      %v2096 = vld [vmem:[%s4 + $0x48] sm:$0xf]
      %v2097 = vld [vmem:[%s4 + $0x4c] sm:$0xf]
      %v2098 = vld [vmem:[%s4 + $0x50] sm:$0xf]
      %v2099 = vld [vmem:[%s4 + $0x54] sm:$0xf]
      %v2100 = vld [vmem:[%s4 + $0x58] sm:$0xf]
      %v2101 = vld [vmem:[%s4 + $0x5c] sm:$0xf]
      %v2102 = vld [vmem:[%s4 + $0x60] sm:$0xf]
      %v2103 = vld [vmem:[%s4 + $0x64] sm:$0xf]
      %v2104 = vld [vmem:[%s4 + $0x68] sm:$0xf]
      %v2105 = vld [vmem:[%s4 + $0x6c] sm:$0xf]
      %v2106 = vld [vmem:[%s4 + $0x70] sm:$0xf]
      %v2107 = vld [vmem:[%s4 + $0x74] sm:$0xf]
      %v2108 = vld [vmem:[%s4 + $0x78] sm:$0xf]
      %v2109 = vld [vmem:[%s4 + $0x7c] sm:$0xf]
      %v2110 = vld [vmem:[%s5] sm:$0x1]
      %v2112 = vlaneseq
      %v2113 = vshrl.u32 %v2112, 7
      %v2114 = vsub.s32 0, %v2113
      %v2115 = vrot.slane %v2110, %v2114
      %v2149 = vunpack.c.l.b16 %v2078
      %v2150 = vunpack.c.l.b16 %v2079
      %v2151 = vunpack.c.l.b16 %v2080
      %v2152 = vunpack.c.l.b16 %v2081
      %v2153 = vunpack.c.l.b16 %v2082
      %v2154 = vunpack.c.l.b16 %v2083
      %v2155 = vunpack.c.l.b16 %v2084
      %v2156 = vunpack.c.l.b16 %v2085
      %v2157 = vunpack.c.l.b16 %v2086
      %v2158 = vunpack.c.l.b16 %v2087
      %v2159 = vunpack.c.l.b16 %v2088
      %v2160 = vunpack.c.l.b16 %v2089
      %v2161 = vunpack.c.l.b16 %v2090
      %v2162 = vunpack.c.l.b16 %v2091
      %v2163 = vunpack.c.l.b16 %v2092
      %v2164 = vunpack.c.l.b16 %v2093
      %v2165 = vunpack.c.l.b16 %v2094
      %v2166 = vunpack.c.l.b16 %v2095
      %v2167 = vunpack.c.l.b16 %v2096
      %v2168 = vunpack.c.l.b16 %v2097
      %v2169 = vunpack.c.l.b16 %v2098
      %v2170 = vunpack.c.l.b16 %v2099
      %v2171 = vunpack.c.l.b16 %v2100
      %v2172 = vunpack.c.l.b16 %v2101
      %v2173 = vunpack.c.l.b16 %v2102
      %v2174 = vunpack.c.l.b16 %v2103
      %v2175 = vunpack.c.l.b16 %v2104
      %v2176 = vunpack.c.l.b16 %v2105
      %v2177 = vunpack.c.l.b16 %v2106
      %v2178 = vunpack.c.l.b16 %v2107
      %v2179 = vunpack.c.l.b16 %v2108
      %v2180 = vunpack.c.l.b16 %v2109
      %v2181 = vpack.c.b16 %v2150, %v2149
      %v2182 = vpack.c.b16 %v2152, %v2151
      %v2183 = vpack.c.b16 %v2154, %v2153
      %v2184 = vpack.c.b16 %v2156, %v2155
      %v2185 = vpack.c.b16 %v2158, %v2157
      %v2186 = vpack.c.b16 %v2160, %v2159
      %v2187 = vpack.c.b16 %v2162, %v2161
      %v2188 = vpack.c.b16 %v2164, %v2163
      %v2189 = vpack.c.b16 %v2166, %v2165
      %v2190 = vpack.c.b16 %v2168, %v2167
      %v2191 = vpack.c.b16 %v2170, %v2169
      %v2192 = vpack.c.b16 %v2172, %v2171
      %v2193 = vpack.c.b16 %v2174, %v2173
      %v2194 = vpack.c.b16 %v2176, %v2175
      %v2195 = vpack.c.b16 %v2178, %v2177
      %v2196 = vpack.c.b16 %v2180, %v2179
      %2213 = vmatprep.subr.bf16.mxu0 0
      %2214 = vmatpush1.bf16.msra.mxu0 %v2181
      %2215 = vmatprep.subr.bf16.mxu0 0
      %2216 = vmatpush1.bf16.msra.mxu0 %v2182
      %2217 = vmatprep.subr.bf16.mxu0 0
      %2218 = vmatpush1.bf16.msra.mxu0 %v2183
      %2219 = vmatprep.subr.bf16.mxu0 0
      %2220 = vmatpush1.bf16.msra.mxu0 %v2184
      %2221 = vmatprep.subr.bf16.mxu0 0
      %2222 = vmatpush1.bf16.msra.mxu0 %v2185
      %2223 = vmatprep.subr.bf16.mxu0 0
      %2224 = vmatpush1.bf16.msra.mxu0 %v2186
      %2225 = vmatprep.subr.bf16.mxu0 0
      %2226 = vmatpush1.bf16.msra.mxu0 %v2187
      %2227 = vmatprep.subr.bf16.mxu0 0
      %2228 = vmatpush1.bf16.msra.mxu0 %v2188
      %2229 = vmatprep.subr.bf16.mxu0 0
      %2230 = vmatpush1.bf16.msra.mxu0 %v2189
      %2231 = vmatprep.subr.bf16.mxu0 0
      %2232 = vmatpush1.bf16.msra.mxu0 %v2190
      %2233 = vmatprep.subr.bf16.mxu0 0
      %2234 = vmatpush1.bf16.msra.mxu0 %v2191
      %2235 = vmatprep.subr.bf16.mxu0 0
      %2236 = vmatpush1.bf16.msra.mxu0 %v2192
      %2237 = vmatprep.subr.bf16.mxu0 0
      %2238 = vmatpush1.bf16.msra.mxu0 %v2193
      %2239 = vmatprep.subr.bf16.mxu0 0
      %2240 = vmatpush1.bf16.msra.mxu0 %v2194
      %2241 = vmatprep.subr.bf16.mxu0 0
      %2242 = vmatpush1.bf16.msra.mxu0 %v2195
      %2243 = vmatprep.subr.bf16.mxu0 0
      %2244 = vmatpush1.bf16.msra.mxu0 %v2196
      %2245 = vmatprep.mubr.bf16.mxu0 %v2063
      %2246 = vmatmul.mubr.bf16.gmra.mrb[0].mxu0 %v2062
      %v2247 = vpop.f32.mrb[0].mxu0
      %v2248 = vadd.f32 %v2115, %v2247
      %v2249 = vpop.f32.mrb[0].mxu0
      %v2250 = vpop.f32.mrb[0].mxu0
      %v2251 = vadd.f32 %v2115, %v2250
      %v2252 = vpop.f32.mrb[0].mxu0
      %2253 = vmatprep.mubr.bf16.mxu0 %v2065
      %2254 = vmatmul.mubr.bf16.gmra.mrb[0].mxu0 %v2064
      %v2255 = vpop.f32.mrb[0].mxu0
      %v2256 = vadd.f32 %v2115, %v2255
      %v2257 = vpop.f32.mrb[0].mxu0
      %v2258 = vpop.f32.mrb[0].mxu0
      %v2259 = vadd.f32 %v2115, %v2258
      %v2260 = vpop.f32.mrb[0].mxu0
      %2261 = vmatprep.mubr.bf16.mxu0 %v2067
      %2262 = vmatmul.mubr.bf16.gmra.mrb[0].mxu0 %v2066
      %v2263 = vpop.f32.mrb[0].mxu0
      %v2264 = vadd.f32 %v2115, %v2263
      %v2265 = vpop.f32.mrb[0].mxu0
      %v2266 = vpop.f32.mrb[0].mxu0
      %v2267 = vadd.f32 %v2115, %v2266
      %v2268 = vpop.f32.mrb[0].mxu0
      %2269 = vmatprep.mubr.bf16.mxu0 %v2069
      %2270 = vmatmul.mubr.bf16.gmra.mrb[0].mxu0 %v2068
      %v2271 = vpop.f32.mrb[0].mxu0
      %v2272 = vadd.f32 %v2115, %v2271
      %v2273 = vpop.f32.mrb[0].mxu0
      %v2274 = vpop.f32.mrb[0].mxu0
      %v2275 = vadd.f32 %v2115, %v2274
      %v2276 = vpop.f32.mrb[0].mxu0
      %2277 = vmatprep.mubr.bf16.mxu0 %v2071
      %2278 = vmatmul.mubr.bf16.gmra.mrb[0].mxu0 %v2070
      %v2279 = vpop.f32.mrb[0].mxu0
      %v2280 = vadd.f32 %v2115, %v2279
      %v2281 = vpop.f32.mrb[0].mxu0
      %v2282 = vpop.f32.mrb[0].mxu0
      %v2283 = vadd.f32 %v2115, %v2282
      %v2284 = vpop.f32.mrb[0].mxu0
      %2285 = vmatprep.mubr.bf16.mxu0 %v2073
      %2286 = vmatmul.mubr.bf16.gmra.mrb[0].mxu0 %v2072
      %v2287 = vpop.f32.mrb[0].mxu0
      %v2288 = vadd.f32 %v2115, %v2287
      %v2289 = vpop.f32.mrb[0].mxu0
      %v2290 = vpop.f32.mrb[0].mxu0
      %v2291 = vadd.f32 %v2115, %v2290
      %v2292 = vpop.f32.mrb[0].mxu0
      %2293 = vmatprep.mubr.bf16.mxu0 %v2075
      %2294 = vmatmul.mubr.bf16.gmra.mrb[0].mxu0 %v2074
      %v2295 = vpop.f32.mrb[0].mxu0
      %v2296 = vadd.f32 %v2115, %v2295
      %v2297 = vpop.f32.mrb[0].mxu0
      %v2298 = vpop.f32.mrb[0].mxu0
      %v2299 = vadd.f32 %v2115, %v2298
      %v2300 = vpop.f32.mrb[0].mxu0
      %2301 = vmatprep.mubr.bf16.mxu0 %v2077
      %2302 = vmatmul.mubr.bf16.gmra.mrb[0].mxu0 %v2076
      %v2303 = vpop.f32.mrb[0].mxu0
      %v2304 = vadd.f32 %v2115, %v2303
      %v2305 = vpop.f32.mrb[0].mxu0
      %v2306 = vpop.f32.mrb[0].mxu0
      %v2307 = vadd.f32 %v2115, %v2306
      %v2308 = vpop.f32.mrb[0].mxu0
      %2309 = vdwg.mxu0
      %v2310 = vmax.f32 %v2248, 0.0
      %v2311 = vmax.f32 %v2251, 0.0
      %v2312 = vmax.f32 %v2256, 0.0
      %v2313 = vmax.f32 %v2259, 0.0
      %v2314 = vmax.f32 %v2264, 0.0
      %v2315 = vmax.f32 %v2267, 0.0
      %v2316 = vmax.f32 %v2272, 0.0
      %v2317 = vmax.f32 %v2275, 0.0
      %v2318 = vmax.f32 %v2280, 0.0
      %v2319 = vmax.f32 %v2283, 0.0
      %v2320 = vmax.f32 %v2288, 0.0
      %v2321 = vmax.f32 %v2291, 0.0
      %v2322 = vmax.f32 %v2296, 0.0
      %v2323 = vmax.f32 %v2299, 0.0
      %v2324 = vmax.f32 %v2304, 0.0
      %v2325 = vmax.f32 %v2307, 0.0
      %v2326 = vpack.c.bf16 %v2311, %v2310
      %v2327 = vpack.c.bf16 %v2313, %v2312
      %v2328 = vpack.c.bf16 %v2315, %v2314
      %v2329 = vpack.c.bf16 %v2317, %v2316
      %v2330 = vpack.c.bf16 %v2319, %v2318
      %v2331 = vpack.c.bf16 %v2321, %v2320
      %v2332 = vpack.c.bf16 %v2323, %v2322
      %v2333 = vpack.c.bf16 %v2325, %v2324
      %v2334 = vld [vmem:[%s6] sm:$0xff]
      %v2335 = vld [vmem:[%s6 + $0x8] sm:$0xff]
      %v2336 = vld [vmem:[%s6 + $0x10] sm:$0xff]
      %v2337 = vld [vmem:[%s6 + $0x18] sm:$0xff]
      %v2338 = vld [vmem:[%s6 + $0x20] sm:$0xff]
      %v2339 = vld [vmem:[%s6 + $0x28] sm:$0xff]
      %v2340 = vld [vmem:[%s6 + $0x30] sm:$0xff]
      %v2341 = vld [vmem:[%s6 + $0x38] sm:$0xff]
      %v2342 = vld [vmem:[%s6 + $0x40] sm:$0xff]
      %v2343 = vld [vmem:[%s6 + $0x48] sm:$0xff]
      %v2344 = vld [vmem:[%s6 + $0x50] sm:$0xff]
      %v2345 = vld [vmem:[%s6 + $0x58] sm:$0xff]
      %v2346 = vld [vmem:[%s6 + $0x60] sm:$0xff]
      %v2347 = vld [vmem:[%s6 + $0x68] sm:$0xff]
      %v2348 = vld [vmem:[%s6 + $0x70] sm:$0xff]
      %v2349 = vld [vmem:[%s6 + $0x78] sm:$0xff]
      %v2350 = vld [vmem:[%s7] sm:$0x3]
      %v2352 = vlaneseq
      %v2353 = vshrl.u32 %v2352, 7
      %v2354 = vsub.s32 0, %v2353
      %v2355 = vrot.slane %v2350, %v2354
      %v2356 = vlaneseq
      %v2357 = vshrl.u32 %v2356, 7
      %v2358 = vsub.s32 1, %v2357
      %v2359 = vrot.slane %v2350, %v2358
      %v2378 = vunpack.c.l.b16 %v2334
      %v2379 = vunpack.c.h.b16 %v2334
      %v2380 = vunpack.c.l.b16 %v2335
      %v2381 = vunpack.c.h.b16 %v2335
      %v2382 = vunpack.c.l.b16 %v2336
      %v2383 = vunpack.c.h.b16 %v2336
      %v2384 = vunpack.c.l.b16 %v2337
      %v2385 = vunpack.c.h.b16 %v2337
      %v2386 = vunpack.c.l.b16 %v2338
      %v2387 = vunpack.c.h.b16 %v2338
      %v2388 = vunpack.c.l.b16 %v2339
      %v2389 = vunpack.c.h.b16 %v2339
      %v2390 = vunpack.c.l.b16 %v2340
      %v2391 = vunpack.c.h.b16 %v2340
      %v2392 = vunpack.c.l.b16 %v2341
      %v2393 = vunpack.c.h.b16 %v2341
      %v2394 = vunpack.c.l.b16 %v2342
      %v2395 = vunpack.c.h.b16 %v2342
      %v2396 = vunpack.c.l.b16 %v2343
      %v2397 = vunpack.c.h.b16 %v2343
      %v2398 = vunpack.c.l.b16 %v2344
      %v2399 = vunpack.c.h.b16 %v2344
      %v2400 = vunpack.c.l.b16 %v2345
      %v2401 = vunpack.c.h.b16 %v2345
      %v2402 = vunpack.c.l.b16 %v2346
      %v2403 = vunpack.c.h.b16 %v2346
      %v2404 = vunpack.c.l.b16 %v2347
      %v2405 = vunpack.c.h.b16 %v2347
      %v2406 = vunpack.c.l.b16 %v2348
      %v2407 = vunpack.c.h.b16 %v2348
      %v2408 = vunpack.c.l.b16 %v2349
      %v2409 = vunpack.c.h.b16 %v2349
      %v2410 = vpack.c.b16 %v2380, %v2378
      %v2411 = vpack.c.b16 %v2381, %v2379
      %v2412 = vpack.c.b16 %v2384, %v2382
      %v2413 = vpack.c.b16 %v2385, %v2383
      %v2414 = vpack.c.b16 %v2388, %v2386
      %v2415 = vpack.c.b16 %v2389, %v2387
      %v2416 = vpack.c.b16 %v2392, %v2390
      %v2417 = vpack.c.b16 %v2393, %v2391
      %v2418 = vpack.c.b16 %v2396, %v2394
      %v2419 = vpack.c.b16 %v2397, %v2395
      %v2420 = vpack.c.b16 %v2400, %v2398
      %v2421 = vpack.c.b16 %v2401, %v2399
      %v2422 = vpack.c.b16 %v2404, %v2402
      %v2423 = vpack.c.b16 %v2405, %v2403
      %v2424 = vpack.c.b16 %v2408, %v2406
      %v2425 = vpack.c.b16 %v2409, %v2407
      %2442 = vmatprep.subr.bf16.mxu0 %v2411
      %2443 = vmatpush1.bf16.msra.mxu0 %v2410
      %2444 = vmatprep.subr.bf16.mxu0 %v2413
      %2445 = vmatpush1.bf16.msra.mxu0 %v2412
      %2446 = vmatprep.subr.bf16.mxu0 %v2415
      %2447 = vmatpush1.bf16.msra.mxu0 %v2414
      %2448 = vmatprep.subr.bf16.mxu0 %v2417
      %2449 = vmatpush1.bf16.msra.mxu0 %v2416
      %2450 = vmatprep.subr.bf16.mxu0 %v2419
      %2451 = vmatpush1.bf16.msra.mxu0 %v2418
      %2452 = vmatprep.subr.bf16.mxu0 %v2421
      %2453 = vmatpush1.bf16.msra.mxu0 %v2420
      %2454 = vmatprep.subr.bf16.mxu0 %v2423
      %2455 = vmatpush1.bf16.msra.mxu0 %v2422
      %2456 = vmatprep.subr.bf16.mxu0 %v2425
      %2457 = vmatpush1.bf16.msra.mxu0 %v2424
      %2458 = vmatprep.subr.bf16.mxu0 0
      %2459 = vmatpush1.bf16.msra.mxu0 0
      %2460 = vmatprep.subr.bf16.mxu0 0
      %2461 = vmatpush1.bf16.msra.mxu0 0
      %2462 = vmatprep.subr.bf16.mxu0 0
      %2463 = vmatpush1.bf16.msra.mxu0 0
      %2464 = vmatprep.subr.bf16.mxu0 0
      %2465 = vmatpush1.bf16.msra.mxu0 0
      %2466 = vmatprep.subr.bf16.mxu0 0
      %2467 = vmatpush1.bf16.msra.mxu0 0
      %2468 = vmatprep.subr.bf16.mxu0 0
      %2469 = vmatpush1.bf16.msra.mxu0 0
      %2470 = vmatprep.subr.bf16.mxu0 0
      %2471 = vmatpush1.bf16.msra.mxu0 0
      %2472 = vmatprep.subr.bf16.mxu0 0
      %2473 = vmatpush1.bf16.msra.mxu0 0
      %2474 = vmatprep.mubr.bf16.mxu0 0
      %2475 = vmatmul.mubr.bf16.gmra.mrb[0].mxu0 %v2326
      %v2476 = vpop.f32.mrb[0].mxu0
      %v2477 = vadd.f32 %v2355, %v2476
      %v2478 = vpop.f32.mrb[0].mxu0
      %v2479 = vadd.f32 %v2359, %v2478
      %v2480 = vpop.f32.mrb[0].mxu0
      %v2481 = vadd.f32 %v2355, %v2480
      %v2482 = vpop.f32.mrb[0].mxu0
      %v2483 = vadd.f32 %v2359, %v2482
      %2484 = vmatprep.mubr.bf16.mxu0 0
      %2485 = vmatmul.mubr.bf16.gmra.mrb[0].mxu0 %v2327
      %v2486 = vpop.f32.mrb[0].mxu0
      %v2487 = vadd.f32 %v2355, %v2486
      %v2488 = vpop.f32.mrb[0].mxu0
      %v2489 = vadd.f32 %v2359, %v2488
      %v2490 = vpop.f32.mrb[0].mxu0
      %v2491 = vadd.f32 %v2355, %v2490
      %v2492 = vpop.f32.mrb[0].mxu0
      %v2493 = vadd.f32 %v2359, %v2492
      %2494 = vmatprep.mubr.bf16.mxu0 0
      %2495 = vmatmul.mubr.bf16.gmra.mrb[0].mxu0 %v2328
      %v2496 = vpop.f32.mrb[0].mxu0
      %v2497 = vadd.f32 %v2355, %v2496
      %v2498 = vpop.f32.mrb[0].mxu0
      %v2499 = vadd.f32 %v2359, %v2498
      %v2500 = vpop.f32.mrb[0].mxu0
      %v2501 = vadd.f32 %v2355, %v2500
      %v2502 = vpop.f32.mrb[0].mxu0
      %v2503 = vadd.f32 %v2359, %v2502
      %2504 = vmatprep.mubr.bf16.mxu0 0
      %2505 = vmatmul.mubr.bf16.gmra.mrb[0].mxu0 %v2329
      %v2506 = vpop.f32.mrb[0].mxu0
      %v2507 = vadd.f32 %v2355, %v2506
      %v2508 = vpop.f32.mrb[0].mxu0
      %v2509 = vadd.f32 %v2359, %v2508
      %v2510 = vpop.f32.mrb[0].mxu0
      %v2511 = vadd.f32 %v2355, %v2510
      %v2512 = vpop.f32.mrb[0].mxu0
      %v2513 = vadd.f32 %v2359, %v2512
      %2514 = vmatprep.mubr.bf16.mxu0 0
      %2515 = vmatmul.mubr.bf16.gmra.mrb[0].mxu0 %v2330
      %v2516 = vpop.f32.mrb[0].mxu0
      %v2517 = vadd.f32 %v2355, %v2516
      %v2518 = vpop.f32.mrb[0].mxu0
      %v2519 = vadd.f32 %v2359, %v2518
      %v2520 = vpop.f32.mrb[0].mxu0
      %v2521 = vadd.f32 %v2355, %v2520
      %v2522 = vpop.f32.mrb[0].mxu0
      %v2523 = vadd.f32 %v2359, %v2522
      %2524 = vmatprep.mubr.bf16.mxu0 0
      %2525 = vmatmul.mubr.bf16.gmra.mrb[0].mxu0 %v2331
      %v2526 = vpop.f32.mrb[0].mxu0
      %v2527 = vadd.f32 %v2355, %v2526
      %v2528 = vpop.f32.mrb[0].mxu0
      %v2529 = vadd.f32 %v2359, %v2528
      %v2530 = vpop.f32.mrb[0].mxu0
      %v2531 = vadd.f32 %v2355, %v2530
      %v2532 = vpop.f32.mrb[0].mxu0
      %v2533 = vadd.f32 %v2359, %v2532
      %2534 = vmatprep.mubr.bf16.mxu0 0
      %2535 = vmatmul.mubr.bf16.gmra.mrb[0].mxu0 %v2332
      %v2536 = vpop.f32.mrb[0].mxu0
      %v2537 = vadd.f32 %v2355, %v2536
      %v2538 = vpop.f32.mrb[0].mxu0
      %v2539 = vadd.f32 %v2359, %v2538
      %v2540 = vpop.f32.mrb[0].mxu0
      %v2541 = vadd.f32 %v2355, %v2540
      %v2542 = vpop.f32.mrb[0].mxu0
      %v2543 = vadd.f32 %v2359, %v2542
      %2544 = vmatprep.mubr.bf16.mxu0 0
      %2545 = vmatmul.mubr.bf16.gmra.mrb[0].mxu0 %v2333
      %v2546 = vpop.f32.mrb[0].mxu0
      %v2547 = vadd.f32 %v2355, %v2546
      %v2548 = vpop.f32.mrb[0].mxu0
      %v2549 = vadd.f32 %v2359, %v2548
      %v2550 = vpop.f32.mrb[0].mxu0
      %v2551 = vadd.f32 %v2355, %v2550
      %v2552 = vpop.f32.mrb[0].mxu0
      %v2553 = vadd.f32 %v2359, %v2552
      %2554 = vdwg.mxu0
      %v2555 = vld [vmem:[%s525] sm:$0xff]
      %v2556 = vld [vmem:[%s525 + $0x8] sm:$0xff]
      %v2557 = vld [vmem:[%s525 + $0x10] sm:$0xff]
      %v2558 = vld [vmem:[%s525 + $0x18] sm:$0xff]
      %v2559 = vld [vmem:[%s525 + $0x20] sm:$0xff]
      %v2560 = vld [vmem:[%s525 + $0x28] sm:$0xff]
      %v2561 = vld [vmem:[%s525 + $0x30] sm:$0xff]
      %v2562 = vld [vmem:[%s525 + $0x38] sm:$0xff]
      %v2563 = vld [vmem:[%s525 + $0x40] sm:$0xff]
      %v2564 = vld [vmem:[%s525 + $0x48] sm:$0xff]
      %v2565 = vld [vmem:[%s525 + $0x50] sm:$0xff]
      %v2566 = vld [vmem:[%s525 + $0x58] sm:$0xff]
      %v2567 = vld [vmem:[%s525 + $0x60] sm:$0xff]
      %v2568 = vld [vmem:[%s525 + $0x68] sm:$0xff]
      %v2569 = vld [vmem:[%s525 + $0x70] sm:$0xff]
      %v2570 = vld [vmem:[%s525 + $0x78] sm:$0xff]
      %v2571 = vmul.f32 %v2555, %v2479
      %v2572 = vmul.f32 %v2556, %v2483
      %v2573 = vmul.f32 %v2557, %v2489
      %v2574 = vmul.f32 %v2558, %v2493
      %v2575 = vmul.f32 %v2559, %v2499
      %v2576 = vmul.f32 %v2560, %v2503
      %v2577 = vmul.f32 %v2561, %v2509
      %v2578 = vmul.f32 %v2562, %v2513
      %v2579 = vmul.f32 %v2563, %v2519
      %v2580 = vmul.f32 %v2564, %v2523
      %v2581 = vmul.f32 %v2565, %v2529
      %v2582 = vmul.f32 %v2566, %v2533
      %v2583 = vmul.f32 %v2567, %v2539
      %v2584 = vmul.f32 %v2568, %v2543
      %v2585 = vmul.f32 %v2569, %v2549
      %v2586 = vmul.f32 %v2570, %v2553
      %v2587 = vadd.f32 %v2477, %v2571
      %v2588 = vadd.f32 %v2481, %v2572
      %v2589 = vadd.f32 %v2487, %v2573
      %v2590 = vadd.f32 %v2491, %v2574
      %v2591 = vadd.f32 %v2497, %v2575
      %v2592 = vadd.f32 %v2501, %v2576
      %v2593 = vadd.f32 %v2507, %v2577
      %v2594 = vadd.f32 %v2511, %v2578
      %v2595 = vadd.f32 %v2517, %v2579
      %v2596 = vadd.f32 %v2521, %v2580
      %v2597 = vadd.f32 %v2527, %v2581
      %v2598 = vadd.f32 %v2531, %v2582
      %v2599 = vadd.f32 %v2537, %v2583
      %v2600 = vadd.f32 %v2541, %v2584
      %v2601 = vadd.f32 %v2547, %v2585
      %v2602 = vadd.f32 %v2551, %v2586
      %v2603 = vpack.c.bf16 %v2588, %v2587
      %v2604 = vpack.c.bf16 %v2590, %v2589
      %v2605 = vpack.c.bf16 %v2592, %v2591
      %v2606 = vpack.c.bf16 %v2594, %v2593
      %v2607 = vpack.c.bf16 %v2596, %v2595
      %v2608 = vpack.c.bf16 %v2598, %v2597
      %v2609 = vpack.c.bf16 %v2600, %v2599
      %v2610 = vpack.c.bf16 %v2602, %v2601
      %v2611 = vld [vmem:[%s8] sm:$0xf]
      %v2612 = vld [vmem:[%s8 + $0x4] sm:$0xf]
      %v2613 = vld [vmem:[%s8 + $0x8] sm:$0xf]
      %v2614 = vld [vmem:[%s8 + $0xc] sm:$0xf]
      %v2615 = vld [vmem:[%s8 + $0x10] sm:$0xf]
      %v2616 = vld [vmem:[%s8 + $0x14] sm:$0xf]
      %v2617 = vld [vmem:[%s8 + $0x18] sm:$0xf]
      %v2618 = vld [vmem:[%s8 + $0x1c] sm:$0xf]
      %v2619 = vld [vmem:[%s8 + $0x20] sm:$0xf]
      %v2620 = vld [vmem:[%s8 + $0x24] sm:$0xf]
      %v2621 = vld [vmem:[%s8 + $0x28] sm:$0xf]
      %v2622 = vld [vmem:[%s8 + $0x2c] sm:$0xf]
      %v2623 = vld [vmem:[%s8 + $0x30] sm:$0xf]
      %v2624 = vld [vmem:[%s8 + $0x34] sm:$0xf]
      %v2625 = vld [vmem:[%s8 + $0x38] sm:$0xf]
      %v2626 = vld [vmem:[%s8 + $0x3c] sm:$0xf]
      %v2627 = vld [vmem:[%s9] sm:$0x1]
      %v2629 = vlaneseq
      %v2630 = vshrl.u32 %v2629, 7
      %v2631 = vsub.s32 0, %v2630
      %v2632 = vrot.slane %v2627, %v2631
      %v2650 = vunpack.c.l.b16 %v2611
      %v2651 = vunpack.c.l.b16 %v2612
      %v2652 = vunpack.c.l.b16 %v2613
      %v2653 = vunpack.c.l.b16 %v2614
      %v2654 = vunpack.c.l.b16 %v2615
      %v2655 = vunpack.c.l.b16 %v2616
      %v2656 = vunpack.c.l.b16 %v2617
      %v2657 = vunpack.c.l.b16 %v2618
      %v2658 = vunpack.c.l.b16 %v2619
      %v2659 = vunpack.c.l.b16 %v2620
      %v2660 = vunpack.c.l.b16 %v2621
      %v2661 = vunpack.c.l.b16 %v2622
      %v2662 = vunpack.c.l.b16 %v2623
      %v2663 = vunpack.c.l.b16 %v2624
      %v2664 = vunpack.c.l.b16 %v2625
      %v2665 = vunpack.c.l.b16 %v2626
      %v2666 = vpack.c.b16 %v2651, %v2650
      %v2667 = vpack.c.b16 %v2653, %v2652
      %v2668 = vpack.c.b16 %v2655, %v2654
      %v2669 = vpack.c.b16 %v2657, %v2656
      %v2670 = vpack.c.b16 %v2659, %v2658
      %v2671 = vpack.c.b16 %v2661, %v2660
      %v2672 = vpack.c.b16 %v2663, %v2662
      %v2673 = vpack.c.b16 %v2665, %v2664
      %2682 = vmatprep.subr.bf16.mxu0 0
      %2683 = vmatpush1.bf16.msra.mxu0 %v2666
      %2684 = vmatprep.subr.bf16.mxu0 0
      %2685 = vmatpush1.bf16.msra.mxu0 %v2667
      %2686 = vmatprep.subr.bf16.mxu0 0
      %2687 = vmatpush1.bf16.msra.mxu0 %v2668
      %2688 = vmatprep.subr.bf16.mxu0 0
      %2689 = vmatpush1.bf16.msra.mxu0 %v2669
      %2690 = vmatprep.subr.bf16.mxu0 0
      %2691 = vmatpush1.bf16.msra.mxu0 %v2670
      %2692 = vmatprep.subr.bf16.mxu0 0
      %2693 = vmatpush1.bf16.msra.mxu0 %v2671
      %2694 = vmatprep.subr.bf16.mxu0 0
      %2695 = vmatpush1.bf16.msra.mxu0 %v2672
      %2696 = vmatprep.subr.bf16.mxu0 0
      %2697 = vmatpush1.bf16.msra.mxu0 %v2673
      %2698 = vmatprep.subr.bf16.mxu0 0
      %2699 = vmatpush1.bf16.msra.mxu0 0
      %2700 = vmatprep.subr.bf16.mxu0 0
      %2701 = vmatpush1.bf16.msra.mxu0 0
      %2702 = vmatprep.subr.bf16.mxu0 0
      %2703 = vmatpush1.bf16.msra.mxu0 0
      %2704 = vmatprep.subr.bf16.mxu0 0
      %2705 = vmatpush1.bf16.msra.mxu0 0
      %2706 = vmatprep.subr.bf16.mxu0 0
      %2707 = vmatpush1.bf16.msra.mxu0 0
      %2708 = vmatprep.subr.bf16.mxu0 0
      %2709 = vmatpush1.bf16.msra.mxu0 0
      %2710 = vmatprep.subr.bf16.mxu0 0
      %2711 = vmatpush1.bf16.msra.mxu0 0
      %2712 = vmatprep.subr.bf16.mxu0 0
      %2713 = vmatpush1.bf16.msra.mxu0 0
      %2714 = vmatprep.mubr.bf16.mxu0 0
      %2715 = vmatmul.mubr.bf16.gmra.mrb[0].mxu0 %v2603
      %v2716 = vpop.f32.mrb[0].mxu0
      %v2717 = vadd.f32 %v2632, %v2716
      %v2718 = vpop.f32.mrb[0].mxu0
      %v2719 = vpop.f32.mrb[0].mxu0
      %v2720 = vadd.f32 %v2632, %v2719
      %v2721 = vpop.f32.mrb[0].mxu0
      %2722 = vmatprep.mubr.bf16.mxu0 0
      %2723 = vmatmul.mubr.bf16.gmra.mrb[0].mxu0 %v2604
      %v2724 = vpop.f32.mrb[0].mxu0
      %v2725 = vadd.f32 %v2632, %v2724
      %v2726 = vpop.f32.mrb[0].mxu0
      %v2727 = vpop.f32.mrb[0].mxu0
      %v2728 = vadd.f32 %v2632, %v2727
      %v2729 = vpop.f32.mrb[0].mxu0
      %2730 = vmatprep.mubr.bf16.mxu0 0
      %2731 = vmatmul.mubr.bf16.gmra.mrb[0].mxu0 %v2605
      %v2732 = vpop.f32.mrb[0].mxu0
      %v2733 = vadd.f32 %v2632, %v2732
      %v2734 = vpop.f32.mrb[0].mxu0
      %v2735 = vpop.f32.mrb[0].mxu0
      %v2736 = vadd.f32 %v2632, %v2735
      %v2737 = vpop.f32.mrb[0].mxu0
      %2738 = vmatprep.mubr.bf16.mxu0 0
      %2739 = vmatmul.mubr.bf16.gmra.mrb[0].mxu0 %v2606
      %v2740 = vpop.f32.mrb[0].mxu0
      %v2741 = vadd.f32 %v2632, %v2740
      %v2742 = vpop.f32.mrb[0].mxu0
      %v2743 = vpop.f32.mrb[0].mxu0
      %v2744 = vadd.f32 %v2632, %v2743
      %v2745 = vpop.f32.mrb[0].mxu0
      %2746 = vmatprep.mubr.bf16.mxu0 0
      %2747 = vmatmul.mubr.bf16.gmra.mrb[0].mxu0 %v2607
      %v2748 = vpop.f32.mrb[0].mxu0
      %v2749 = vadd.f32 %v2632, %v2748
      %v2750 = vpop.f32.mrb[0].mxu0
      %v2751 = vpop.f32.mrb[0].mxu0
      %v2752 = vadd.f32 %v2632, %v2751
      %v2753 = vpop.f32.mrb[0].mxu0
      %2754 = vmatprep.mubr.bf16.mxu0 0
      %2755 = vmatmul.mubr.bf16.gmra.mrb[0].mxu0 %v2608
      %v2756 = vpop.f32.mrb[0].mxu0
      %v2757 = vadd.f32 %v2632, %v2756
      %v2758 = vpop.f32.mrb[0].mxu0
      %v2759 = vpop.f32.mrb[0].mxu0
      %v2760 = vadd.f32 %v2632, %v2759
      %v2761 = vpop.f32.mrb[0].mxu0
      %2762 = vmatprep.mubr.bf16.mxu0 0
      %2763 = vmatmul.mubr.bf16.gmra.mrb[0].mxu0 %v2609
      %v2764 = vpop.f32.mrb[0].mxu0
      %v2765 = vadd.f32 %v2632, %v2764
      %v2766 = vpop.f32.mrb[0].mxu0
      %v2767 = vpop.f32.mrb[0].mxu0
      %v2768 = vadd.f32 %v2632, %v2767
      %v2769 = vpop.f32.mrb[0].mxu0
      %2770 = vmatprep.mubr.bf16.mxu0 0
      %2771 = vmatmul.mubr.bf16.gmra.mrb[0].mxu0 %v2610
      %v2772 = vpop.f32.mrb[0].mxu0
      %v2773 = vadd.f32 %v2632, %v2772
      %v2774 = vpop.f32.mrb[0].mxu0
      %v2775 = vpop.f32.mrb[0].mxu0
      %v2776 = vadd.f32 %v2632, %v2775
      %v2777 = vpop.f32.mrb[0].mxu0
      %2778 = vdwg.mxu0
      %v2779 = vmax.f32 %v2717, 0.0
      %v2780 = vmax.f32 %v2720, 0.0
      %v2781 = vmax.f32 %v2725, 0.0
      %v2782 = vmax.f32 %v2728, 0.0
      %v2783 = vmax.f32 %v2733, 0.0
      %v2784 = vmax.f32 %v2736, 0.0
      %v2785 = vmax.f32 %v2741, 0.0
      %v2786 = vmax.f32 %v2744, 0.0
      %v2787 = vmax.f32 %v2749, 0.0
      %v2788 = vmax.f32 %v2752, 0.0
      %v2789 = vmax.f32 %v2757, 0.0
      %v2790 = vmax.f32 %v2760, 0.0
      %v2791 = vmax.f32 %v2765, 0.0
      %v2792 = vmax.f32 %v2768, 0.0
      %v2793 = vmax.f32 %v2773, 0.0
      %v2794 = vmax.f32 %v2776, 0.0
      %v2795 = vpack.c.bf16 %v2780, %v2779
      %v2796 = vpack.c.bf16 %v2782, %v2781
      %v2797 = vpack.c.bf16 %v2784, %v2783
      %v2798 = vpack.c.bf16 %v2786, %v2785
      %v2799 = vpack.c.bf16 %v2788, %v2787
      %v2800 = vpack.c.bf16 %v2790, %v2789
      %v2801 = vpack.c.bf16 %v2792, %v2791
      %v2802 = vpack.c.bf16 %v2794, %v2793
      %v2803 = vld [vmem:[%s10] sm:$0xff]
      %v2804 = vld [vmem:[%s10 + $0x8] sm:$0xff]
      %v2805 = vld [vmem:[%s10 + $0x10] sm:$0xff]
      %v2806 = vld [vmem:[%s10 + $0x18] sm:$0xff]
      %v2807 = vld [vmem:[%s10 + $0x20] sm:$0xff]
      %v2808 = vld [vmem:[%s10 + $0x28] sm:$0xff]
      %v2809 = vld [vmem:[%s10 + $0x30] sm:$0xff]
      %v2810 = vld [vmem:[%s10 + $0x38] sm:$0xff]
      %v2811 = vld [vmem:[%s10 + $0x40] sm:$0xff]
      %v2812 = vld [vmem:[%s10 + $0x48] sm:$0xff]
      %v2813 = vld [vmem:[%s10 + $0x50] sm:$0xff]
      %v2814 = vld [vmem:[%s10 + $0x58] sm:$0xff]
      %v2815 = vld [vmem:[%s10 + $0x60] sm:$0xff]
      %v2816 = vld [vmem:[%s10 + $0x68] sm:$0xff]
      %v2817 = vld [vmem:[%s10 + $0x70] sm:$0xff]
      %v2818 = vld [vmem:[%s10 + $0x78] sm:$0xff]
      %v2819 = vld [vmem:[%s11] sm:$0x3]
      %v2821 = vlaneseq
      %v2822 = vshrl.u32 %v2821, 7
      %v2823 = vsub.s32 0, %v2822
      %v2824 = vrot.slane %v2819, %v2823
      %v2825 = vlaneseq
      %v2826 = vshrl.u32 %v2825, 7
      %v2827 = vsub.s32 1, %v2826
      %v2828 = vrot.slane %v2819, %v2827
      %v2847 = vunpack.c.l.b16 %v2803
      %v2848 = vunpack.c.h.b16 %v2803
      %v2849 = vunpack.c.l.b16 %v2804
      %v2850 = vunpack.c.h.b16 %v2804
      %v2851 = vunpack.c.l.b16 %v2805
      %v2852 = vunpack.c.h.b16 %v2805
      %v2853 = vunpack.c.l.b16 %v2806
      %v2854 = vunpack.c.h.b16 %v2806
      %v2855 = vunpack.c.l.b16 %v2807
      %v2856 = vunpack.c.h.b16 %v2807
      %v2857 = vunpack.c.l.b16 %v2808
      %v2858 = vunpack.c.h.b16 %v2808
      %v2859 = vunpack.c.l.b16 %v2809
      %v2860 = vunpack.c.h.b16 %v2809
      %v2861 = vunpack.c.l.b16 %v2810
      %v2862 = vunpack.c.h.b16 %v2810
      %v2863 = vunpack.c.l.b16 %v2811
      %v2864 = vunpack.c.h.b16 %v2811
      %v2865 = vunpack.c.l.b16 %v2812
      %v2866 = vunpack.c.h.b16 %v2812
      %v2867 = vunpack.c.l.b16 %v2813
      %v2868 = vunpack.c.h.b16 %v2813
      %v2869 = vunpack.c.l.b16 %v2814
      %v2870 = vunpack.c.h.b16 %v2814
      %v2871 = vunpack.c.l.b16 %v2815
      %v2872 = vunpack.c.h.b16 %v2815
      %v2873 = vunpack.c.l.b16 %v2816
      %v2874 = vunpack.c.h.b16 %v2816
      %v2875 = vunpack.c.l.b16 %v2817
      %v2876 = vunpack.c.h.b16 %v2817
      %v2877 = vunpack.c.l.b16 %v2818
      %v2878 = vunpack.c.h.b16 %v2818
      %v2879 = vpack.c.b16 %v2849, %v2847
      %v2880 = vpack.c.b16 %v2850, %v2848
      %v2881 = vpack.c.b16 %v2853, %v2851
      %v2882 = vpack.c.b16 %v2854, %v2852
      %v2883 = vpack.c.b16 %v2857, %v2855
      %v2884 = vpack.c.b16 %v2858, %v2856
      %v2885 = vpack.c.b16 %v2861, %v2859
      %v2886 = vpack.c.b16 %v2862, %v2860
      %v2887 = vpack.c.b16 %v2865, %v2863
      %v2888 = vpack.c.b16 %v2866, %v2864
      %v2889 = vpack.c.b16 %v2869, %v2867
      %v2890 = vpack.c.b16 %v2870, %v2868
      %v2891 = vpack.c.b16 %v2873, %v2871
      %v2892 = vpack.c.b16 %v2874, %v2872
      %v2893 = vpack.c.b16 %v2877, %v2875
      %v2894 = vpack.c.b16 %v2878, %v2876
      %2911 = vmatprep.subr.bf16.mxu0 %v2880
      %2912 = vmatpush1.bf16.msra.mxu0 %v2879
      %2913 = vmatprep.subr.bf16.mxu0 %v2882
      %2914 = vmatpush1.bf16.msra.mxu0 %v2881
      %2915 = vmatprep.subr.bf16.mxu0 %v2884
      %2916 = vmatpush1.bf16.msra.mxu0 %v2883
      %2917 = vmatprep.subr.bf16.mxu0 %v2886
      %2918 = vmatpush1.bf16.msra.mxu0 %v2885
      %2919 = vmatprep.subr.bf16.mxu0 %v2888
      %2920 = vmatpush1.bf16.msra.mxu0 %v2887
      %2921 = vmatprep.subr.bf16.mxu0 %v2890
      %2922 = vmatpush1.bf16.msra.mxu0 %v2889
      %2923 = vmatprep.subr.bf16.mxu0 %v2892
      %2924 = vmatpush1.bf16.msra.mxu0 %v2891
      %2925 = vmatprep.subr.bf16.mxu0 %v2894
      %2926 = vmatpush1.bf16.msra.mxu0 %v2893
      %2927 = vmatprep.subr.bf16.mxu0 0
      %2928 = vmatpush1.bf16.msra.mxu0 0
      %2929 = vmatprep.subr.bf16.mxu0 0
      %2930 = vmatpush1.bf16.msra.mxu0 0
      %2931 = vmatprep.subr.bf16.mxu0 0
      %2932 = vmatpush1.bf16.msra.mxu0 0
      %2933 = vmatprep.subr.bf16.mxu0 0
      %2934 = vmatpush1.bf16.msra.mxu0 0
      %2935 = vmatprep.subr.bf16.mxu0 0
      %2936 = vmatpush1.bf16.msra.mxu0 0
      %2937 = vmatprep.subr.bf16.mxu0 0
      %2938 = vmatpush1.bf16.msra.mxu0 0
      %2939 = vmatprep.subr.bf16.mxu0 0
      %2940 = vmatpush1.bf16.msra.mxu0 0
      %2941 = vmatprep.subr.bf16.mxu0 0
      %2942 = vmatpush1.bf16.msra.mxu0 0
      %2943 = vmatprep.mubr.bf16.mxu0 0
      %2944 = vmatmul.mubr.bf16.gmra.mrb[0].mxu0 %v2795
      %v2945 = vpop.f32.mrb[0].mxu0
      %v2946 = vadd.f32 %v2824, %v2945
      %v2947 = vpop.f32.mrb[0].mxu0
      %v2948 = vadd.f32 %v2828, %v2947
      %v2949 = vpop.f32.mrb[0].mxu0
      %v2950 = vadd.f32 %v2824, %v2949
      %v2951 = vpop.f32.mrb[0].mxu0
      %v2952 = vadd.f32 %v2828, %v2951
      %2953 = vmatprep.mubr.bf16.mxu0 0
      %2954 = vmatmul.mubr.bf16.gmra.mrb[0].mxu0 %v2796
      %v2955 = vpop.f32.mrb[0].mxu0
      %v2956 = vadd.f32 %v2824, %v2955
      %v2957 = vpop.f32.mrb[0].mxu0
      %v2958 = vadd.f32 %v2828, %v2957
      %v2959 = vpop.f32.mrb[0].mxu0
      %v2960 = vadd.f32 %v2824, %v2959
      %v2961 = vpop.f32.mrb[0].mxu0
      %v2962 = vadd.f32 %v2828, %v2961
      %2963 = vmatprep.mubr.bf16.mxu0 0
      %2964 = vmatmul.mubr.bf16.gmra.mrb[0].mxu0 %v2797
      %v2965 = vpop.f32.mrb[0].mxu0
      %v2966 = vadd.f32 %v2824, %v2965
      %v2967 = vpop.f32.mrb[0].mxu0
      %v2968 = vadd.f32 %v2828, %v2967
      %v2969 = vpop.f32.mrb[0].mxu0
      %v2970 = vadd.f32 %v2824, %v2969
      %v2971 = vpop.f32.mrb[0].mxu0
      %v2972 = vadd.f32 %v2828, %v2971
      %2973 = vmatprep.mubr.bf16.mxu0 0
      %2974 = vmatmul.mubr.bf16.gmra.mrb[0].mxu0 %v2798
      %v2975 = vpop.f32.mrb[0].mxu0
      %v2976 = vadd.f32 %v2824, %v2975
      %v2977 = vpop.f32.mrb[0].mxu0
      %v2978 = vadd.f32 %v2828, %v2977
      %v2979 = vpop.f32.mrb[0].mxu0
      %v2980 = vadd.f32 %v2824, %v2979
      %v2981 = vpop.f32.mrb[0].mxu0
      %v2982 = vadd.f32 %v2828, %v2981
      %2983 = vmatprep.mubr.bf16.mxu0 0
      %2984 = vmatmul.mubr.bf16.gmra.mrb[0].mxu0 %v2799
      %v2985 = vpop.f32.mrb[0].mxu0
      %v2986 = vadd.f32 %v2824, %v2985
      %v2987 = vpop.f32.mrb[0].mxu0
      %v2988 = vadd.f32 %v2828, %v2987
      %v2989 = vpop.f32.mrb[0].mxu0
      %v2990 = vadd.f32 %v2824, %v2989
      %v2991 = vpop.f32.mrb[0].mxu0
      %v2992 = vadd.f32 %v2828, %v2991
      %2993 = vmatprep.mubr.bf16.mxu0 0
      %2994 = vmatmul.mubr.bf16.gmra.mrb[0].mxu0 %v2800
      %v2995 = vpop.f32.mrb[0].mxu0
      %v2996 = vadd.f32 %v2824, %v2995
      %v2997 = vpop.f32.mrb[0].mxu0
      %v2998 = vadd.f32 %v2828, %v2997
      %v2999 = vpop.f32.mrb[0].mxu0
      %v3000 = vadd.f32 %v2824, %v2999
      %v3001 = vpop.f32.mrb[0].mxu0
      %v3002 = vadd.f32 %v2828, %v3001
      %3003 = vmatprep.mubr.bf16.mxu0 0
      %3004 = vmatmul.mubr.bf16.gmra.mrb[0].mxu0 %v2801
      %v3005 = vpop.f32.mrb[0].mxu0
      %v3006 = vadd.f32 %v2824, %v3005
      %v3007 = vpop.f32.mrb[0].mxu0
      %v3008 = vadd.f32 %v2828, %v3007
      %v3009 = vpop.f32.mrb[0].mxu0
      %v3010 = vadd.f32 %v2824, %v3009
      %v3011 = vpop.f32.mrb[0].mxu0
      %v3012 = vadd.f32 %v2828, %v3011
      %3013 = vmatprep.mubr.bf16.mxu0 0
      %3014 = vmatmul.mubr.bf16.gmra.mrb[0].mxu0 %v2802
      %v3015 = vpop.f32.mrb[0].mxu0
      %v3016 = vadd.f32 %v2824, %v3015
      %v3017 = vpop.f32.mrb[0].mxu0
      %v3018 = vadd.f32 %v2828, %v3017
      %v3019 = vpop.f32.mrb[0].mxu0
      %v3020 = vadd.f32 %v2824, %v3019
      %v3021 = vpop.f32.mrb[0].mxu0
      %v3022 = vadd.f32 %v2828, %v3021
      %3023 = vdwg.mxu0
      %v3024 = vmax.f32 %v2946, 0.0
      %v3025 = vmax.f32 %v2948, 0.0
      %v3026 = vmax.f32 %v2950, 0.0
      %v3027 = vmax.f32 %v2952, 0.0
      %v3028 = vmax.f32 %v2956, 0.0
      %v3029 = vmax.f32 %v2958, 0.0
      %v3030 = vmax.f32 %v2960, 0.0
      %v3031 = vmax.f32 %v2962, 0.0
      %v3032 = vmax.f32 %v2966, 0.0
      %v3033 = vmax.f32 %v2968, 0.0
      %v3034 = vmax.f32 %v2970, 0.0
      %v3035 = vmax.f32 %v2972, 0.0
      %v3036 = vmax.f32 %v2976, 0.0
      %v3037 = vmax.f32 %v2978, 0.0
      %v3038 = vmax.f32 %v2980, 0.0
      %v3039 = vmax.f32 %v2982, 0.0
      %v3040 = vmax.f32 %v2986, 0.0
      %v3041 = vmax.f32 %v2988, 0.0
      %v3042 = vmax.f32 %v2990, 0.0
      %v3043 = vmax.f32 %v2992, 0.0
      %v3044 = vmax.f32 %v2996, 0.0
      %v3045 = vmax.f32 %v2998, 0.0
      %v3046 = vmax.f32 %v3000, 0.0
      %v3047 = vmax.f32 %v3002, 0.0
      %v3048 = vmax.f32 %v3006, 0.0
      %v3049 = vmax.f32 %v3008, 0.0
      %v3050 = vmax.f32 %v3010, 0.0
      %v3051 = vmax.f32 %v3012, 0.0
      %v3052 = vmax.f32 %v3016, 0.0
      %v3053 = vmax.f32 %v3018, 0.0
      %v3054 = vmax.f32 %v3020, 0.0
      %v3055 = vmax.f32 %v3022, 0.0
      %v3056 = vpack.c.bf16 %v3026, %v3024
      %v3057 = vpack.c.bf16 %v3027, %v3025
      %v3058 = vpack.c.bf16 %v3030, %v3028
      %v3059 = vpack.c.bf16 %v3031, %v3029
      %v3060 = vpack.c.bf16 %v3034, %v3032
      %v3061 = vpack.c.bf16 %v3035, %v3033
      %v3062 = vpack.c.bf16 %v3038, %v3036
      %v3063 = vpack.c.bf16 %v3039, %v3037
      %v3064 = vpack.c.bf16 %v3042, %v3040
      %v3065 = vpack.c.bf16 %v3043, %v3041
      %v3066 = vpack.c.bf16 %v3046, %v3044
      %v3067 = vpack.c.bf16 %v3047, %v3045
      %v3068 = vpack.c.bf16 %v3050, %v3048
      %v3069 = vpack.c.bf16 %v3051, %v3049
      %v3070 = vpack.c.bf16 %v3054, %v3052
      %v3071 = vpack.c.bf16 %v3055, %v3053
      %v3072 = vld [vmem:[%s12] sm:$0xff]
      %v3073 = vld [vmem:[%s12 + $0x8] sm:$0xff]
      %v3074 = vld [vmem:[%s12 + $0x10] sm:$0xff]
      %v3075 = vld [vmem:[%s12 + $0x18] sm:$0xf]
      %v3076 = vld [vmem:[%s12 + $0x1c] sm:$0xff]
      %v3077 = vld [vmem:[%s12 + $0x24] sm:$0xff]
      %v3078 = vld [vmem:[%s12 + $0x2c] sm:$0xff]
      %v3079 = vld [vmem:[%s12 + $0x34] sm:$0xf]
      %v3080 = vld [vmem:[%s12 + $0x38] sm:$0xff]
      %v3081 = vld [vmem:[%s12 + $0x40] sm:$0xff]
      %v3082 = vld [vmem:[%s12 + $0x48] sm:$0xff]
      %v3083 = vld [vmem:[%s12 + $0x50] sm:$0xf]
      %v3084 = vld [vmem:[%s12 + $0x54] sm:$0xff]
      %v3085 = vld [vmem:[%s12 + $0x5c] sm:$0xff]
      %v3086 = vld [vmem:[%s12 + $0x64] sm:$0xff]
      %v3087 = vld [vmem:[%s12 + $0x6c] sm:$0xf]
      %v3088 = vld [vmem:[%s12 + $0x70] sm:$0xff]
      %v3089 = vld [vmem:[%s12 + $0x78] sm:$0xff]
      %v3090 = vld [vmem:[%s12 + $0x80] sm:$0xff]
      %v3091 = vld [vmem:[%s12 + $0x88] sm:$0xf]
      %v3092 = vld [vmem:[%s12 + $0x8c] sm:$0xff]
      %v3093 = vld [vmem:[%s12 + $0x94] sm:$0xff]
      %v3094 = vld [vmem:[%s12 + $0x9c] sm:$0xff]
      %v3095 = vld [vmem:[%s12 + $0xa4] sm:$0xf]
      %v3096 = vld [vmem:[%s12 + $0xa8] sm:$0xff]
      %v3097 = vld [vmem:[%s12 + $0xb0] sm:$0xff]
      %v3098 = vld [vmem:[%s12 + $0xb8] sm:$0xff]
      %v3099 = vld [vmem:[%s12 + $0xc0] sm:$0xf]
      %v3100 = vld [vmem:[%s12 + $0xc4] sm:$0xff]
      %v3101 = vld [vmem:[%s12 + $0xcc] sm:$0xff]
      %v3102 = vld [vmem:[%s12 + $0xd4] sm:$0xff]
      %v3103 = vld [vmem:[%s12 + $0xdc] sm:$0xf]
      %v3104 = vld [vmem:[%s12 + $0xe0] sm:$0xff]
      %v3105 = vld [vmem:[%s12 + $0xe8] sm:$0xff]
      %v3106 = vld [vmem:[%s12 + $0xf0] sm:$0xff]
      %v3107 = vld [vmem:[%s12 + $0xf8] sm:$0xf]
      %v3108 = vld [vmem:[%s12 + $0xfc] sm:$0xff]
      %v3109 = vld [vmem:[%s12 + $0x104] sm:$0xff]
      %v3110 = vld [vmem:[%s12 + $0x10c] sm:$0xff]
      %v3111 = vld [vmem:[%s12 + $0x114] sm:$0xf]
      %v3112 = vld [vmem:[%s12 + $0x118] sm:$0xff]
      %v3113 = vld [vmem:[%s12 + $0x120] sm:$0xff]
      %v3114 = vld [vmem:[%s12 + $0x128] sm:$0xff]
      %v3115 = vld [vmem:[%s12 + $0x130] sm:$0xf]
      %v3116 = vld [vmem:[%s12 + $0x134] sm:$0xff]
      %v3117 = vld [vmem:[%s12 + $0x13c] sm:$0xff]
      %v3118 = vld [vmem:[%s12 + $0x144] sm:$0xff]
      %v3119 = vld [vmem:[%s12 + $0x14c] sm:$0xf]
      %v3120 = vld [vmem:[%s12 + $0x150] sm:$0xff]
      %v3121 = vld [vmem:[%s12 + $0x158] sm:$0xff]
      %v3122 = vld [vmem:[%s12 + $0x160] sm:$0xff]
      %v3123 = vld [vmem:[%s12 + $0x168] sm:$0xf]
      %v3124 = vld [vmem:[%s12 + $0x16c] sm:$0xff]
      %v3125 = vld [vmem:[%s12 + $0x174] sm:$0xff]
      %v3126 = vld [vmem:[%s12 + $0x17c] sm:$0xff]
      %v3127 = vld [vmem:[%s12 + $0x184] sm:$0xf]
      %v3128 = vld [vmem:[%s12 + $0x188] sm:$0xff]
      %v3129 = vld [vmem:[%s12 + $0x190] sm:$0xff]
      %v3130 = vld [vmem:[%s12 + $0x198] sm:$0xff]
      %v3131 = vld [vmem:[%s12 + $0x1a0] sm:$0xf]
      %v3132 = vld [vmem:[%s12 + $0x1a4] sm:$0xff]
      %v3133 = vld [vmem:[%s12 + $0x1ac] sm:$0xff]
      %v3134 = vld [vmem:[%s12 + $0x1b4] sm:$0xff]
      %v3135 = vld [vmem:[%s12 + $0x1bc] sm:$0xf]
      %v3136 = vld [vmem:[%s12 + $0x1c0] sm:$0xff]
      %v3137 = vld [vmem:[%s12 + $0x1c8] sm:$0xff]
      %v3138 = vld [vmem:[%s12 + $0x1d0] sm:$0xff]
      %v3139 = vld [vmem:[%s12 + $0x1d8] sm:$0xf]
      %v3140 = vld [vmem:[%s12 + $0x1dc] sm:$0xff]
      %v3141 = vld [vmem:[%s12 + $0x1e4] sm:$0xff]
      %v3142 = vld [vmem:[%s12 + $0x1ec] sm:$0xff]
      %v3143 = vld [vmem:[%s12 + $0x1f4] sm:$0xf]
      %v3144 = vld [vmem:[%s12 + $0x1f8] sm:$0xff]
      %v3145 = vld [vmem:[%s12 + $0x200] sm:$0xff]
      %v3146 = vld [vmem:[%s12 + $0x208] sm:$0xff]
      %v3147 = vld [vmem:[%s12 + $0x210] sm:$0xf]
      %v3148 = vld [vmem:[%s12 + $0x214] sm:$0xff]
      %v3149 = vld [vmem:[%s12 + $0x21c] sm:$0xff]
      %v3150 = vld [vmem:[%s12 + $0x224] sm:$0xff]
      %v3151 = vld [vmem:[%s12 + $0x22c] sm:$0xf]
      %v3152 = vld [vmem:[%s12 + $0x230] sm:$0xff]
      %v3153 = vld [vmem:[%s12 + $0x238] sm:$0xff]
      %v3154 = vld [vmem:[%s12 + $0x240] sm:$0xff]
      %v3155 = vld [vmem:[%s12 + $0x248] sm:$0xf]
      %v3156 = vld [vmem:[%s12 + $0x24c] sm:$0xff]
      %v3157 = vld [vmem:[%s12 + $0x254] sm:$0xff]
      %v3158 = vld [vmem:[%s12 + $0x25c] sm:$0xff]
      %v3159 = vld [vmem:[%s12 + $0x264] sm:$0xf]
      %v3160 = vld [vmem:[%s12 + $0x268] sm:$0xff]
      %v3161 = vld [vmem:[%s12 + $0x270] sm:$0xff]
      %v3162 = vld [vmem:[%s12 + $0x278] sm:$0xff]
      %v3163 = vld [vmem:[%s12 + $0x280] sm:$0xf]
      %v3164 = vld [vmem:[%s12 + $0x284] sm:$0xff]
      %v3165 = vld [vmem:[%s12 + $0x28c] sm:$0xff]
      %v3166 = vld [vmem:[%s12 + $0x294] sm:$0xff]
      %v3167 = vld [vmem:[%s12 + $0x29c] sm:$0xf]
      %v3168 = vld [vmem:[%s12 + $0x2a0] sm:$0xff]
      %v3169 = vld [vmem:[%s12 + $0x2a8] sm:$0xff]
      %v3170 = vld [vmem:[%s12 + $0x2b0] sm:$0xff]
      %v3171 = vld [vmem:[%s12 + $0x2b8] sm:$0xf]
      %v3172 = vld [vmem:[%s12 + $0x2bc] sm:$0xff]
      %v3173 = vld [vmem:[%s12 + $0x2c4] sm:$0xff]
      %v3174 = vld [vmem:[%s12 + $0x2cc] sm:$0xff]
      %v3175 = vld [vmem:[%s12 + $0x2d4] sm:$0xf]
      %v3176 = vld [vmem:[%s12 + $0x2d8] sm:$0xff]
      %v3177 = vld [vmem:[%s12 + $0x2e0] sm:$0xff]
      %v3178 = vld [vmem:[%s12 + $0x2e8] sm:$0xff]
      %v3179 = vld [vmem:[%s12 + $0x2f0] sm:$0xf]
      %v3180 = vld [vmem:[%s12 + $0x2f4] sm:$0xff]
      %v3181 = vld [vmem:[%s12 + $0x2fc] sm:$0xff]
      %v3182 = vld [vmem:[%s12 + $0x304] sm:$0xff]
      %v3183 = vld [vmem:[%s12 + $0x30c] sm:$0xf]
      %v3184 = vld [vmem:[%s12 + $0x310] sm:$0xff]
      %v3185 = vld [vmem:[%s12 + $0x318] sm:$0xff]
      %v3186 = vld [vmem:[%s12 + $0x320] sm:$0xff]
      %v3187 = vld [vmem:[%s12 + $0x328] sm:$0xf]
      %v3188 = vld [vmem:[%s12 + $0x32c] sm:$0xff]
      %v3189 = vld [vmem:[%s12 + $0x334] sm:$0xff]
      %v3190 = vld [vmem:[%s12 + $0x33c] sm:$0xff]
      %v3191 = vld [vmem:[%s12 + $0x344] sm:$0xf]
      %v3192 = vld [vmem:[%s12 + $0x348] sm:$0xff]
      %v3193 = vld [vmem:[%s12 + $0x350] sm:$0xff]
      %v3194 = vld [vmem:[%s12 + $0x358] sm:$0xff]
      %v3195 = vld [vmem:[%s12 + $0x360] sm:$0xf]
      %v3196 = vld [vmem:[%s12 + $0x364] sm:$0xff]
      %v3197 = vld [vmem:[%s12 + $0x36c] sm:$0xff]
      %v3198 = vld [vmem:[%s12 + $0x374] sm:$0xff]
      %v3199 = vld [vmem:[%s12 + $0x37c] sm:$0xf]
      %v3200 = vld [vmem:[%s13] sm:$0xff]
      %v3202 = vlaneseq
      %v3203 = vshrl.u32 %v3202, 7
      %v3204 = vsub.s32 0, %v3203
      %v3205 = vrot.slane %v3200, %v3204
      %v3206 = vlaneseq
      %v3207 = vshrl.u32 %v3206, 7
      %v3208 = vsub.s32 1, %v3207
      %v3209 = vrot.slane %v3200, %v3208
      %v3210 = vlaneseq
      %v3211 = vshrl.u32 %v3210, 7
      %v3212 = vsub.s32 2, %v3211
      %v3213 = vrot.slane %v3200, %v3212
      %v3214 = vlaneseq
      %v3215 = vshrl.u32 %v3214, 7
      %v3216 = vsub.s32 3, %v3215
      %v3217 = vrot.slane %v3200, %v3216
      %v3218 = vlaneseq
      %v3219 = vshrl.u32 %v3218, 7
      %v3220 = vsub.s32 4, %v3219
      %v3221 = vrot.slane %v3200, %v3220
      %v3222 = vlaneseq
      %v3223 = vshrl.u32 %v3222, 7
      %v3224 = vsub.s32 5, %v3223
      %v3225 = vrot.slane %v3200, %v3224
      %v3226 = vlaneseq
      %v3227 = vshrl.u32 %v3226, 7
      %v3228 = vsub.s32 6, %v3227
      %v3229 = vrot.slane %v3200, %v3228
      %v3365 = vunpack.c.l.b16 %v3072
      %v3366 = vunpack.c.h.b16 %v3072
      %v3367 = vunpack.c.l.b16 %v3073
      %v3368 = vunpack.c.h.b16 %v3073
      %v3369 = vunpack.c.l.b16 %v3074
      %v3370 = vunpack.c.h.b16 %v3074
      %v3371 = vunpack.c.l.b16 %v3075
      %v3372 = vunpack.c.l.b16 %v3076
      %v3373 = vunpack.c.h.b16 %v3076
      %v3374 = vunpack.c.l.b16 %v3077
      %v3375 = vunpack.c.h.b16 %v3077
      %v3376 = vunpack.c.l.b16 %v3078
      %v3377 = vunpack.c.h.b16 %v3078
      %v3378 = vunpack.c.l.b16 %v3079
      %v3379 = vunpack.c.l.b16 %v3080
      %v3380 = vunpack.c.h.b16 %v3080
      %v3381 = vunpack.c.l.b16 %v3081
      %v3382 = vunpack.c.h.b16 %v3081
      %v3383 = vunpack.c.l.b16 %v3082
      %v3384 = vunpack.c.h.b16 %v3082
      %v3385 = vunpack.c.l.b16 %v3083
      %v3386 = vunpack.c.l.b16 %v3084
      %v3387 = vunpack.c.h.b16 %v3084
      %v3388 = vunpack.c.l.b16 %v3085
      %v3389 = vunpack.c.h.b16 %v3085
      %v3390 = vunpack.c.l.b16 %v3086
      %v3391 = vunpack.c.h.b16 %v3086
      %v3392 = vunpack.c.l.b16 %v3087
      %v3393 = vunpack.c.l.b16 %v3088
      %v3394 = vunpack.c.h.b16 %v3088
      %v3395 = vunpack.c.l.b16 %v3089
      %v3396 = vunpack.c.h.b16 %v3089
      %v3397 = vunpack.c.l.b16 %v3090
      %v3398 = vunpack.c.h.b16 %v3090
      %v3399 = vunpack.c.l.b16 %v3091
      %v3400 = vunpack.c.l.b16 %v3092
      %v3401 = vunpack.c.h.b16 %v3092
      %v3402 = vunpack.c.l.b16 %v3093
      %v3403 = vunpack.c.h.b16 %v3093
      %v3404 = vunpack.c.l.b16 %v3094
      %v3405 = vunpack.c.h.b16 %v3094
      %v3406 = vunpack.c.l.b16 %v3095
      %v3407 = vunpack.c.l.b16 %v3096
      %v3408 = vunpack.c.h.b16 %v3096
      %v3409 = vunpack.c.l.b16 %v3097
      %v3410 = vunpack.c.h.b16 %v3097
      %v3411 = vunpack.c.l.b16 %v3098
      %v3412 = vunpack.c.h.b16 %v3098
      %v3413 = vunpack.c.l.b16 %v3099
      %v3414 = vunpack.c.l.b16 %v3100
      %v3415 = vunpack.c.h.b16 %v3100
      %v3416 = vunpack.c.l.b16 %v3101
      %v3417 = vunpack.c.h.b16 %v3101
      %v3418 = vunpack.c.l.b16 %v3102
      %v3419 = vunpack.c.h.b16 %v3102
      %v3420 = vunpack.c.l.b16 %v3103
      %v3421 = vunpack.c.l.b16 %v3104
      %v3422 = vunpack.c.h.b16 %v3104
      %v3423 = vunpack.c.l.b16 %v3105
      %v3424 = vunpack.c.h.b16 %v3105
      %v3425 = vunpack.c.l.b16 %v3106
      %v3426 = vunpack.c.h.b16 %v3106
      %v3427 = vunpack.c.l.b16 %v3107
      %v3428 = vunpack.c.l.b16 %v3108
      %v3429 = vunpack.c.h.b16 %v3108
      %v3430 = vunpack.c.l.b16 %v3109
      %v3431 = vunpack.c.h.b16 %v3109
      %v3432 = vunpack.c.l.b16 %v3110
      %v3433 = vunpack.c.h.b16 %v3110
      %v3434 = vunpack.c.l.b16 %v3111
      %v3435 = vunpack.c.l.b16 %v3112
      %v3436 = vunpack.c.h.b16 %v3112
      %v3437 = vunpack.c.l.b16 %v3113
      %v3438 = vunpack.c.h.b16 %v3113
      %v3439 = vunpack.c.l.b16 %v3114
      %v3440 = vunpack.c.h.b16 %v3114
      %v3441 = vunpack.c.l.b16 %v3115
      %v3442 = vunpack.c.l.b16 %v3116
      %v3443 = vunpack.c.h.b16 %v3116
      %v3444 = vunpack.c.l.b16 %v3117
      %v3445 = vunpack.c.h.b16 %v3117
      %v3446 = vunpack.c.l.b16 %v3118
      %v3447 = vunpack.c.h.b16 %v3118
      %v3448 = vunpack.c.l.b16 %v3119
      %v3449 = vunpack.c.l.b16 %v3120
      %v3450 = vunpack.c.h.b16 %v3120
      %v3451 = vunpack.c.l.b16 %v3121
      %v3452 = vunpack.c.h.b16 %v3121
      %v3453 = vunpack.c.l.b16 %v3122
      %v3454 = vunpack.c.h.b16 %v3122
      %v3455 = vunpack.c.l.b16 %v3123
      %v3456 = vunpack.c.l.b16 %v3124
      %v3457 = vunpack.c.h.b16 %v3124
      %v3458 = vunpack.c.l.b16 %v3125
      %v3459 = vunpack.c.h.b16 %v3125
      %v3460 = vunpack.c.l.b16 %v3126
      %v3461 = vunpack.c.h.b16 %v3126
      %v3462 = vunpack.c.l.b16 %v3127
      %v3463 = vunpack.c.l.b16 %v3128
      %v3464 = vunpack.c.h.b16 %v3128
      %v3465 = vunpack.c.l.b16 %v3129
      %v3466 = vunpack.c.h.b16 %v3129
      %v3467 = vunpack.c.l.b16 %v3130
      %v3468 = vunpack.c.h.b16 %v3130
      %v3469 = vunpack.c.l.b16 %v3131
      %v3470 = vunpack.c.l.b16 %v3132
      %v3471 = vunpack.c.h.b16 %v3132
      %v3472 = vunpack.c.l.b16 %v3133
      %v3473 = vunpack.c.h.b16 %v3133
      %v3474 = vunpack.c.l.b16 %v3134
      %v3475 = vunpack.c.h.b16 %v3134
      %v3476 = vunpack.c.l.b16 %v3135
      %v3477 = vunpack.c.l.b16 %v3136
      %v3478 = vunpack.c.h.b16 %v3136
      %v3479 = vunpack.c.l.b16 %v3137
      %v3480 = vunpack.c.h.b16 %v3137
      %v3481 = vunpack.c.l.b16 %v3138
      %v3482 = vunpack.c.h.b16 %v3138
      %v3483 = vunpack.c.l.b16 %v3139
      %v3484 = vunpack.c.l.b16 %v3140
      %v3485 = vunpack.c.h.b16 %v3140
      %v3486 = vunpack.c.l.b16 %v3141
      %v3487 = vunpack.c.h.b16 %v3141
      %v3488 = vunpack.c.l.b16 %v3142
      %v3489 = vunpack.c.h.b16 %v3142
      %v3490 = vunpack.c.l.b16 %v3143
      %v3491 = vunpack.c.l.b16 %v3144
      %v3492 = vunpack.c.h.b16 %v3144
      %v3493 = vunpack.c.l.b16 %v3145
      %v3494 = vunpack.c.h.b16 %v3145
      %v3495 = vunpack.c.l.b16 %v3146
      %v3496 = vunpack.c.h.b16 %v3146
      %v3497 = vunpack.c.l.b16 %v3147
      %v3498 = vunpack.c.l.b16 %v3148
      %v3499 = vunpack.c.h.b16 %v3148
      %v3500 = vunpack.c.l.b16 %v3149
      %v3501 = vunpack.c.h.b16 %v3149
      %v3502 = vunpack.c.l.b16 %v3150
      %v3503 = vunpack.c.h.b16 %v3150
      %v3504 = vunpack.c.l.b16 %v3151
      %v3505 = vunpack.c.l.b16 %v3152
      %v3506 = vunpack.c.h.b16 %v3152
      %v3507 = vunpack.c.l.b16 %v3153
      %v3508 = vunpack.c.h.b16 %v3153
      %v3509 = vunpack.c.l.b16 %v3154
      %v3510 = vunpack.c.h.b16 %v3154
      %v3511 = vunpack.c.l.b16 %v3155
      %v3512 = vunpack.c.l.b16 %v3156
      %v3513 = vunpack.c.h.b16 %v3156
      %v3514 = vunpack.c.l.b16 %v3157
      %v3515 = vunpack.c.h.b16 %v3157
      %v3516 = vunpack.c.l.b16 %v3158
      %v3517 = vunpack.c.h.b16 %v3158
      %v3518 = vunpack.c.l.b16 %v3159
      %v3519 = vunpack.c.l.b16 %v3160
      %v3520 = vunpack.c.h.b16 %v3160
      %v3521 = vunpack.c.l.b16 %v3161
      %v3522 = vunpack.c.h.b16 %v3161
      %v3523 = vunpack.c.l.b16 %v3162
      %v3524 = vunpack.c.h.b16 %v3162
      %v3525 = vunpack.c.l.b16 %v3163
      %v3526 = vunpack.c.l.b16 %v3164
      %v3527 = vunpack.c.h.b16 %v3164
      %v3528 = vunpack.c.l.b16 %v3165
      %v3529 = vunpack.c.h.b16 %v3165
      %v3530 = vunpack.c.l.b16 %v3166
      %v3531 = vunpack.c.h.b16 %v3166
      %v3532 = vunpack.c.l.b16 %v3167
      %v3533 = vunpack.c.l.b16 %v3168
      %v3534 = vunpack.c.h.b16 %v3168
      %v3535 = vunpack.c.l.b16 %v3169
      %v3536 = vunpack.c.h.b16 %v3169
      %v3537 = vunpack.c.l.b16 %v3170
      %v3538 = vunpack.c.h.b16 %v3170
      %v3539 = vunpack.c.l.b16 %v3171
      %v3540 = vunpack.c.l.b16 %v3172
      %v3541 = vunpack.c.h.b16 %v3172
      %v3542 = vunpack.c.l.b16 %v3173
      %v3543 = vunpack.c.h.b16 %v3173
      %v3544 = vunpack.c.l.b16 %v3174
      %v3545 = vunpack.c.h.b16 %v3174
      %v3546 = vunpack.c.l.b16 %v3175
      %v3547 = vunpack.c.l.b16 %v3176
      %v3548 = vunpack.c.h.b16 %v3176
      %v3549 = vunpack.c.l.b16 %v3177
      %v3550 = vunpack.c.h.b16 %v3177
      %v3551 = vunpack.c.l.b16 %v3178
      %v3552 = vunpack.c.h.b16 %v3178
      %v3553 = vunpack.c.l.b16 %v3179
      %v3554 = vunpack.c.l.b16 %v3180
      %v3555 = vunpack.c.h.b16 %v3180
      %v3556 = vunpack.c.l.b16 %v3181
      %v3557 = vunpack.c.h.b16 %v3181
      %v3558 = vunpack.c.l.b16 %v3182
      %v3559 = vunpack.c.h.b16 %v3182
      %v3560 = vunpack.c.l.b16 %v3183
      %v3561 = vunpack.c.l.b16 %v3184
      %v3562 = vunpack.c.h.b16 %v3184
      %v3563 = vunpack.c.l.b16 %v3185
      %v3564 = vunpack.c.h.b16 %v3185
      %v3565 = vunpack.c.l.b16 %v3186
      %v3566 = vunpack.c.h.b16 %v3186
      %v3567 = vunpack.c.l.b16 %v3187
      %v3568 = vunpack.c.l.b16 %v3188
      %v3569 = vunpack.c.h.b16 %v3188
      %v3570 = vunpack.c.l.b16 %v3189
      %v3571 = vunpack.c.h.b16 %v3189
      %v3572 = vunpack.c.l.b16 %v3190
      %v3573 = vunpack.c.h.b16 %v3190
      %v3574 = vunpack.c.l.b16 %v3191
      %v3575 = vunpack.c.l.b16 %v3192
      %v3576 = vunpack.c.h.b16 %v3192
      %v3577 = vunpack.c.l.b16 %v3193
      %v3578 = vunpack.c.h.b16 %v3193
      %v3579 = vunpack.c.l.b16 %v3194
      %v3580 = vunpack.c.h.b16 %v3194
      %v3581 = vunpack.c.l.b16 %v3195
      %v3582 = vunpack.c.l.b16 %v3196
      %v3583 = vunpack.c.h.b16 %v3196
      %v3584 = vunpack.c.l.b16 %v3197
      %v3585 = vunpack.c.h.b16 %v3197
      %v3586 = vunpack.c.l.b16 %v3198
      %v3587 = vunpack.c.h.b16 %v3198
      %v3588 = vunpack.c.l.b16 %v3199
      %v3589 = vpack.c.b16 %v3372, %v3365
      %v3590 = vpack.c.b16 %v3373, %v3366
      %v3591 = vpack.c.b16 %v3374, %v3367
      %v3592 = vpack.c.b16 %v3375, %v3368
      %v3593 = vpack.c.b16 %v3376, %v3369
      %v3594 = vpack.c.b16 %v3377, %v3370
      %v3595 = vpack.c.b16 %v3378, %v3371
      %v3596 = vpack.c.b16 %v3386, %v3379
      %v3597 = vpack.c.b16 %v3387, %v3380
      %v3598 = vpack.c.b16 %v3388, %v3381
      %v3599 = vpack.c.b16 %v3389, %v3382
      %v3600 = vpack.c.b16 %v3390, %v3383
      %v3601 = vpack.c.b16 %v3391, %v3384
      %v3602 = vpack.c.b16 %v3392, %v3385
      %v3603 = vpack.c.b16 %v3400, %v3393
      %v3604 = vpack.c.b16 %v3401, %v3394
      %v3605 = vpack.c.b16 %v3402, %v3395
      %v3606 = vpack.c.b16 %v3403, %v3396
      %v3607 = vpack.c.b16 %v3404, %v3397
      %v3608 = vpack.c.b16 %v3405, %v3398
      %v3609 = vpack.c.b16 %v3406, %v3399
      %v3610 = vpack.c.b16 %v3414, %v3407
      %v3611 = vpack.c.b16 %v3415, %v3408
      %v3612 = vpack.c.b16 %v3416, %v3409
      %v3613 = vpack.c.b16 %v3417, %v3410
      %v3614 = vpack.c.b16 %v3418, %v3411
      %v3615 = vpack.c.b16 %v3419, %v3412
      %v3616 = vpack.c.b16 %v3420, %v3413
      %v3617 = vpack.c.b16 %v3428, %v3421
      %v3618 = vpack.c.b16 %v3429, %v3422
      %v3619 = vpack.c.b16 %v3430, %v3423
      %v3620 = vpack.c.b16 %v3431, %v3424
      %v3621 = vpack.c.b16 %v3432, %v3425
      %v3622 = vpack.c.b16 %v3433, %v3426
      %v3623 = vpack.c.b16 %v3434, %v3427
      %v3624 = vpack.c.b16 %v3442, %v3435
      %v3625 = vpack.c.b16 %v3443, %v3436
      %v3626 = vpack.c.b16 %v3444, %v3437
      %v3627 = vpack.c.b16 %v3445, %v3438
      %v3628 = vpack.c.b16 %v3446, %v3439
      %v3629 = vpack.c.b16 %v3447, %v3440
      %v3630 = vpack.c.b16 %v3448, %v3441
      %v3631 = vpack.c.b16 %v3456, %v3449
      %v3632 = vpack.c.b16 %v3457, %v3450
      %v3633 = vpack.c.b16 %v3458, %v3451
      %v3634 = vpack.c.b16 %v3459, %v3452
      %v3635 = vpack.c.b16 %v3460, %v3453
      %v3636 = vpack.c.b16 %v3461, %v3454
      %v3637 = vpack.c.b16 %v3462, %v3455
      %v3638 = vpack.c.b16 %v3470, %v3463
      %v3639 = vpack.c.b16 %v3471, %v3464
      %v3640 = vpack.c.b16 %v3472, %v3465
      %v3641 = vpack.c.b16 %v3473, %v3466
      %v3642 = vpack.c.b16 %v3474, %v3467
      %v3643 = vpack.c.b16 %v3475, %v3468
      %v3644 = vpack.c.b16 %v3476, %v3469
      %v3645 = vpack.c.b16 %v3484, %v3477
      %v3646 = vpack.c.b16 %v3485, %v3478
      %v3647 = vpack.c.b16 %v3486, %v3479
      %v3648 = vpack.c.b16 %v3487, %v3480
      %v3649 = vpack.c.b16 %v3488, %v3481
      %v3650 = vpack.c.b16 %v3489, %v3482
      %v3651 = vpack.c.b16 %v3490, %v3483
      %v3652 = vpack.c.b16 %v3498, %v3491
      %v3653 = vpack.c.b16 %v3499, %v3492
      %v3654 = vpack.c.b16 %v3500, %v3493
      %v3655 = vpack.c.b16 %v3501, %v3494
      %v3656 = vpack.c.b16 %v3502, %v3495
      %v3657 = vpack.c.b16 %v3503, %v3496
      %v3658 = vpack.c.b16 %v3504, %v3497
      %v3659 = vpack.c.b16 %v3512, %v3505
      %v3660 = vpack.c.b16 %v3513, %v3506
      %v3661 = vpack.c.b16 %v3514, %v3507
      %v3662 = vpack.c.b16 %v3515, %v3508
      %v3663 = vpack.c.b16 %v3516, %v3509
      %v3664 = vpack.c.b16 %v3517, %v3510
      %v3665 = vpack.c.b16 %v3518, %v3511
      %v3666 = vpack.c.b16 %v3526, %v3519
      %v3667 = vpack.c.b16 %v3527, %v3520
      %v3668 = vpack.c.b16 %v3528, %v3521
      %v3669 = vpack.c.b16 %v3529, %v3522
      %v3670 = vpack.c.b16 %v3530, %v3523
      %v3671 = vpack.c.b16 %v3531, %v3524
      %v3672 = vpack.c.b16 %v3532, %v3525
      %v3673 = vpack.c.b16 %v3540, %v3533
      %v3674 = vpack.c.b16 %v3541, %v3534
      %v3675 = vpack.c.b16 %v3542, %v3535
      %v3676 = vpack.c.b16 %v3543, %v3536
      %v3677 = vpack.c.b16 %v3544, %v3537
      %v3678 = vpack.c.b16 %v3545, %v3538
      %v3679 = vpack.c.b16 %v3546, %v3539
      %v3680 = vpack.c.b16 %v3554, %v3547
      %v3681 = vpack.c.b16 %v3555, %v3548
      %v3682 = vpack.c.b16 %v3556, %v3549
      %v3683 = vpack.c.b16 %v3557, %v3550
      %v3684 = vpack.c.b16 %v3558, %v3551
      %v3685 = vpack.c.b16 %v3559, %v3552
      %v3686 = vpack.c.b16 %v3560, %v3553
      %v3687 = vpack.c.b16 %v3568, %v3561
      %v3688 = vpack.c.b16 %v3569, %v3562
      %v3689 = vpack.c.b16 %v3570, %v3563
      %v3690 = vpack.c.b16 %v3571, %v3564
      %v3691 = vpack.c.b16 %v3572, %v3565
      %v3692 = vpack.c.b16 %v3573, %v3566
      %v3693 = vpack.c.b16 %v3574, %v3567
      %v3694 = vpack.c.b16 %v3582, %v3575
      %v3695 = vpack.c.b16 %v3583, %v3576
      %v3696 = vpack.c.b16 %v3584, %v3577
      %v3697 = vpack.c.b16 %v3585, %v3578
      %v3698 = vpack.c.b16 %v3586, %v3579
      %v3699 = vpack.c.b16 %v3587, %v3580
      %v3700 = vpack.c.b16 %v3588, %v3581
      %3813 = vmatprep.subr.bf16.mxu0 %v3590
      %3814 = vmatpush1.bf16.msra.mxu0 %v3589
      %3815 = vmatprep.subr.bf16.mxu0 %v3597
      %3816 = vmatpush1.bf16.msra.mxu0 %v3596
      %3817 = vmatprep.subr.bf16.mxu0 %v3604
      %3818 = vmatpush1.bf16.msra.mxu0 %v3603
      %3819 = vmatprep.subr.bf16.mxu0 %v3611
      %3820 = vmatpush1.bf16.msra.mxu0 %v3610
      %3821 = vmatprep.subr.bf16.mxu0 %v3618
      %3822 = vmatpush1.bf16.msra.mxu0 %v3617
      %3823 = vmatprep.subr.bf16.mxu0 %v3625
      %3824 = vmatpush1.bf16.msra.mxu0 %v3624
      %3825 = vmatprep.subr.bf16.mxu0 %v3632
      %3826 = vmatpush1.bf16.msra.mxu0 %v3631
      %3827 = vmatprep.subr.bf16.mxu0 %v3639
      %3828 = vmatpush1.bf16.msra.mxu0 %v3638
      %3829 = vmatprep.subr.bf16.mxu0 %v3646
      %3830 = vmatpush1.bf16.msra.mxu0 %v3645
      %3831 = vmatprep.subr.bf16.mxu0 %v3653
      %3832 = vmatpush1.bf16.msra.mxu0 %v3652
      %3833 = vmatprep.subr.bf16.mxu0 %v3660
      %3834 = vmatpush1.bf16.msra.mxu0 %v3659
      %3835 = vmatprep.subr.bf16.mxu0 %v3667
      %3836 = vmatpush1.bf16.msra.mxu0 %v3666
      %3837 = vmatprep.subr.bf16.mxu0 %v3674
      %3838 = vmatpush1.bf16.msra.mxu0 %v3673
      %3839 = vmatprep.subr.bf16.mxu0 %v3681
      %3840 = vmatpush1.bf16.msra.mxu0 %v3680
      %3841 = vmatprep.subr.bf16.mxu0 %v3688
      %3842 = vmatpush1.bf16.msra.mxu0 %v3687
      %3843 = vmatprep.subr.bf16.mxu0 %v3695
      %3844 = vmatpush1.bf16.msra.mxu0 %v3694
      %3845 = vmatprep.mubr.bf16.mxu0 %v3057
      %3846 = vmatmul.mubr.bf16.gmra.mrb[0].mxu0 %v3056
      %v3847 = vpop.f32.mrb[0].mxu0
      %v3848 = vadd.f32 %v3205, %v3847
      %v3849 = vpop.f32.mrb[0].mxu0
      %v3850 = vadd.f32 %v3209, %v3849
      %v3851 = vpop.f32.mrb[0].mxu0
      %v3852 = vadd.f32 %v3205, %v3851
      %v3853 = vpop.f32.mrb[0].mxu0
      %v3854 = vadd.f32 %v3209, %v3853
      %3855 = vmatprep.mubr.bf16.mxu0 %v3059
      %3856 = vmatmul.mubr.bf16.gmra.mrb[0].mxu0 %v3058
      %v3857 = vpop.f32.mrb[0].mxu0
      %v3858 = vadd.f32 %v3205, %v3857
      %v3859 = vpop.f32.mrb[0].mxu0
      %v3860 = vadd.f32 %v3209, %v3859
      %v3861 = vpop.f32.mrb[0].mxu0
      %v3862 = vadd.f32 %v3205, %v3861
      %v3863 = vpop.f32.mrb[0].mxu0
      %v3864 = vadd.f32 %v3209, %v3863
      %3865 = vmatprep.mubr.bf16.mxu0 %v3061
      %3866 = vmatmul.mubr.bf16.gmra.mrb[0].mxu0 %v3060
      %v3867 = vpop.f32.mrb[0].mxu0
      %v3868 = vadd.f32 %v3205, %v3867
      %v3869 = vpop.f32.mrb[0].mxu0
      %v3870 = vadd.f32 %v3209, %v3869
      %v3871 = vpop.f32.mrb[0].mxu0
      %v3872 = vadd.f32 %v3205, %v3871
      %v3873 = vpop.f32.mrb[0].mxu0
      %v3874 = vadd.f32 %v3209, %v3873
      %3875 = vmatprep.mubr.bf16.mxu0 %v3063
      %3876 = vmatmul.mubr.bf16.gmra.mrb[0].mxu0 %v3062
      %v3877 = vpop.f32.mrb[0].mxu0
      %v3878 = vadd.f32 %v3205, %v3877
      %v3879 = vpop.f32.mrb[0].mxu0
      %v3880 = vadd.f32 %v3209, %v3879
      %v3881 = vpop.f32.mrb[0].mxu0
      %v3882 = vadd.f32 %v3205, %v3881
      %v3883 = vpop.f32.mrb[0].mxu0
      %v3884 = vadd.f32 %v3209, %v3883
      %3885 = vmatprep.mubr.bf16.mxu0 %v3065
      %3886 = vmatmul.mubr.bf16.gmra.mrb[0].mxu0 %v3064
      %v3887 = vpop.f32.mrb[0].mxu0
      %v3888 = vadd.f32 %v3205, %v3887
      %v3889 = vpop.f32.mrb[0].mxu0
      %v3890 = vadd.f32 %v3209, %v3889
      %v3891 = vpop.f32.mrb[0].mxu0
      %v3892 = vadd.f32 %v3205, %v3891
      %v3893 = vpop.f32.mrb[0].mxu0
      %v3894 = vadd.f32 %v3209, %v3893
      %3895 = vmatprep.mubr.bf16.mxu0 %v3067
      %3896 = vmatmul.mubr.bf16.gmra.mrb[0].mxu0 %v3066
      %v3897 = vpop.f32.mrb[0].mxu0
      %v3898 = vadd.f32 %v3205, %v3897
      %v3899 = vpop.f32.mrb[0].mxu0
      %v3900 = vadd.f32 %v3209, %v3899
      %v3901 = vpop.f32.mrb[0].mxu0
      %v3902 = vadd.f32 %v3205, %v3901
      %v3903 = vpop.f32.mrb[0].mxu0
      %v3904 = vadd.f32 %v3209, %v3903
      %3905 = vmatprep.mubr.bf16.mxu0 %v3069
      %3906 = vmatmul.mubr.bf16.gmra.mrb[0].mxu0 %v3068
      %v3907 = vpop.f32.mrb[0].mxu0
      %v3908 = vadd.f32 %v3205, %v3907
      %v3909 = vpop.f32.mrb[0].mxu0
      %v3910 = vadd.f32 %v3209, %v3909
      %v3911 = vpop.f32.mrb[0].mxu0
      %v3912 = vadd.f32 %v3205, %v3911
      %v3913 = vpop.f32.mrb[0].mxu0
      %v3914 = vadd.f32 %v3209, %v3913
      %3915 = vmatprep.mubr.bf16.mxu0 %v3071
      %3916 = vmatmul.mubr.bf16.gmra.mrb[0].mxu0 %v3070
      %v3917 = vpop.f32.mrb[0].mxu0
      %v3918 = vadd.f32 %v3205, %v3917
      %v3919 = vpop.f32.mrb[0].mxu0
      %v3920 = vadd.f32 %v3209, %v3919
      %v3921 = vpop.f32.mrb[0].mxu0
      %v3922 = vadd.f32 %v3205, %v3921
      %v3923 = vpop.f32.mrb[0].mxu0
      %v3924 = vadd.f32 %v3209, %v3923
      %3925 = vdwg.mxu0
      %3926 = vmatprep.subr.bf16.mxu0 %v3592
      %3927 = vmatpush1.bf16.msra.mxu0 %v3591
      %3928 = vmatprep.subr.bf16.mxu0 %v3599
      %3929 = vmatpush1.bf16.msra.mxu0 %v3598
      %3930 = vmatprep.subr.bf16.mxu0 %v3606
      %3931 = vmatpush1.bf16.msra.mxu0 %v3605
      %3932 = vmatprep.subr.bf16.mxu0 %v3613
      %3933 = vmatpush1.bf16.msra.mxu0 %v3612
      %3934 = vmatprep.subr.bf16.mxu0 %v3620
      %3935 = vmatpush1.bf16.msra.mxu0 %v3619
      %3936 = vmatprep.subr.bf16.mxu0 %v3627
      %3937 = vmatpush1.bf16.msra.mxu0 %v3626
      %3938 = vmatprep.subr.bf16.mxu0 %v3634
      %3939 = vmatpush1.bf16.msra.mxu0 %v3633
      %3940 = vmatprep.subr.bf16.mxu0 %v3641
      %3941 = vmatpush1.bf16.msra.mxu0 %v3640
      %3942 = vmatprep.subr.bf16.mxu0 %v3648
      %3943 = vmatpush1.bf16.msra.mxu0 %v3647
      %3944 = vmatprep.subr.bf16.mxu0 %v3655
      %3945 = vmatpush1.bf16.msra.mxu0 %v3654
      %3946 = vmatprep.subr.bf16.mxu0 %v3662
      %3947 = vmatpush1.bf16.msra.mxu0 %v3661
      %3948 = vmatprep.subr.bf16.mxu0 %v3669
      %3949 = vmatpush1.bf16.msra.mxu0 %v3668
      %3950 = vmatprep.subr.bf16.mxu0 %v3676
      %3951 = vmatpush1.bf16.msra.mxu0 %v3675
      %3952 = vmatprep.subr.bf16.mxu0 %v3683
      %3953 = vmatpush1.bf16.msra.mxu0 %v3682
      %3954 = vmatprep.subr.bf16.mxu0 %v3690
      %3955 = vmatpush1.bf16.msra.mxu0 %v3689
      %3956 = vmatprep.subr.bf16.mxu0 %v3697
      %3957 = vmatpush1.bf16.msra.mxu0 %v3696
      %3958 = vmatprep.mubr.bf16.mxu0 %v3057
      %3959 = vmatmul.mubr.bf16.gmra.mrb[0].mxu0 %v3056
      %v3960 = vpop.f32.mrb[0].mxu0
      %v3961 = vadd.f32 %v3213, %v3960
      %v3962 = vpop.f32.mrb[0].mxu0
      %v3963 = vadd.f32 %v3217, %v3962
      %v3964 = vpop.f32.mrb[0].mxu0
      %v3965 = vadd.f32 %v3213, %v3964
      %v3966 = vpop.f32.mrb[0].mxu0
      %v3967 = vadd.f32 %v3217, %v3966
      %3968 = vmatprep.mubr.bf16.mxu0 %v3059
      %3969 = vmatmul.mubr.bf16.gmra.mrb[0].mxu0 %v3058
      %v3970 = vpop.f32.mrb[0].mxu0
      %v3971 = vadd.f32 %v3213, %v3970
      %v3972 = vpop.f32.mrb[0].mxu0
      %v3973 = vadd.f32 %v3217, %v3972
      %v3974 = vpop.f32.mrb[0].mxu0
      %v3975 = vadd.f32 %v3213, %v3974
      %v3976 = vpop.f32.mrb[0].mxu0
      %v3977 = vadd.f32 %v3217, %v3976
      %3978 = vmatprep.mubr.bf16.mxu0 %v3061
      %3979 = vmatmul.mubr.bf16.gmra.mrb[0].mxu0 %v3060
      %v3980 = vpop.f32.mrb[0].mxu0
      %v3981 = vadd.f32 %v3213, %v3980
      %v3982 = vpop.f32.mrb[0].mxu0
      %v3983 = vadd.f32 %v3217, %v3982
      %v3984 = vpop.f32.mrb[0].mxu0
      %v3985 = vadd.f32 %v3213, %v3984
      %v3986 = vpop.f32.mrb[0].mxu0
      %v3987 = vadd.f32 %v3217, %v3986
      %3988 = vmatprep.mubr.bf16.mxu0 %v3063
      %3989 = vmatmul.mubr.bf16.gmra.mrb[0].mxu0 %v3062
      %v3990 = vpop.f32.mrb[0].mxu0
      %v3991 = vadd.f32 %v3213, %v3990
      %v3992 = vpop.f32.mrb[0].mxu0
      %v3993 = vadd.f32 %v3217, %v3992
      %v3994 = vpop.f32.mrb[0].mxu0
      %v3995 = vadd.f32 %v3213, %v3994
      %v3996 = vpop.f32.mrb[0].mxu0
      %v3997 = vadd.f32 %v3217, %v3996
      %3998 = vmatprep.mubr.bf16.mxu0 %v3065
      %3999 = vmatmul.mubr.bf16.gmra.mrb[0].mxu0 %v3064
      %v4000 = vpop.f32.mrb[0].mxu0
      %v4001 = vadd.f32 %v3213, %v4000
      %v4002 = vpop.f32.mrb[0].mxu0
      %v4003 = vadd.f32 %v3217, %v4002
      %v4004 = vpop.f32.mrb[0].mxu0
      %v4005 = vadd.f32 %v3213, %v4004
      %v4006 = vpop.f32.mrb[0].mxu0
      %v4007 = vadd.f32 %v3217, %v4006
      %4008 = vmatprep.mubr.bf16.mxu0 %v3067
      %4009 = vmatmul.mubr.bf16.gmra.mrb[0].mxu0 %v3066
      %v4010 = vpop.f32.mrb[0].mxu0
      %v4011 = vadd.f32 %v3213, %v4010
      %v4012 = vpop.f32.mrb[0].mxu0
      %v4013 = vadd.f32 %v3217, %v4012
      %v4014 = vpop.f32.mrb[0].mxu0
      %v4015 = vadd.f32 %v3213, %v4014
      %v4016 = vpop.f32.mrb[0].mxu0
      %v4017 = vadd.f32 %v3217, %v4016
      %4018 = vmatprep.mubr.bf16.mxu0 %v3069
      %4019 = vmatmul.mubr.bf16.gmra.mrb[0].mxu0 %v3068
      %v4020 = vpop.f32.mrb[0].mxu0
      %v4021 = vadd.f32 %v3213, %v4020
      %v4022 = vpop.f32.mrb[0].mxu0
      %v4023 = vadd.f32 %v3217, %v4022
      %v4024 = vpop.f32.mrb[0].mxu0
      %v4025 = vadd.f32 %v3213, %v4024
      %v4026 = vpop.f32.mrb[0].mxu0
      %v4027 = vadd.f32 %v3217, %v4026
      %4028 = vmatprep.mubr.bf16.mxu0 %v3071
      %4029 = vmatmul.mubr.bf16.gmra.mrb[0].mxu0 %v3070
      %v4030 = vpop.f32.mrb[0].mxu0
      %v4031 = vadd.f32 %v3213, %v4030
      %v4032 = vpop.f32.mrb[0].mxu0
      %v4033 = vadd.f32 %v3217, %v4032
      %v4034 = vpop.f32.mrb[0].mxu0
      %v4035 = vadd.f32 %v3213, %v4034
      %v4036 = vpop.f32.mrb[0].mxu0
      %v4037 = vadd.f32 %v3217, %v4036
      %4038 = vdwg.mxu0
      %4039 = vmatprep.subr.bf16.mxu0 %v3594
      %4040 = vmatpush1.bf16.msra.mxu0 %v3593
      %4041 = vmatprep.subr.bf16.mxu0 %v3601
      %4042 = vmatpush1.bf16.msra.mxu0 %v3600
      %4043 = vmatprep.subr.bf16.mxu0 %v3608
      %4044 = vmatpush1.bf16.msra.mxu0 %v3607
      %4045 = vmatprep.subr.bf16.mxu0 %v3615
      %4046 = vmatpush1.bf16.msra.mxu0 %v3614
      %4047 = vmatprep.subr.bf16.mxu0 %v3622
      %4048 = vmatpush1.bf16.msra.mxu0 %v3621
      %4049 = vmatprep.subr.bf16.mxu0 %v3629
      %4050 = vmatpush1.bf16.msra.mxu0 %v3628
      %4051 = vmatprep.subr.bf16.mxu0 %v3636
      %4052 = vmatpush1.bf16.msra.mxu0 %v3635
      %4053 = vmatprep.subr.bf16.mxu0 %v3643
      %4054 = vmatpush1.bf16.msra.mxu0 %v3642
      %4055 = vmatprep.subr.bf16.mxu0 %v3650
      %4056 = vmatpush1.bf16.msra.mxu0 %v3649
      %4057 = vmatprep.subr.bf16.mxu0 %v3657
      %4058 = vmatpush1.bf16.msra.mxu0 %v3656
      %4059 = vmatprep.subr.bf16.mxu0 %v3664
      %4060 = vmatpush1.bf16.msra.mxu0 %v3663
      %4061 = vmatprep.subr.bf16.mxu0 %v3671
      %4062 = vmatpush1.bf16.msra.mxu0 %v3670
      %4063 = vmatprep.subr.bf16.mxu0 %v3678
      %4064 = vmatpush1.bf16.msra.mxu0 %v3677
      %4065 = vmatprep.subr.bf16.mxu0 %v3685
      %4066 = vmatpush1.bf16.msra.mxu0 %v3684
      %4067 = vmatprep.subr.bf16.mxu0 %v3692
      %4068 = vmatpush1.bf16.msra.mxu0 %v3691
      %4069 = vmatprep.subr.bf16.mxu0 %v3699
      %4070 = vmatpush1.bf16.msra.mxu0 %v3698
      %4071 = vmatprep.mubr.bf16.mxu0 %v3057
      %4072 = vmatmul.mubr.bf16.gmra.mrb[0].mxu0 %v3056
      %v4073 = vpop.f32.mrb[0].mxu0
      %v4074 = vadd.f32 %v3221, %v4073
      %v4075 = vpop.f32.mrb[0].mxu0
      %v4076 = vadd.f32 %v3225, %v4075
      %v4077 = vpop.f32.mrb[0].mxu0
      %v4078 = vadd.f32 %v3221, %v4077
      %v4079 = vpop.f32.mrb[0].mxu0
      %v4080 = vadd.f32 %v3225, %v4079
      %4081 = vmatprep.mubr.bf16.mxu0 %v3059
      %4082 = vmatmul.mubr.bf16.gmra.mrb[0].mxu0 %v3058
      %v4083 = vpop.f32.mrb[0].mxu0
      %v4084 = vadd.f32 %v3221, %v4083
      %v4085 = vpop.f32.mrb[0].mxu0
      %v4086 = vadd.f32 %v3225, %v4085
      %v4087 = vpop.f32.mrb[0].mxu0
      %v4088 = vadd.f32 %v3221, %v4087
      %v4089 = vpop.f32.mrb[0].mxu0
      %v4090 = vadd.f32 %v3225, %v4089
      %4091 = vmatprep.mubr.bf16.mxu0 %v3061
      %4092 = vmatmul.mubr.bf16.gmra.mrb[0].mxu0 %v3060
      %v4093 = vpop.f32.mrb[0].mxu0
      %v4094 = vadd.f32 %v3221, %v4093
      %v4095 = vpop.f32.mrb[0].mxu0
      %v4096 = vadd.f32 %v3225, %v4095
      %v4097 = vpop.f32.mrb[0].mxu0
      %v4098 = vadd.f32 %v3221, %v4097
      %v4099 = vpop.f32.mrb[0].mxu0
      %v4100 = vadd.f32 %v3225, %v4099
      %4101 = vmatprep.mubr.bf16.mxu0 %v3063
      %4102 = vmatmul.mubr.bf16.gmra.mrb[0].mxu0 %v3062
      %v4103 = vpop.f32.mrb[0].mxu0
      %v4104 = vadd.f32 %v3221, %v4103
      %v4105 = vpop.f32.mrb[0].mxu0
      %v4106 = vadd.f32 %v3225, %v4105
      %v4107 = vpop.f32.mrb[0].mxu0
      %v4108 = vadd.f32 %v3221, %v4107
      %v4109 = vpop.f32.mrb[0].mxu0
      %v4110 = vadd.f32 %v3225, %v4109
      %4111 = vmatprep.mubr.bf16.mxu0 %v3065
      %4112 = vmatmul.mubr.bf16.gmra.mrb[0].mxu0 %v3064
      %v4113 = vpop.f32.mrb[0].mxu0
      %v4114 = vadd.f32 %v3221, %v4113
      %v4115 = vpop.f32.mrb[0].mxu0
      %v4116 = vadd.f32 %v3225, %v4115
      %v4117 = vpop.f32.mrb[0].mxu0
      %v4118 = vadd.f32 %v3221, %v4117
      %v4119 = vpop.f32.mrb[0].mxu0
      %v4120 = vadd.f32 %v3225, %v4119
      %4121 = vmatprep.mubr.bf16.mxu0 %v3067
      %4122 = vmatmul.mubr.bf16.gmra.mrb[0].mxu0 %v3066
      %v4123 = vpop.f32.mrb[0].mxu0
      %v4124 = vadd.f32 %v3221, %v4123
      %v4125 = vpop.f32.mrb[0].mxu0
      %v4126 = vadd.f32 %v3225, %v4125
      %v4127 = vpop.f32.mrb[0].mxu0
      %v4128 = vadd.f32 %v3221, %v4127
      %v4129 = vpop.f32.mrb[0].mxu0
      %v4130 = vadd.f32 %v3225, %v4129
      %4131 = vmatprep.mubr.bf16.mxu0 %v3069
      %4132 = vmatmul.mubr.bf16.gmra.mrb[0].mxu0 %v3068
      %v4133 = vpop.f32.mrb[0].mxu0
      %v4134 = vadd.f32 %v3221, %v4133
      %v4135 = vpop.f32.mrb[0].mxu0
      %v4136 = vadd.f32 %v3225, %v4135
      %v4137 = vpop.f32.mrb[0].mxu0
      %v4138 = vadd.f32 %v3221, %v4137
      %v4139 = vpop.f32.mrb[0].mxu0
      %v4140 = vadd.f32 %v3225, %v4139
      %4141 = vmatprep.mubr.bf16.mxu0 %v3071
      %4142 = vmatmul.mubr.bf16.gmra.mrb[0].mxu0 %v3070
      %v4143 = vpop.f32.mrb[0].mxu0
      %v4144 = vadd.f32 %v3221, %v4143
      %v4145 = vpop.f32.mrb[0].mxu0
      %v4146 = vadd.f32 %v3225, %v4145
      %v4147 = vpop.f32.mrb[0].mxu0
      %v4148 = vadd.f32 %v3221, %v4147
      %v4149 = vpop.f32.mrb[0].mxu0
      %v4150 = vadd.f32 %v3225, %v4149
      %4151 = vdwg.mxu0
      %4152 = vmatprep.subr.bf16.mxu0 0
      %4153 = vmatpush1.bf16.msra.mxu0 %v3595
      %4154 = vmatprep.subr.bf16.mxu0 0
      %4155 = vmatpush1.bf16.msra.mxu0 %v3602
      %4156 = vmatprep.subr.bf16.mxu0 0
      %4157 = vmatpush1.bf16.msra.mxu0 %v3609
      %4158 = vmatprep.subr.bf16.mxu0 0
      %4159 = vmatpush1.bf16.msra.mxu0 %v3616
      %4160 = vmatprep.subr.bf16.mxu0 0
      %4161 = vmatpush1.bf16.msra.mxu0 %v3623
      %4162 = vmatprep.subr.bf16.mxu0 0
      %4163 = vmatpush1.bf16.msra.mxu0 %v3630
      %4164 = vmatprep.subr.bf16.mxu0 0
      %4165 = vmatpush1.bf16.msra.mxu0 %v3637
      %4166 = vmatprep.subr.bf16.mxu0 0
      %4167 = vmatpush1.bf16.msra.mxu0 %v3644
      %4168 = vmatprep.subr.bf16.mxu0 0
      %4169 = vmatpush1.bf16.msra.mxu0 %v3651
      %4170 = vmatprep.subr.bf16.mxu0 0
      %4171 = vmatpush1.bf16.msra.mxu0 %v3658
      %4172 = vmatprep.subr.bf16.mxu0 0
      %4173 = vmatpush1.bf16.msra.mxu0 %v3665
      %4174 = vmatprep.subr.bf16.mxu0 0
      %4175 = vmatpush1.bf16.msra.mxu0 %v3672
      %4176 = vmatprep.subr.bf16.mxu0 0
      %4177 = vmatpush1.bf16.msra.mxu0 %v3679
      %4178 = vmatprep.subr.bf16.mxu0 0
      %4179 = vmatpush1.bf16.msra.mxu0 %v3686
      %4180 = vmatprep.subr.bf16.mxu0 0
      %4181 = vmatpush1.bf16.msra.mxu0 %v3693
      %4182 = vmatprep.subr.bf16.mxu0 0
      %4183 = vmatpush1.bf16.msra.mxu0 %v3700
      %4184 = vmatprep.mubr.bf16.mxu0 %v3057
      %4185 = vmatmul.mubr.bf16.gmra.mrb[0].mxu0 %v3056
      %v4186 = vpop.f32.mrb[0].mxu0
      %v4187 = vadd.f32 %v3229, %v4186
      %v4188 = vpop.f32.mrb[0].mxu0
      %v4189 = vpop.f32.mrb[0].mxu0
      %v4190 = vadd.f32 %v3229, %v4189
      %v4191 = vpop.f32.mrb[0].mxu0
      %4192 = vmatprep.mubr.bf16.mxu0 %v3059
      %4193 = vmatmul.mubr.bf16.gmra.mrb[0].mxu0 %v3058
      %v4194 = vpop.f32.mrb[0].mxu0
      %v4195 = vadd.f32 %v3229, %v4194
      %v4196 = vpop.f32.mrb[0].mxu0
      %v4197 = vpop.f32.mrb[0].mxu0
      %v4198 = vadd.f32 %v3229, %v4197
      %v4199 = vpop.f32.mrb[0].mxu0
      %4200 = vmatprep.mubr.bf16.mxu0 %v3061
      %4201 = vmatmul.mubr.bf16.gmra.mrb[0].mxu0 %v3060
      %v4202 = vpop.f32.mrb[0].mxu0
      %v4203 = vadd.f32 %v3229, %v4202
      %v4204 = vpop.f32.mrb[0].mxu0
      %v4205 = vpop.f32.mrb[0].mxu0
      %v4206 = vadd.f32 %v3229, %v4205
      %v4207 = vpop.f32.mrb[0].mxu0
      %4208 = vmatprep.mubr.bf16.mxu0 %v3063
      %4209 = vmatmul.mubr.bf16.gmra.mrb[0].mxu0 %v3062
      %v4210 = vpop.f32.mrb[0].mxu0
      %v4211 = vadd.f32 %v3229, %v4210
      %v4212 = vpop.f32.mrb[0].mxu0
      %v4213 = vpop.f32.mrb[0].mxu0
      %v4214 = vadd.f32 %v3229, %v4213
      %v4215 = vpop.f32.mrb[0].mxu0
      %4216 = vmatprep.mubr.bf16.mxu0 %v3065
      %4217 = vmatmul.mubr.bf16.gmra.mrb[0].mxu0 %v3064
      %v4218 = vpop.f32.mrb[0].mxu0
      %v4219 = vadd.f32 %v3229, %v4218
      %v4220 = vpop.f32.mrb[0].mxu0
      %v4221 = vpop.f32.mrb[0].mxu0
      %v4222 = vadd.f32 %v3229, %v4221
      %v4223 = vpop.f32.mrb[0].mxu0
      %4224 = vmatprep.mubr.bf16.mxu0 %v3067
      %4225 = vmatmul.mubr.bf16.gmra.mrb[0].mxu0 %v3066
      %v4226 = vpop.f32.mrb[0].mxu0
      %v4227 = vadd.f32 %v3229, %v4226
      %v4228 = vpop.f32.mrb[0].mxu0
      %v4229 = vpop.f32.mrb[0].mxu0
      %v4230 = vadd.f32 %v3229, %v4229
      %v4231 = vpop.f32.mrb[0].mxu0
      %4232 = vmatprep.mubr.bf16.mxu0 %v3069
      %4233 = vmatmul.mubr.bf16.gmra.mrb[0].mxu0 %v3068
      %v4234 = vpop.f32.mrb[0].mxu0
      %v4235 = vadd.f32 %v3229, %v4234
      %v4236 = vpop.f32.mrb[0].mxu0
      %v4237 = vpop.f32.mrb[0].mxu0
      %v4238 = vadd.f32 %v3229, %v4237
      %v4239 = vpop.f32.mrb[0].mxu0
      %4240 = vmatprep.mubr.bf16.mxu0 %v3071
      %4241 = vmatmul.mubr.bf16.gmra.mrb[0].mxu0 %v3070
      %v4242 = vpop.f32.mrb[0].mxu0
      %v4243 = vadd.f32 %v3229, %v4242
      %v4244 = vpop.f32.mrb[0].mxu0
      %v4245 = vpop.f32.mrb[0].mxu0
      %v4246 = vadd.f32 %v3229, %v4245
      %v4247 = vpop.f32.mrb[0].mxu0
      %4248 = vdwg.mxu0
      %v4249 = vsub.f32 0.0, %v3848
      %v4250 = vsub.f32 0.0, %v3850
      %v4251 = vsub.f32 0.0, %v3961
      %v4252 = vsub.f32 0.0, %v3963
      %v4253 = vsub.f32 0.0, %v4074
      %v4254 = vsub.f32 0.0, %v4076
      %v4255 = vsub.f32 0.0, %v4187
      %v4256 = vsub.f32 0.0, %v3852
      %v4257 = vsub.f32 0.0, %v3854
      %v4258 = vsub.f32 0.0, %v3965
      %v4259 = vsub.f32 0.0, %v3967
      %v4260 = vsub.f32 0.0, %v4078
      %v4261 = vsub.f32 0.0, %v4080
      %v4262 = vsub.f32 0.0, %v4190
      %v4263 = vsub.f32 0.0, %v3858
      %v4264 = vsub.f32 0.0, %v3860
      %v4265 = vsub.f32 0.0, %v3971
      %v4266 = vsub.f32 0.0, %v3973
      %v4267 = vsub.f32 0.0, %v4084
      %v4268 = vsub.f32 0.0, %v4086
      %v4269 = vsub.f32 0.0, %v4195
      %v4270 = vsub.f32 0.0, %v3862
      %v4271 = vsub.f32 0.0, %v3864
      %v4272 = vsub.f32 0.0, %v3975
      %v4273 = vsub.f32 0.0, %v3977
      %v4274 = vsub.f32 0.0, %v4088
      %v4275 = vsub.f32 0.0, %v4090
      %v4276 = vsub.f32 0.0, %v4198
      %v4277 = vsub.f32 0.0, %v3868
      %v4278 = vsub.f32 0.0, %v3870
      %v4279 = vsub.f32 0.0, %v3981
      %v4280 = vsub.f32 0.0, %v3983
      %v4281 = vsub.f32 0.0, %v4094
      %v4282 = vsub.f32 0.0, %v4096
      %v4283 = vsub.f32 0.0, %v4203
      %v4284 = vsub.f32 0.0, %v3872
      %v4285 = vsub.f32 0.0, %v3874
      %v4286 = vsub.f32 0.0, %v3985
      %v4287 = vsub.f32 0.0, %v3987
      %v4288 = vsub.f32 0.0, %v4098
      %v4289 = vsub.f32 0.0, %v4100
      %v4290 = vsub.f32 0.0, %v4206
      %v4291 = vsub.f32 0.0, %v3878
      %v4292 = vsub.f32 0.0, %v3880
      %v4293 = vsub.f32 0.0, %v3991
      %v4294 = vsub.f32 0.0, %v3993
      %v4295 = vsub.f32 0.0, %v4104
      %v4296 = vsub.f32 0.0, %v4106
      %v4297 = vsub.f32 0.0, %v4211
      %v4298 = vsub.f32 0.0, %v3882
      %v4299 = vsub.f32 0.0, %v3884
      %v4300 = vsub.f32 0.0, %v3995
      %v4301 = vsub.f32 0.0, %v3997
      %v4302 = vsub.f32 0.0, %v4108
      %v4303 = vsub.f32 0.0, %v4110
      %v4304 = vsub.f32 0.0, %v4214
      %v4305 = vsub.f32 0.0, %v3888
      %v4306 = vsub.f32 0.0, %v3890
      %v4307 = vsub.f32 0.0, %v4001
      %v4308 = vsub.f32 0.0, %v4003
      %v4309 = vsub.f32 0.0, %v4114
      %v4310 = vsub.f32 0.0, %v4116
      %v4311 = vsub.f32 0.0, %v4219
      %v4312 = vsub.f32 0.0, %v3892
      %v4313 = vsub.f32 0.0, %v3894
      %v4314 = vsub.f32 0.0, %v4005
      %v4315 = vsub.f32 0.0, %v4007
      %v4316 = vsub.f32 0.0, %v4118
      %v4317 = vsub.f32 0.0, %v4120
      %v4318 = vsub.f32 0.0, %v4222
      %v4319 = vsub.f32 0.0, %v3898
      %v4320 = vsub.f32 0.0, %v3900
      %v4321 = vsub.f32 0.0, %v4011
      %v4322 = vsub.f32 0.0, %v4013
      %v4323 = vsub.f32 0.0, %v4124
      %v4324 = vsub.f32 0.0, %v4126
      %v4325 = vsub.f32 0.0, %v4227
      %v4326 = vsub.f32 0.0, %v3902
      %v4327 = vsub.f32 0.0, %v3904
      %v4328 = vsub.f32 0.0, %v4015
      %v4329 = vsub.f32 0.0, %v4017
      %v4330 = vsub.f32 0.0, %v4128
      %v4331 = vsub.f32 0.0, %v4130
      %v4332 = vsub.f32 0.0, %v4230
      %v4333 = vsub.f32 0.0, %v3908
      %v4334 = vsub.f32 0.0, %v3910
      %v4335 = vsub.f32 0.0, %v4021
      %v4336 = vsub.f32 0.0, %v4023
      %v4337 = vsub.f32 0.0, %v4134
      %v4338 = vsub.f32 0.0, %v4136
      %v4339 = vsub.f32 0.0, %v4235
      %v4340 = vsub.f32 0.0, %v3912
      %v4341 = vsub.f32 0.0, %v3914
      %v4342 = vsub.f32 0.0, %v4025
      %v4343 = vsub.f32 0.0, %v4027
      %v4344 = vsub.f32 0.0, %v4138
      %v4345 = vsub.f32 0.0, %v4140
      %v4346 = vsub.f32 0.0, %v4238
      %v4347 = vsub.f32 0.0, %v3918
      %v4348 = vsub.f32 0.0, %v3920
      %v4349 = vsub.f32 0.0, %v4031
      %v4350 = vsub.f32 0.0, %v4033
      %v4351 = vsub.f32 0.0, %v4144
      %v4352 = vsub.f32 0.0, %v4146
      %v4353 = vsub.f32 0.0, %v4243
      %v4354 = vsub.f32 0.0, %v3922
      %v4355 = vsub.f32 0.0, %v3924
      %v4356 = vsub.f32 0.0, %v4035
      %v4357 = vsub.f32 0.0, %v4037
      %v4358 = vsub.f32 0.0, %v4148
      %v4359 = vsub.f32 0.0, %v4150
      %v4360 = vsub.f32 0.0, %v4246
      %v4361 = vmul.f32 %v4249, 1.442695
      %v4362 = vpow.pop %v4361
      %v4363 = vmul.f32 %v4250, 1.442695
      %v4364 = vpow.pop %v4363
      %v4365 = vmul.f32 %v4251, 1.442695
      %v4366 = vpow.pop %v4365
      %v4367 = vmul.f32 %v4252, 1.442695
      %v4368 = vpow.pop %v4367
      %v4369 = vmul.f32 %v4253, 1.442695
      %v4370 = vpow.pop %v4369
      %v4371 = vmul.f32 %v4254, 1.442695
      %v4372 = vpow.pop %v4371
      %v4373 = vmul.f32 %v4255, 1.442695
      %v4374 = vpow.pop %v4373
      %v4375 = vmul.f32 %v4256, 1.442695
      %v4376 = vpow.pop %v4375
      %v4377 = vmul.f32 %v4257, 1.442695
      %v4378 = vpow.pop %v4377
      %v4379 = vmul.f32 %v4258, 1.442695
      %v4380 = vpow.pop %v4379
      %v4381 = vmul.f32 %v4259, 1.442695
      %v4382 = vpow.pop %v4381
      %v4383 = vmul.f32 %v4260, 1.442695
      %v4384 = vpow.pop %v4383
      %v4385 = vmul.f32 %v4261, 1.442695
      %v4386 = vpow.pop %v4385
      %v4387 = vmul.f32 %v4262, 1.442695
      %v4388 = vpow.pop %v4387
      %v4389 = vmul.f32 %v4263, 1.442695
      %v4390 = vpow.pop %v4389
      %v4391 = vmul.f32 %v4264, 1.442695
      %v4392 = vpow.pop %v4391
      %v4393 = vmul.f32 %v4265, 1.442695
      %v4394 = vpow.pop %v4393
      %v4395 = vmul.f32 %v4266, 1.442695
      %v4396 = vpow.pop %v4395
      %v4397 = vmul.f32 %v4267, 1.442695
      %v4398 = vpow.pop %v4397
      %v4399 = vmul.f32 %v4268, 1.442695
      %v4400 = vpow.pop %v4399
      %v4401 = vmul.f32 %v4269, 1.442695
      %v4402 = vpow.pop %v4401
      %v4403 = vmul.f32 %v4270, 1.442695
      %v4404 = vpow.pop %v4403
      %v4405 = vmul.f32 %v4271, 1.442695
      %v4406 = vpow.pop %v4405
      %v4407 = vmul.f32 %v4272, 1.442695
      %v4408 = vpow.pop %v4407
      %v4409 = vmul.f32 %v4273, 1.442695
      %v4410 = vpow.pop %v4409
      %v4411 = vmul.f32 %v4274, 1.442695
      %v4412 = vpow.pop %v4411
      %v4413 = vmul.f32 %v4275, 1.442695
      %v4414 = vpow.pop %v4413
      %v4415 = vmul.f32 %v4276, 1.442695
      %v4416 = vpow.pop %v4415
      %v4417 = vmul.f32 %v4277, 1.442695
      %v4418 = vpow.pop %v4417
      %v4419 = vmul.f32 %v4278, 1.442695
      %v4420 = vpow.pop %v4419
      %v4421 = vmul.f32 %v4279, 1.442695
      %v4422 = vpow.pop %v4421
      %v4423 = vmul.f32 %v4280, 1.442695
      %v4424 = vpow.pop %v4423
      %v4425 = vmul.f32 %v4281, 1.442695
      %v4426 = vpow.pop %v4425
      %v4427 = vmul.f32 %v4282, 1.442695
      %v4428 = vpow.pop %v4427
      %v4429 = vmul.f32 %v4283, 1.442695
      %v4430 = vpow.pop %v4429
      %v4431 = vmul.f32 %v4284, 1.442695
      %v4432 = vpow.pop %v4431
      %v4433 = vmul.f32 %v4285, 1.442695
      %v4434 = vpow.pop %v4433
      %v4435 = vmul.f32 %v4286, 1.442695
      %v4436 = vpow.pop %v4435
      %v4437 = vmul.f32 %v4287, 1.442695
      %v4438 = vpow.pop %v4437
      %v4439 = vmul.f32 %v4288, 1.442695
      %v4440 = vpow.pop %v4439
      %v4441 = vmul.f32 %v4289, 1.442695
      %v4442 = vpow.pop %v4441
      %v4443 = vmul.f32 %v4290, 1.442695
      %v4444 = vpow.pop %v4443
      %v4445 = vmul.f32 %v4291, 1.442695
      %v4446 = vpow.pop %v4445
      %v4447 = vmul.f32 %v4292, 1.442695
      %v4448 = vpow.pop %v4447
      %v4449 = vmul.f32 %v4293, 1.442695
      %v4450 = vpow.pop %v4449
      %v4451 = vmul.f32 %v4294, 1.442695
      %v4452 = vpow.pop %v4451
      %v4453 = vmul.f32 %v4295, 1.442695
      %v4454 = vpow.pop %v4453
      %v4455 = vmul.f32 %v4296, 1.442695
      %v4456 = vpow.pop %v4455
      %v4457 = vmul.f32 %v4297, 1.442695
      %v4458 = vpow.pop %v4457
      %v4459 = vmul.f32 %v4298, 1.442695
      %v4460 = vpow.pop %v4459
      %v4461 = vmul.f32 %v4299, 1.442695
      %v4462 = vpow.pop %v4461
      %v4463 = vmul.f32 %v4300, 1.442695
      %v4464 = vpow.pop %v4463
      %v4465 = vmul.f32 %v4301, 1.442695
      %v4466 = vpow.pop %v4465
      %v4467 = vmul.f32 %v4302, 1.442695
      %v4468 = vpow.pop %v4467
      %v4469 = vmul.f32 %v4303, 1.442695
      %v4470 = vpow.pop %v4469
      %v4471 = vmul.f32 %v4304, 1.442695
      %v4472 = vpow.pop %v4471
      %v4473 = vmul.f32 %v4305, 1.442695
      %v4474 = vpow.pop %v4473
      %v4475 = vmul.f32 %v4306, 1.442695
      %v4476 = vpow.pop %v4475
      %v4477 = vmul.f32 %v4307, 1.442695
      %v4478 = vpow.pop %v4477
      %v4479 = vmul.f32 %v4308, 1.442695
      %v4480 = vpow.pop %v4479
      %v4481 = vmul.f32 %v4309, 1.442695
      %v4482 = vpow.pop %v4481
      %v4483 = vmul.f32 %v4310, 1.442695
      %v4484 = vpow.pop %v4483
      %v4485 = vmul.f32 %v4311, 1.442695
      %v4486 = vpow.pop %v4485
      %v4487 = vmul.f32 %v4312, 1.442695
      %v4488 = vpow.pop %v4487
      %v4489 = vmul.f32 %v4313, 1.442695
      %v4490 = vpow.pop %v4489
      %v4491 = vmul.f32 %v4314, 1.442695
      %v4492 = vpow.pop %v4491
      %v4493 = vmul.f32 %v4315, 1.442695
      %v4494 = vpow.pop %v4493
      %v4495 = vmul.f32 %v4316, 1.442695
      %v4496 = vpow.pop %v4495
      %v4497 = vmul.f32 %v4317, 1.442695
      %v4498 = vpow.pop %v4497
      %v4499 = vmul.f32 %v4318, 1.442695
      %v4500 = vpow.pop %v4499
      %v4501 = vmul.f32 %v4319, 1.442695
      %v4502 = vpow.pop %v4501
      %v4503 = vmul.f32 %v4320, 1.442695
      %v4504 = vpow.pop %v4503
      %v4505 = vmul.f32 %v4321, 1.442695
      %v4506 = vpow.pop %v4505
      %v4507 = vmul.f32 %v4322, 1.442695
      %v4508 = vpow.pop %v4507
      %v4509 = vmul.f32 %v4323, 1.442695
      %v4510 = vpow.pop %v4509
      %v4511 = vmul.f32 %v4324, 1.442695
      %v4512 = vpow.pop %v4511
      %v4513 = vmul.f32 %v4325, 1.442695
      %v4514 = vpow.pop %v4513
      %v4515 = vmul.f32 %v4326, 1.442695
      %v4516 = vpow.pop %v4515
      %v4517 = vmul.f32 %v4327, 1.442695
      %v4518 = vpow.pop %v4517
      %v4519 = vmul.f32 %v4328, 1.442695
      %v4520 = vpow.pop %v4519
      %v4521 = vmul.f32 %v4329, 1.442695
      %v4522 = vpow.pop %v4521
      %v4523 = vmul.f32 %v4330, 1.442695
      %v4524 = vpow.pop %v4523
      %v4525 = vmul.f32 %v4331, 1.442695
      %v4526 = vpow.pop %v4525
      %v4527 = vmul.f32 %v4332, 1.442695
      %v4528 = vpow.pop %v4527
      %v4529 = vmul.f32 %v4333, 1.442695
      %v4530 = vpow.pop %v4529
      %v4531 = vmul.f32 %v4334, 1.442695
      %v4532 = vpow.pop %v4531
      %v4533 = vmul.f32 %v4335, 1.442695
      %v4534 = vpow.pop %v4533
      %v4535 = vmul.f32 %v4336, 1.442695
      %v4536 = vpow.pop %v4535
      %v4537 = vmul.f32 %v4337, 1.442695
      %v4538 = vpow.pop %v4537
      %v4539 = vmul.f32 %v4338, 1.442695
      %v4540 = vpow.pop %v4539
      %v4541 = vmul.f32 %v4339, 1.442695
      %v4542 = vpow.pop %v4541
      %v4543 = vmul.f32 %v4340, 1.442695
      %v4544 = vpow.pop %v4543
      %v4545 = vmul.f32 %v4341, 1.442695
      %v4546 = vpow.pop %v4545
      %v4547 = vmul.f32 %v4342, 1.442695
      %v4548 = vpow.pop %v4547
      %v4549 = vmul.f32 %v4343, 1.442695
      %v4550 = vpow.pop %v4549
      %v4551 = vmul.f32 %v4344, 1.442695
      %v4552 = vpow.pop %v4551
      %v4553 = vmul.f32 %v4345, 1.442695
      %v4554 = vpow.pop %v4553
      %v4555 = vmul.f32 %v4346, 1.442695
      %v4556 = vpow.pop %v4555
      %v4557 = vmul.f32 %v4347, 1.442695
      %v4558 = vpow.pop %v4557
      %v4559 = vmul.f32 %v4348, 1.442695
      %v4560 = vpow.pop %v4559
      %v4561 = vmul.f32 %v4349, 1.442695
      %v4562 = vpow.pop %v4561
      %v4563 = vmul.f32 %v4350, 1.442695
      %v4564 = vpow.pop %v4563
      %v4565 = vmul.f32 %v4351, 1.442695
      %v4566 = vpow.pop %v4565
      %v4567 = vmul.f32 %v4352, 1.442695
      %v4568 = vpow.pop %v4567
      %v4569 = vmul.f32 %v4353, 1.442695
      %v4570 = vpow.pop %v4569
      %v4571 = vmul.f32 %v4354, 1.442695
      %v4572 = vpow.pop %v4571
      %v4573 = vmul.f32 %v4355, 1.442695
      %v4574 = vpow.pop %v4573
      %v4575 = vmul.f32 %v4356, 1.442695
      %v4576 = vpow.pop %v4575
      %v4577 = vmul.f32 %v4357, 1.442695
      %v4578 = vpow.pop %v4577
      %v4579 = vmul.f32 %v4358, 1.442695
      %v4580 = vpow.pop %v4579
      %v4581 = vmul.f32 %v4359, 1.442695
      %v4582 = vpow.pop %v4581
      %v4583 = vmul.f32 %v4360, 1.442695
      %v4584 = vpow.pop %v4583
      %v4585 = vadd.f32 %v4362, 1.0
      %v4586 = vadd.f32 %v4364, 1.0
      %v4587 = vadd.f32 %v4366, 1.0
      %v4588 = vadd.f32 %v4368, 1.0
      %v4589 = vadd.f32 %v4370, 1.0
      %v4590 = vadd.f32 %v4372, 1.0
      %v4591 = vadd.f32 %v4374, 1.0
      %v4592 = vadd.f32 %v4376, 1.0
      %v4593 = vadd.f32 %v4378, 1.0
      %v4594 = vadd.f32 %v4380, 1.0
      %v4595 = vadd.f32 %v4382, 1.0
      %v4596 = vadd.f32 %v4384, 1.0
      %v4597 = vadd.f32 %v4386, 1.0
      %v4598 = vadd.f32 %v4388, 1.0
      %v4599 = vadd.f32 %v4390, 1.0
      %v4600 = vadd.f32 %v4392, 1.0
      %v4601 = vadd.f32 %v4394, 1.0
      %v4602 = vadd.f32 %v4396, 1.0
      %v4603 = vadd.f32 %v4398, 1.0
      %v4604 = vadd.f32 %v4400, 1.0
      %v4605 = vadd.f32 %v4402, 1.0
      %v4606 = vadd.f32 %v4404, 1.0
      %v4607 = vadd.f32 %v4406, 1.0
      %v4608 = vadd.f32 %v4408, 1.0
      %v4609 = vadd.f32 %v4410, 1.0
      %v4610 = vadd.f32 %v4412, 1.0
      %v4611 = vadd.f32 %v4414, 1.0
      %v4612 = vadd.f32 %v4416, 1.0
      %v4613 = vadd.f32 %v4418, 1.0
      %v4614 = vadd.f32 %v4420, 1.0
      %v4615 = vadd.f32 %v4422, 1.0
      %v4616 = vadd.f32 %v4424, 1.0
      %v4617 = vadd.f32 %v4426, 1.0
      %v4618 = vadd.f32 %v4428, 1.0
      %v4619 = vadd.f32 %v4430, 1.0
      %v4620 = vadd.f32 %v4432, 1.0
      %v4621 = vadd.f32 %v4434, 1.0
      %v4622 = vadd.f32 %v4436, 1.0
      %v4623 = vadd.f32 %v4438, 1.0
      %v4624 = vadd.f32 %v4440, 1.0
      %v4625 = vadd.f32 %v4442, 1.0
      %v4626 = vadd.f32 %v4444, 1.0
      %v4627 = vadd.f32 %v4446, 1.0
      %v4628 = vadd.f32 %v4448, 1.0
      %v4629 = vadd.f32 %v4450, 1.0
      %v4630 = vadd.f32 %v4452, 1.0
      %v4631 = vadd.f32 %v4454, 1.0
      %v4632 = vadd.f32 %v4456, 1.0
      %v4633 = vadd.f32 %v4458, 1.0
      %v4634 = vadd.f32 %v4460, 1.0
      %v4635 = vadd.f32 %v4462, 1.0
      %v4636 = vadd.f32 %v4464, 1.0
      %v4637 = vadd.f32 %v4466, 1.0
      %v4638 = vadd.f32 %v4468, 1.0
      %v4639 = vadd.f32 %v4470, 1.0
      %v4640 = vadd.f32 %v4472, 1.0
      %v4641 = vadd.f32 %v4474, 1.0
      %v4642 = vadd.f32 %v4476, 1.0
      %v4643 = vadd.f32 %v4478, 1.0
      %v4644 = vadd.f32 %v4480, 1.0
      %v4645 = vadd.f32 %v4482, 1.0
      %v4646 = vadd.f32 %v4484, 1.0
      %v4647 = vadd.f32 %v4486, 1.0
      %v4648 = vadd.f32 %v4488, 1.0
      %v4649 = vadd.f32 %v4490, 1.0
      %v4650 = vadd.f32 %v4492, 1.0
      %v4651 = vadd.f32 %v4494, 1.0
      %v4652 = vadd.f32 %v4496, 1.0
      %v4653 = vadd.f32 %v4498, 1.0
      %v4654 = vadd.f32 %v4500, 1.0
      %v4655 = vadd.f32 %v4502, 1.0
      %v4656 = vadd.f32 %v4504, 1.0
      %v4657 = vadd.f32 %v4506, 1.0
      %v4658 = vadd.f32 %v4508, 1.0
      %v4659 = vadd.f32 %v4510, 1.0
      %v4660 = vadd.f32 %v4512, 1.0
      %v4661 = vadd.f32 %v4514, 1.0
      %v4662 = vadd.f32 %v4516, 1.0
      %v4663 = vadd.f32 %v4518, 1.0
      %v4664 = vadd.f32 %v4520, 1.0
      %v4665 = vadd.f32 %v4522, 1.0
      %v4666 = vadd.f32 %v4524, 1.0
      %v4667 = vadd.f32 %v4526, 1.0
      %v4668 = vadd.f32 %v4528, 1.0
      %v4669 = vadd.f32 %v4530, 1.0
      %v4670 = vadd.f32 %v4532, 1.0
      %v4671 = vadd.f32 %v4534, 1.0
      %v4672 = vadd.f32 %v4536, 1.0
      %v4673 = vadd.f32 %v4538, 1.0
      %v4674 = vadd.f32 %v4540, 1.0
      %v4675 = vadd.f32 %v4542, 1.0
      %v4676 = vadd.f32 %v4544, 1.0
      %v4677 = vadd.f32 %v4546, 1.0
      %v4678 = vadd.f32 %v4548, 1.0
      %v4679 = vadd.f32 %v4550, 1.0
      %v4680 = vadd.f32 %v4552, 1.0
      %v4681 = vadd.f32 %v4554, 1.0
      %v4682 = vadd.f32 %v4556, 1.0
      %v4683 = vadd.f32 %v4558, 1.0
      %v4684 = vadd.f32 %v4560, 1.0
      %v4685 = vadd.f32 %v4562, 1.0
      %v4686 = vadd.f32 %v4564, 1.0
      %v4687 = vadd.f32 %v4566, 1.0
      %v4688 = vadd.f32 %v4568, 1.0
      %v4689 = vadd.f32 %v4570, 1.0
      %v4690 = vadd.f32 %v4572, 1.0
      %v4691 = vadd.f32 %v4574, 1.0
      %v4692 = vadd.f32 %v4576, 1.0
      %v4693 = vadd.f32 %v4578, 1.0
      %v4694 = vadd.f32 %v4580, 1.0
      %v4695 = vadd.f32 %v4582, 1.0
      %v4696 = vadd.f32 %v4584, 1.0
      %v4697 = vrcp.pop %v4585
      %v4698 = vmul.f32 1.0, %v4697
      %v4699 = vrcp.pop %v4586
      %v4700 = vmul.f32 1.0, %v4699
      %v4701 = vrcp.pop %v4587
      %v4702 = vmul.f32 1.0, %v4701
      %v4703 = vrcp.pop %v4588
      %v4704 = vmul.f32 1.0, %v4703
      %v4705 = vrcp.pop %v4589
      %v4706 = vmul.f32 1.0, %v4705
      %v4707 = vrcp.pop %v4590
      %v4708 = vmul.f32 1.0, %v4707
      %v4709 = vrcp.pop %v4591
      %v4710 = vmul.f32 1.0, %v4709
      %v4711 = vrcp.pop %v4592
      %v4712 = vmul.f32 1.0, %v4711
      %v4713 = vrcp.pop %v4593
      %v4714 = vmul.f32 1.0, %v4713
      %v4715 = vrcp.pop %v4594
      %v4716 = vmul.f32 1.0, %v4715
      %v4717 = vrcp.pop %v4595
      %v4718 = vmul.f32 1.0, %v4717
      %v4719 = vrcp.pop %v4596
      %v4720 = vmul.f32 1.0, %v4719
      %v4721 = vrcp.pop %v4597
      %v4722 = vmul.f32 1.0, %v4721
      %v4723 = vrcp.pop %v4598
      %v4724 = vmul.f32 1.0, %v4723
      %v4725 = vrcp.pop %v4599
      %v4726 = vmul.f32 1.0, %v4725
      %v4727 = vrcp.pop %v4600
      %v4728 = vmul.f32 1.0, %v4727
      %v4729 = vrcp.pop %v4601
      %v4730 = vmul.f32 1.0, %v4729
      %v4731 = vrcp.pop %v4602
      %v4732 = vmul.f32 1.0, %v4731
      %v4733 = vrcp.pop %v4603
      %v4734 = vmul.f32 1.0, %v4733
      %v4735 = vrcp.pop %v4604
      %v4736 = vmul.f32 1.0, %v4735
      %v4737 = vrcp.pop %v4605
      %v4738 = vmul.f32 1.0, %v4737
      %v4739 = vrcp.pop %v4606
      %v4740 = vmul.f32 1.0, %v4739
      %v4741 = vrcp.pop %v4607
      %v4742 = vmul.f32 1.0, %v4741
      %v4743 = vrcp.pop %v4608
      %v4744 = vmul.f32 1.0, %v4743
      %v4745 = vrcp.pop %v4609
      %v4746 = vmul.f32 1.0, %v4745
      %v4747 = vrcp.pop %v4610
      %v4748 = vmul.f32 1.0, %v4747
      %v4749 = vrcp.pop %v4611
      %v4750 = vmul.f32 1.0, %v4749
      %v4751 = vrcp.pop %v4612
      %v4752 = vmul.f32 1.0, %v4751
      %v4753 = vrcp.pop %v4613
      %v4754 = vmul.f32 1.0, %v4753
      %v4755 = vrcp.pop %v4614
      %v4756 = vmul.f32 1.0, %v4755
      %v4757 = vrcp.pop %v4615
      %v4758 = vmul.f32 1.0, %v4757
      %v4759 = vrcp.pop %v4616
      %v4760 = vmul.f32 1.0, %v4759
      %v4761 = vrcp.pop %v4617
      %v4762 = vmul.f32 1.0, %v4761
      %v4763 = vrcp.pop %v4618
      %v4764 = vmul.f32 1.0, %v4763
      %v4765 = vrcp.pop %v4619
      %v4766 = vmul.f32 1.0, %v4765
      %v4767 = vrcp.pop %v4620
      %v4768 = vmul.f32 1.0, %v4767
      %v4769 = vrcp.pop %v4621
      %v4770 = vmul.f32 1.0, %v4769
      %v4771 = vrcp.pop %v4622
      %v4772 = vmul.f32 1.0, %v4771
      %v4773 = vrcp.pop %v4623
      %v4774 = vmul.f32 1.0, %v4773
      %v4775 = vrcp.pop %v4624
      %v4776 = vmul.f32 1.0, %v4775
      %v4777 = vrcp.pop %v4625
      %v4778 = vmul.f32 1.0, %v4777
      %v4779 = vrcp.pop %v4626
      %v4780 = vmul.f32 1.0, %v4779
      %v4781 = vrcp.pop %v4627
      %v4782 = vmul.f32 1.0, %v4781
      %v4783 = vrcp.pop %v4628
      %v4784 = vmul.f32 1.0, %v4783
      %v4785 = vrcp.pop %v4629
      %v4786 = vmul.f32 1.0, %v4785
      %v4787 = vrcp.pop %v4630
      %v4788 = vmul.f32 1.0, %v4787
      %v4789 = vrcp.pop %v4631
      %v4790 = vmul.f32 1.0, %v4789
      %v4791 = vrcp.pop %v4632
      %v4792 = vmul.f32 1.0, %v4791
      %v4793 = vrcp.pop %v4633
      %v4794 = vmul.f32 1.0, %v4793
      %v4795 = vrcp.pop %v4634
      %v4796 = vmul.f32 1.0, %v4795
      %v4797 = vrcp.pop %v4635
      %v4798 = vmul.f32 1.0, %v4797
      %v4799 = vrcp.pop %v4636
      %v4800 = vmul.f32 1.0, %v4799
      %v4801 = vrcp.pop %v4637
      %v4802 = vmul.f32 1.0, %v4801
      %v4803 = vrcp.pop %v4638
      %v4804 = vmul.f32 1.0, %v4803
      %v4805 = vrcp.pop %v4639
      %v4806 = vmul.f32 1.0, %v4805
      %v4807 = vrcp.pop %v4640
      %v4808 = vmul.f32 1.0, %v4807
      %v4809 = vrcp.pop %v4641
      %v4810 = vmul.f32 1.0, %v4809
      %v4811 = vrcp.pop %v4642
      %v4812 = vmul.f32 1.0, %v4811
      %v4813 = vrcp.pop %v4643
      %v4814 = vmul.f32 1.0, %v4813
      %v4815 = vrcp.pop %v4644
      %v4816 = vmul.f32 1.0, %v4815
      %v4817 = vrcp.pop %v4645
      %v4818 = vmul.f32 1.0, %v4817
      %v4819 = vrcp.pop %v4646
      %v4820 = vmul.f32 1.0, %v4819
      %v4821 = vrcp.pop %v4647
      %v4822 = vmul.f32 1.0, %v4821
      %v4823 = vrcp.pop %v4648
      %v4824 = vmul.f32 1.0, %v4823
      %v4825 = vrcp.pop %v4649
      %v4826 = vmul.f32 1.0, %v4825
      %v4827 = vrcp.pop %v4650
      %v4828 = vmul.f32 1.0, %v4827
      %v4829 = vrcp.pop %v4651
      %v4830 = vmul.f32 1.0, %v4829
      %v4831 = vrcp.pop %v4652
      %v4832 = vmul.f32 1.0, %v4831
      %v4833 = vrcp.pop %v4653
      %v4834 = vmul.f32 1.0, %v4833
      %v4835 = vrcp.pop %v4654
      %v4836 = vmul.f32 1.0, %v4835
      %v4837 = vrcp.pop %v4655
      %v4838 = vmul.f32 1.0, %v4837
      %v4839 = vrcp.pop %v4656
      %v4840 = vmul.f32 1.0, %v4839
      %v4841 = vrcp.pop %v4657
      %v4842 = vmul.f32 1.0, %v4841
      %v4843 = vrcp.pop %v4658
      %v4844 = vmul.f32 1.0, %v4843
      %v4845 = vrcp.pop %v4659
      %v4846 = vmul.f32 1.0, %v4845
      %v4847 = vrcp.pop %v4660
      %v4848 = vmul.f32 1.0, %v4847
      %v4849 = vrcp.pop %v4661
      %v4850 = vmul.f32 1.0, %v4849
      %v4851 = vrcp.pop %v4662
      %v4852 = vmul.f32 1.0, %v4851
      %v4853 = vrcp.pop %v4663
      %v4854 = vmul.f32 1.0, %v4853
      %v4855 = vrcp.pop %v4664
      %v4856 = vmul.f32 1.0, %v4855
      %v4857 = vrcp.pop %v4665
      %v4858 = vmul.f32 1.0, %v4857
      %v4859 = vrcp.pop %v4666
      %v4860 = vmul.f32 1.0, %v4859
      %v4861 = vrcp.pop %v4667
      %v4862 = vmul.f32 1.0, %v4861
      %v4863 = vrcp.pop %v4668
      %v4864 = vmul.f32 1.0, %v4863
      %v4865 = vrcp.pop %v4669
      %v4866 = vmul.f32 1.0, %v4865
      %v4867 = vrcp.pop %v4670
      %v4868 = vmul.f32 1.0, %v4867
      %v4869 = vrcp.pop %v4671
      %v4870 = vmul.f32 1.0, %v4869
      %v4871 = vrcp.pop %v4672
      %v4872 = vmul.f32 1.0, %v4871
      %v4873 = vrcp.pop %v4673
      %v4874 = vmul.f32 1.0, %v4873
      %v4875 = vrcp.pop %v4674
      %v4876 = vmul.f32 1.0, %v4875
      %v4877 = vrcp.pop %v4675
      %v4878 = vmul.f32 1.0, %v4877
      %v4879 = vrcp.pop %v4676
      %v4880 = vmul.f32 1.0, %v4879
      %v4881 = vrcp.pop %v4677
      %v4882 = vmul.f32 1.0, %v4881
      %v4883 = vrcp.pop %v4678
      %v4884 = vmul.f32 1.0, %v4883
      %v4885 = vrcp.pop %v4679
      %v4886 = vmul.f32 1.0, %v4885
      %v4887 = vrcp.pop %v4680
      %v4888 = vmul.f32 1.0, %v4887
      %v4889 = vrcp.pop %v4681
      %v4890 = vmul.f32 1.0, %v4889
      %v4891 = vrcp.pop %v4682
      %v4892 = vmul.f32 1.0, %v4891
      %v4893 = vrcp.pop %v4683
      %v4894 = vmul.f32 1.0, %v4893
      %v4895 = vrcp.pop %v4684
      %v4896 = vmul.f32 1.0, %v4895
      %v4897 = vrcp.pop %v4685
      %v4898 = vmul.f32 1.0, %v4897
      %v4899 = vrcp.pop %v4686
      %v4900 = vmul.f32 1.0, %v4899
      %v4901 = vrcp.pop %v4687
      %v4902 = vmul.f32 1.0, %v4901
      %v4903 = vrcp.pop %v4688
      %v4904 = vmul.f32 1.0, %v4903
      %v4905 = vrcp.pop %v4689
      %v4906 = vmul.f32 1.0, %v4905
      %v4907 = vrcp.pop %v4690
      %v4908 = vmul.f32 1.0, %v4907
      %v4909 = vrcp.pop %v4691
      %v4910 = vmul.f32 1.0, %v4909
      %v4911 = vrcp.pop %v4692
      %v4912 = vmul.f32 1.0, %v4911
      %v4913 = vrcp.pop %v4693
      %v4914 = vmul.f32 1.0, %v4913
      %v4915 = vrcp.pop %v4694
      %v4916 = vmul.f32 1.0, %v4915
      %v4917 = vrcp.pop %v4695
      %v4918 = vmul.f32 1.0, %v4917
      %v4919 = vrcp.pop %v4696
      %v4920 = vmul.f32 1.0, %v4919
      %4921 = vst [vmem:[%s532] sm:$0xff] %v4698
      %4922 = vst [vmem:[%s532 + $0x8] sm:$0xff] %v4700
      %4923 = vst [vmem:[%s532 + $0x10] sm:$0xff] %v4702
      %4924 = vst [vmem:[%s532 + $0x18] sm:$0xff] %v4704
      %4925 = vst [vmem:[%s532 + $0x20] sm:$0xff] %v4706
      %4926 = vst [vmem:[%s532 + $0x28] sm:$0xff] %v4708
      %4927 = vst [vmem:[%s532 + $0x30] sm:$0xff] %v4710
      %4928 = vst [vmem:[%s532 + $0x38] sm:$0xff] %v4712
      %4929 = vst [vmem:[%s532 + $0x40] sm:$0xff] %v4714
      %4930 = vst [vmem:[%s532 + $0x48] sm:$0xff] %v4716
      %4931 = vst [vmem:[%s532 + $0x50] sm:$0xff] %v4718
      %4932 = vst [vmem:[%s532 + $0x58] sm:$0xff] %v4720
      %4933 = vst [vmem:[%s532 + $0x60] sm:$0xff] %v4722
      %4934 = vst [vmem:[%s532 + $0x68] sm:$0xff] %v4724
      %4935 = vst [vmem:[%s532 + $0x70] sm:$0xff] %v4726
      %4936 = vst [vmem:[%s532 + $0x78] sm:$0xff] %v4728
      %4937 = vst [vmem:[%s532 + $0x80] sm:$0xff] %v4730
      %4938 = vst [vmem:[%s532 + $0x88] sm:$0xff] %v4732
      %4939 = vst [vmem:[%s532 + $0x90] sm:$0xff] %v4734
      %4940 = vst [vmem:[%s532 + $0x98] sm:$0xff] %v4736
      %4941 = vst [vmem:[%s532 + $0xa0] sm:$0xff] %v4738
      %4942 = vst [vmem:[%s532 + $0xa8] sm:$0xff] %v4740
      %4943 = vst [vmem:[%s532 + $0xb0] sm:$0xff] %v4742
      %4944 = vst [vmem:[%s532 + $0xb8] sm:$0xff] %v4744
      %4945 = vst [vmem:[%s532 + $0xc0] sm:$0xff] %v4746
      %4946 = vst [vmem:[%s532 + $0xc8] sm:$0xff] %v4748
      %4947 = vst [vmem:[%s532 + $0xd0] sm:$0xff] %v4750
      %4948 = vst [vmem:[%s532 + $0xd8] sm:$0xff] %v4752
      %4949 = vst [vmem:[%s532 + $0xe0] sm:$0xff] %v4754
      %4950 = vst [vmem:[%s532 + $0xe8] sm:$0xff] %v4756
      %4951 = vst [vmem:[%s532 + $0xf0] sm:$0xff] %v4758
      %4952 = vst [vmem:[%s532 + $0xf8] sm:$0xff] %v4760
      %4953 = vst [vmem:[%s532 + $0x100] sm:$0xff] %v4762
      %4954 = vst [vmem:[%s532 + $0x108] sm:$0xff] %v4764
      %4955 = vst [vmem:[%s532 + $0x110] sm:$0xff] %v4766
      %4956 = vst [vmem:[%s532 + $0x118] sm:$0xff] %v4768
      %4957 = vst [vmem:[%s532 + $0x120] sm:$0xff] %v4770
      %4958 = vst [vmem:[%s532 + $0x128] sm:$0xff] %v4772
      %4959 = vst [vmem:[%s532 + $0x130] sm:$0xff] %v4774
      %4960 = vst [vmem:[%s532 + $0x138] sm:$0xff] %v4776
      %4961 = vst [vmem:[%s532 + $0x140] sm:$0xff] %v4778
      %4962 = vst [vmem:[%s532 + $0x148] sm:$0xff] %v4780
      %4963 = vst [vmem:[%s532 + $0x150] sm:$0xff] %v4782
      %4964 = vst [vmem:[%s532 + $0x158] sm:$0xff] %v4784
      %4965 = vst [vmem:[%s532 + $0x160] sm:$0xff] %v4786
      %4966 = vst [vmem:[%s532 + $0x168] sm:$0xff] %v4788
      %4967 = vst [vmem:[%s532 + $0x170] sm:$0xff] %v4790
      %4968 = vst [vmem:[%s532 + $0x178] sm:$0xff] %v4792
      %4969 = vst [vmem:[%s532 + $0x180] sm:$0xff] %v4794
      %4970 = vst [vmem:[%s532 + $0x188] sm:$0xff] %v4796
      %4971 = vst [vmem:[%s532 + $0x190] sm:$0xff] %v4798
      %4972 = vst [vmem:[%s532 + $0x198] sm:$0xff] %v4800
      %4973 = vst [vmem:[%s532 + $0x1a0] sm:$0xff] %v4802
      %4974 = vst [vmem:[%s532 + $0x1a8] sm:$0xff] %v4804
      %4975 = vst [vmem:[%s532 + $0x1b0] sm:$0xff] %v4806
      %4976 = vst [vmem:[%s532 + $0x1b8] sm:$0xff] %v4808
      %4977 = vst [vmem:[%s532 + $0x1c0] sm:$0xff] %v4810
      %4978 = vst [vmem:[%s532 + $0x1c8] sm:$0xff] %v4812
      %4979 = vst [vmem:[%s532 + $0x1d0] sm:$0xff] %v4814
      %4980 = vst [vmem:[%s532 + $0x1d8] sm:$0xff] %v4816
      %4981 = vst [vmem:[%s532 + $0x1e0] sm:$0xff] %v4818
      %4982 = vst [vmem:[%s532 + $0x1e8] sm:$0xff] %v4820
      %4983 = vst [vmem:[%s532 + $0x1f0] sm:$0xff] %v4822
      %4984 = vst [vmem:[%s532 + $0x1f8] sm:$0xff] %v4824
      %4985 = vst [vmem:[%s532 + $0x200] sm:$0xff] %v4826
      %4986 = vst [vmem:[%s532 + $0x208] sm:$0xff] %v4828
      %4987 = vst [vmem:[%s532 + $0x210] sm:$0xff] %v4830
      %4988 = vst [vmem:[%s532 + $0x218] sm:$0xff] %v4832
      %4989 = vst [vmem:[%s532 + $0x220] sm:$0xff] %v4834
      %4990 = vst [vmem:[%s532 + $0x228] sm:$0xff] %v4836
      %4991 = vst [vmem:[%s532 + $0x230] sm:$0xff] %v4838
      %4992 = vst [vmem:[%s532 + $0x238] sm:$0xff] %v4840
      %4993 = vst [vmem:[%s532 + $0x240] sm:$0xff] %v4842
      %4994 = vst [vmem:[%s532 + $0x248] sm:$0xff] %v4844
      %4995 = vst [vmem:[%s532 + $0x250] sm:$0xff] %v4846
      %4996 = vst [vmem:[%s532 + $0x258] sm:$0xff] %v4848
      %4997 = vst [vmem:[%s532 + $0x260] sm:$0xff] %v4850
      %4998 = vst [vmem:[%s532 + $0x268] sm:$0xff] %v4852
      %4999 = vst [vmem:[%s532 + $0x270] sm:$0xff] %v4854
      %5000 = vst [vmem:[%s532 + $0x278] sm:$0xff] %v4856
      %5001 = vst [vmem:[%s532 + $0x280] sm:$0xff] %v4858
      %5002 = vst [vmem:[%s532 + $0x288] sm:$0xff] %v4860
      %5003 = vst [vmem:[%s532 + $0x290] sm:$0xff] %v4862
      %5004 = vst [vmem:[%s532 + $0x298] sm:$0xff] %v4864
      %5005 = vst [vmem:[%s532 + $0x2a0] sm:$0xff] %v4866
      %5006 = vst [vmem:[%s532 + $0x2a8] sm:$0xff] %v4868
      %5007 = vst [vmem:[%s532 + $0x2b0] sm:$0xff] %v4870
      %5008 = vst [vmem:[%s532 + $0x2b8] sm:$0xff] %v4872
      %5009 = vst [vmem:[%s532 + $0x2c0] sm:$0xff] %v4874
      %5010 = vst [vmem:[%s532 + $0x2c8] sm:$0xff] %v4876
      %5011 = vst [vmem:[%s532 + $0x2d0] sm:$0xff] %v4878
      %5012 = vst [vmem:[%s532 + $0x2d8] sm:$0xff] %v4880
      %5013 = vst [vmem:[%s532 + $0x2e0] sm:$0xff] %v4882
      %5014 = vst [vmem:[%s532 + $0x2e8] sm:$0xff] %v4884
      %5015 = vst [vmem:[%s532 + $0x2f0] sm:$0xff] %v4886
      %5016 = vst [vmem:[%s532 + $0x2f8] sm:$0xff] %v4888
      %5017 = vst [vmem:[%s532 + $0x300] sm:$0xff] %v4890
      %5018 = vst [vmem:[%s532 + $0x308] sm:$0xff] %v4892
      %5019 = vst [vmem:[%s532 + $0x310] sm:$0xff] %v4894
      %5020 = vst [vmem:[%s532 + $0x318] sm:$0xff] %v4896
      %5021 = vst [vmem:[%s532 + $0x320] sm:$0xff] %v4898
      %5022 = vst [vmem:[%s532 + $0x328] sm:$0xff] %v4900
      %5023 = vst [vmem:[%s532 + $0x330] sm:$0xff] %v4902
      %5024 = vst [vmem:[%s532 + $0x338] sm:$0xff] %v4904
      %5025 = vst [vmem:[%s532 + $0x340] sm:$0xff] %v4906
      %5026 = vst [vmem:[%s532 + $0x348] sm:$0xff] %v4908
      %5027 = vst [vmem:[%s532 + $0x350] sm:$0xff] %v4910
      %5028 = vst [vmem:[%s532 + $0x358] sm:$0xff] %v4912
      %5029 = vst [vmem:[%s532 + $0x360] sm:$0xff] %v4914
      %5030 = vst [vmem:[%s532 + $0x368] sm:$0xff] %v4916
      %5031 = vst [vmem:[%s532 + $0x370] sm:$0xff] %v4918
      %5032 = vst [vmem:[%s532 + $0x378] sm:$0xff] %v4920
      %5033 = vst [vmem:[%s539] sm:$0xff] %v2477
      %5034 = vst [vmem:[%s539 + $0x8] sm:$0xff] %v2479
      %5035 = vst [vmem:[%s539 + $0x10] sm:$0xff] %v2481
      %5036 = vst [vmem:[%s539 + $0x18] sm:$0xff] %v2483
      %5037 = vst [vmem:[%s539 + $0x20] sm:$0xff] %v2487
      %5038 = vst [vmem:[%s539 + $0x28] sm:$0xff] %v2489
      %5039 = vst [vmem:[%s539 + $0x30] sm:$0xff] %v2491
      %5040 = vst [vmem:[%s539 + $0x38] sm:$0xff] %v2493
      %5041 = vst [vmem:[%s539 + $0x40] sm:$0xff] %v2497
      %5042 = vst [vmem:[%s539 + $0x48] sm:$0xff] %v2499
      %5043 = vst [vmem:[%s539 + $0x50] sm:$0xff] %v2501
      %5044 = vst [vmem:[%s539 + $0x58] sm:$0xff] %v2503
      %5045 = vst [vmem:[%s539 + $0x60] sm:$0xff] %v2507
      %5046 = vst [vmem:[%s539 + $0x68] sm:$0xff] %v2509
      %5047 = vst [vmem:[%s539 + $0x70] sm:$0xff] %v2511
      %5048 = vst [vmem:[%s539 + $0x78] sm:$0xff] %v2513
      %5049 = vst [vmem:[%s539 + $0x80] sm:$0xff] %v2517
      %5050 = vst [vmem:[%s539 + $0x88] sm:$0xff] %v2519
      %5051 = vst [vmem:[%s539 + $0x90] sm:$0xff] %v2521
      %5052 = vst [vmem:[%s539 + $0x98] sm:$0xff] %v2523
      %5053 = vst [vmem:[%s539 + $0xa0] sm:$0xff] %v2527
      %5054 = vst [vmem:[%s539 + $0xa8] sm:$0xff] %v2529
      %5055 = vst [vmem:[%s539 + $0xb0] sm:$0xff] %v2531
      %5056 = vst [vmem:[%s539 + $0xb8] sm:$0xff] %v2533
      %5057 = vst [vmem:[%s539 + $0xc0] sm:$0xff] %v2537
      %5058 = vst [vmem:[%s539 + $0xc8] sm:$0xff] %v2539
      %5059 = vst [vmem:[%s539 + $0xd0] sm:$0xff] %v2541
      %5060 = vst [vmem:[%s539 + $0xd8] sm:$0xff] %v2543
      %5061 = vst [vmem:[%s539 + $0xe0] sm:$0xff] %v2547
      %5062 = vst [vmem:[%s539 + $0xe8] sm:$0xff] %v2549
      %5063 = vst [vmem:[%s539 + $0xf0] sm:$0xff] %v2551
      %5064 = vst [vmem:[%s539 + $0xf8] sm:$0xff] %v2553
      %s5065 = smul.u32 16, %s27
      %p5066 = scmp.lt.s32.totalorder %s5065, 31
      %s5067 = scalar_select %p5066, %s5065, 31
      %s5068 = smul.addr %s5067, 7
      %s5069 = smul.addr %s5068, 8
      %s5070 = scalar_lea.vmem %s14, %s5069
      %s5071 = smul.u32 16, %s27
      %p5072 = scmp.lt.s32.totalorder %s5071, 31
      %s5073 = scalar_select %p5072, %s5071, 31
      %s5074 = smul.addr %s5073, 2
      %s5075 = smul.addr %s5074, 8
      %s5076 = scalar_lea.vmem %s15, %s5075
      // Predicated region
      $region77: #{vae_forward.1} parent=75 // pred_check
        %p5077 = pneg %p349
      $region78: #{vae_forward.1} parent=75 // pred_check_branch
        %5079 = sbr.rel (%p5077) target = $region80
      $region79: #{vae_forward.1} parent=75 // pred_region
        %s5080 = smul.u32 16, %s27
      $region80: #{vae_forward.1} parent=75 // pred_fallthru
        _
      // Predicated region
      $region81: #{vae_forward.1} parent=75 // pred_check
        %p5081 = pneg %p375
      $region82: #{vae_forward.1} parent=75 // pred_check_branch
        %5083 = sbr.rel (%p5081) target = $region84
      $region83: #{vae_forward.1} parent=75 // pred_region
        %s5084 = smul.u32 16, %s27
      $region84: #{vae_forward.1} parent=75 // pred_fallthru
        _
    $region76: #{vae_forward.1} parent=5 // pred_fallthru
      _
    %p5085 = scmp.le.s32.totalorder 2, %s22
    // Predicated region
    $region85: #{vae_forward.1} parent=5 // pred_check
      %p5086 = pneg %p5085
    $region86: #{vae_forward.1} parent=5 // pred_check_branch
      %5088 = sbr.rel (%p5086) target = $region88
    $region87: #{vae_forward.1} parent=5 // pred_region
      %s5089 = ssub.s32 %s22, 2
      // Predicated region
      $region89: #{vae_forward.1} parent=87 // pred_check
        %p5090 = pneg %p355
      $region90: #{vae_forward.1} parent=87 // pred_check_branch
        %5092 = sbr.rel (%p5090) target = $region92
      $region91: #{vae_forward.1} parent=87 // pred_region
        %s5093 = smul.u32 16, %s28
        %p5094 = scmp.lt.s32.totalorder %s5093, 31
        %s5095 = scalar_select %p5094, %s5093, 31
        %s5096 = smul.addr %s5095, 7
        %s5097 = smul.addr %s5096, 8
        %s5098 = scalar_lea.vmem %s14, %s5097
      $region92: #{vae_forward.1} parent=87 // pred_fallthru
        _
      // Predicated region
      $region93: #{vae_forward.1} parent=87 // pred_check
        %p5099 = pneg %p381
      $region94: #{vae_forward.1} parent=87 // pred_check_branch
        %5101 = sbr.rel (%p5099) target = $region96
      $region95: #{vae_forward.1} parent=87 // pred_region
        %s5102 = smul.u32 16, %s28
        %p5103 = scmp.lt.s32.totalorder %s5102, 31
        %s5104 = scalar_select %p5103, %s5102, 31
        %s5105 = smul.addr %s5104, 2
        %s5106 = smul.addr %s5105, 8
        %s5107 = scalar_lea.vmem %s15, %s5106
      $region96: #{vae_forward.1} parent=87 // pred_fallthru
        _
    $region88: #{vae_forward.1} parent=5 // pred_fallthru
      _
  $region6: #{vae_forward.1} parent=0 // loop_footer
    %s26 = sadd.s32 1, %s22
  $region7: #{vae_forward.1} parent=0 // loop_footer_branch
    %21 = sbr.rel target = $region3
  $region8: #{vae_forward.1} parent=0 // loop_exit
    _

</llo_original>
